<compile_context>
chip_gen: v7x
topology: tpu7x:2x2x1
jax: 0.10.0
libtpu: 0.0.40
codegen_flags: <defaults>
</compile_context>

<pallas_src>
import functools

import jax
import jax.numpy as jnp
from jax.experimental import pallas as pl
from jax.experimental.pallas import tpu as pltpu

F_PAD = 16  # layer-0 input features padded to a sublane-aligned K


def regularized_lstm_kernel(x_ref, w4h_ref, wh_ref, bias_ref, out_ref,
                            *, hidden, seq_len, batch, f_pad):
    H, T, B, FP = hidden, seq_len, batch, f_pad
    f32, bf16 = jnp.float32, jnp.bfloat16

    # Static row offsets inside the packed (FP+3H, 4H) weight slab.
    O_IH0 = 0          # folded-BN layer-0 input weights   (FP rows)
    O_HH0 = FP         # layer-0 recurrent weights          (H rows)
    O_L1 = FP + H      # fused layer-1 [Wih1 ; Whh1]        (2H rows)

    b0 = bias_ref[0:1, :]          # (1, 4H) layer-0 bias (BN shift folded in)
    b1 = bias_ref[1:2, :]          # (1, 4H) layer-1 bias

    # Hoisted layer-0 input projection for all T steps: one M=T*B matmul off
    # the serial chain (eval-mode BatchNorm already folded into weights/bias).
    gx0 = jnp.dot(x_ref[...], w4h_ref[O_IH0:O_IH0 + FP, :],
                  preferred_element_type=f32) + b0            # (T*B, 4H) f32

    def cell(g, c):
        # Gate columns pre-permuted to [i, f, o, g]: one wide sigmoid + one tanh.
        s = jax.nn.sigmoid(g[:, :3 * H])
        gg = jnp.tanh(g[:, 3 * H:])
        c_new = s[:, H:2 * H] * c + s[:, :H] * gg
        h_new = s[:, 2 * H:3 * H] * jnp.tanh(c_new)
        return h_new, c_new

    zero = jnp.zeros((B, H), f32)
    h0, c0, h1, c1 = zero, zero, zero, zero
    h1_steps = []

    # 1-step-skewed interleave of the two layers (T+1 iterations).  Both
    # per-iteration matmuls consume the same h0 (= layer-0 output of step t-1),
    # so they are independent and can overlap on the MXU.  Weight slabs are
    # read from VMEM at each dot call site.
    for t in range(T + 1):
        h0_bf = h0.astype(bf16)
        g0 = None
        g1 = None
        if t < T:
            g0 = gx0[t * B:(t + 1) * B, :]
            if t > 0:   # initial hidden state is exactly zero -> skip matmul
                g0 = g0 + jnp.dot(h0_bf, w4h_ref[O_HH0:O_HH0 + H, :],
                                  preferred_element_type=f32)
        if t >= 1:
            # Fused layer-1 input+hidden projection, K = 2H = 256.
            lhs1 = jnp.concatenate([h0_bf, h1.astype(bf16)], axis=-1)   # (B, 2H)
            g1 = jnp.dot(lhs1, w4h_ref[O_L1:O_L1 + 2 * H, :],
                         preferred_element_type=f32) + b1
        if t < T:
            h0, c0 = cell(g0, c0)
        if t >= 1:
            h1, c1 = cell(g1, c1)
            h1_steps.append(h1)

    # Layer-1 outputs as one lane-dense (T*B, H) value, row r = t*B + b.
    # Assembled in registers once after the loop (no masked per-step stores).
    slab = jnp.concatenate(h1_steps, axis=0)                   # (T*B, H) f32

    # --- attention: Linear(H,H) -> tanh -> Linear(H,1) -> softmax over time ---
    a = jnp.tanh(jnp.dot(slab.astype(bf16), wh_ref[0:H, :],
                         preferred_element_type=f32) + bias_ref[2:3, :H])
    # Linear(H,1) as VPU multiply + lane reduce.  Its bias is dropped exactly:
    # softmax over the time axis is shift-invariant.
    scores = jnp.sum(a * bias_ref[3:4, :H], axis=-1, keepdims=True)     # (T*B,1)
    e = jnp.exp(scores - jnp.max(scores))                               # (T*B,1)

    # Per-batch softmax-weighted sum over time.  Numerator AND denominator come
    # out of one (B,T*B)@(T*B,2H) matmul against a 0/1 selection matrix
    # (slab row r belongs to batch r % B).  Global max-shift above is exact.
    r_mod = jax.lax.broadcasted_iota(jnp.int32, (B, T * B), 1) % B
    b_idx = jax.lax.broadcasted_iota(jnp.int32, (B, T * B), 0)
    gsel = (r_mod == b_idx).astype(f32)                                 # (B, T*B)
    rhs = jnp.concatenate([e * slab, jnp.broadcast_to(e, (T * B, H))], axis=-1)
    nd = jnp.dot(gsel, rhs, preferred_element_type=f32)                 # (B, 2H)
    context = nd[:, :H] * pl.reciprocal(nd[:, H:], approx=True)         # (B, H)

    # --- FC head: Lin(H,H)+ReLU -> Lin(H,H/2)+ReLU -> Lin(H/2,1)+Sigmoid ---
    z1 = jnp.maximum(jnp.dot(context.astype(bf16), wh_ref[H:2 * H, :],
                             preferred_element_type=f32) + bias_ref[4:5, :H], 0.0)
    # fw2 is zero-padded to H output columns; the padded bias has a 1.0 at lane
    # H//2, producing a unit feature so the final Linear bias rides in
    # fw3_row[H//2] (no scalar loads, mathematically exact).
    z2 = jnp.maximum(jnp.dot(z1.astype(bf16), wh_ref[2 * H:3 * H, :],
                             preferred_element_type=f32) + bias_ref[5:6, :H], 0.0)
    y = jax.nn.sigmoid(jnp.sum(z2 * bias_ref[6:7, :H], axis=-1, keepdims=True))
    out_ref[...] = y.astype(out_ref.dtype)


def init_params(key, input_size=9, hidden=128):
    """Deterministic synthetic parameters in PyTorch layout (gate order i,f,g,o)."""
    ks = jax.random.split(key, 22)
    H, F = hidden, input_size

    def u(k, shape, bound):
        return jax.random.uniform(k, shape, jnp.float32, -bound, bound)

    kg = 1.0 / float(H) ** 0.5
    bn_gamma = jax.random.uniform(ks[0], (F,), jnp.float32, 0.5, 1.5)
    bn_beta = u(ks[1], (F,), 0.1)
    bn_mean = 0.1 * jax.random.normal(ks[2], (F,), jnp.float32)
    bn_var = jax.random.uniform(ks[3], (F,), jnp.float32, 0.5, 1.5)
    w_ih0 = u(ks[4], (4 * H, F), kg)
    w_hh0 = u(ks[5], (4 * H, H), kg)
    b_ih0 = u(ks[6], (4 * H,), kg)
    b_hh0 = u(ks[7], (4 * H,), kg)
    w_ih1 = u(ks[8], (4 * H, H), kg)
    w_hh1 = u(ks[9], (4 * H, H), kg)
    b_ih1 = u(ks[10], (4 * H,), kg)
    b_hh1 = u(ks[11], (4 * H,), kg)
    aw1 = u(ks[12], (H, H), kg)
    ab1 = u(ks[13], (H,), kg)
    aw2 = u(ks[14], (1, H), kg)
    ab2 = u(ks[15], (1,), kg)
    kf2 = 1.0 / float(H // 2) ** 0.5
    fw1 = u(ks[16], (H, H), kg)
    fb1 = u(ks[17], (H,), kg)
    fw2 = u(ks[18], (H // 2, H), kg)
    fb2 = u(ks[19], (H // 2,), kg)
    fw3 = u(ks[20], (1, H // 2), kf2)
    fb3 = u(ks[21], (1,), kf2)
    return dict(bn=(bn_gamma, bn_beta, bn_mean, bn_var),
                lstm0=(w_ih0, w_hh0, b_ih0, b_hh0),
                lstm1=(w_ih1, w_hh1, b_ih1, b_hh1),
                attn=(aw1, ab1, aw2, ab2),
                fc=(fw1, fb1, fw2, fb2, fw3, fb3))


def prepare_params(params, eps=1e-5):
    """One-time weight prep: transpose, fold eval-mode BatchNorm into layer 0,
    pre-sum LSTM biases, permute gates to [i,f,o,g], fuse layer-1 [Wih;Whh],
    and pack everything into 3 contiguous slabs (bf16 weights, f32 vectors)."""
    gamma, beta, mean, var = params["bn"]
    w_ih0, w_hh0, b_ih0, b_hh0 = params["lstm0"]
    w_ih1, w_hh1, b_ih1, b_hh1 = params["lstm1"]
    aw1, ab1, aw2, ab2 = params["attn"]      # ab2 dropped: softmax shift-invariant
    fw1, fb1, fw2, fb2, fw3, fb3 = params["fc"]

    H = w_hh0.shape[1]
    F = w_ih0.shape[1]
    assert F <= F_PAD
    f32, bf16 = jnp.float32, jnp.bfloat16

    def perm_gates(m):   # last-axis 4H blocks: [i,f,g,o] -> [i,f,o,g]
        return jnp.concatenate([m[..., 0:H], m[..., H:2 * H],
                                m[..., 3 * H:4 * H], m[..., 2 * H:3 * H]], axis=-1)

    scale = gamma / jnp.sqrt(var + eps)                     # (F,)
    shift = beta - mean * scale                             # (F,)
    wih0_T = perm_gates(scale[:, None] * w_ih0.T)           # (F, 4H) BN-scaled
    whh0_T = perm_gates(w_hh0.T)                            # (H, 4H)
    b0 = perm_gates(shift @ w_ih0.T + b_ih0 + b_hh0)        # (4H,) BN shift + biases
    wih1_T = perm_gates(w_ih1.T)                            # (H, 4H)
    whh1_T = perm_gates(w_hh1.T)                            # (H, 4H)
    b1 = perm_gates(b_ih1 + b_hh1)                          # (4H,)

    # Slab 1: all 4H-wide weights, bf16, (F_PAD + 3H, 4H).
    wih0_pad = jnp.zeros((F_PAD, 4 * H), f32).at[:F, :].set(wih0_T)
    w1_cat = jnp.concatenate([wih1_T, whh1_T], axis=0)      # (2H, 4H) fused layer-1
    w4h = jnp.concatenate([wih0_pad, whh0_T, w1_cat], axis=0).astype(bf16)

    # Slab 2: H-wide matmul weights, bf16, (3H, H).  fw2 padded to H out-cols.
    fw2_pad = jnp.zeros((H, H), f32).at[:, :H // 2].set(fw2.T)
    wh = jnp.concatenate([aw1.T, fw1.T, fw2_pad], axis=0).astype(bf16)

    # Slab 3: bias / row-vector slab, f32, (8, 4H), one vector per row.
    def row(vec):
        r = jnp.zeros((4 * H,), f32).at[:vec.shape[0]].set(vec)
        return r[None, :]
    fb2_p = jnp.zeros((H,), f32).at[:H // 2].set(fb2).at[H // 2].set(1.0)
    fw3_p = jnp.zeros((H,), f32).at[:H // 2].set(fw3[0]).at[H // 2].set(fb3[0])
    bias = jnp.concatenate([row(b0), row(b1), row(ab1), row(aw2[0]),
                            row(fb1), row(fb2_p), row(fw3_p),
                            jnp.zeros((1, 4 * H), f32)], axis=0)
    return w4h, wh, bias


@functools.partial(jax.jit, static_argnames=("hidden",))
def regularized_lstm_forward(x, w4h, wh, bias, hidden=128):
    B, T, F = x.shape
    H = hidden
    # Time-major 2-D slab, row r = t*B + b, K padded to F_PAD, bf16 (one-time
    # wrapper-side XLA glue).
    x2d = jnp.transpose(x, (1, 0, 2)).reshape(T * B, F)
    x2d = jnp.pad(x2d, ((0, 0), (0, F_PAD - F))).astype(jnp.bfloat16)

    kernel = functools.partial(regularized_lstm_kernel,
                               hidden=H, seq_len=T, batch=B, f_pad=F_PAD)
    vmem = pl.BlockSpec(memory_space=pltpu.MemorySpace.VMEM)
    return pl.pallas_call(
        kernel,
        out_shape=jax.ShapeDtypeStruct((B, 1), jnp.float32),
        in_specs=[vmem, vmem, vmem, vmem],
        out_specs=vmem,
    )(x2d, w4h, wh, bias)


if __name__ == "__main__":
    B, T, F, H = 2, 8, 9, 128   # batch=2, seq=8, input_size=9, hidden_size=128
    key = jax.random.PRNGKey(0)
    k_x, k_p = jax.random.split(key)
    x = jax.random.normal(k_x, (B, T, F), jnp.float32)
    params = init_params(k_p, input_size=F, hidden=H)
    w4h, wh, bias = prepare_params(params)   # one-time weight prep / packing

    out = regularized_lstm_forward(x, w4h, wh, bias, hidden=H)
    out = jax.block_until_ready(out)
    assert out.shape == (B, 1)
    assert bool(jnp.all(jnp.isfinite(out)))
    assert bool(jnp.all((out >= 0.0) & (out <= 1.0)))   # sigmoid output range
    print("KERNEL_OK")
</pallas_src>

<mosaic_0001>
module attributes {stable_mosaic.version = 11 : i64} {
  func.func @regularized_lstm_kernel(%arg0: memref<16x16xbf16, #tpu.memory_space<vmem>>, %arg1: memref<400x512xbf16, #tpu.memory_space<vmem>>, %arg2: memref<384x128xbf16, #tpu.memory_space<vmem>>, %arg3: memref<8x512xf32, #tpu.memory_space<vmem>>, %arg4: memref<2x1xf32, #tpu.memory_space<vmem>>) attributes {dimension_semantics = [], scalar_prefetch = 0 : i64, scratch_operands = 0 : i64, tpu.core_type = #tpu.core_type<tc>} {
    %c0 = arith.constant 0 : index
    %c0_0 = arith.constant 0 : index
    %0 = vector.load %arg3[%c0, %c0_0] : memref<8x512xf32, #tpu.memory_space<vmem>>, vector<1x512xf32>
    %c1 = arith.constant 1 : index
    %c0_1 = arith.constant 0 : index
    %1 = vector.load %arg3[%c1, %c0_1] : memref<8x512xf32, #tpu.memory_space<vmem>>, vector<1x512xf32>
    %c0_2 = arith.constant 0 : index
    %c0_3 = arith.constant 0 : index
    %2 = vector.load %arg0[%c0_2, %c0_3] : memref<16x16xbf16, #tpu.memory_space<vmem>>, vector<16x16xbf16>
    %c0_4 = arith.constant 0 : index
    %c0_5 = arith.constant 0 : index
    %3 = vector.load %arg1[%c0_4, %c0_5] : memref<400x512xbf16, #tpu.memory_space<vmem>>, vector<16x512xbf16>
    %cst = arith.constant dense<0.000000e+00> : vector<16x512xf32>
    %4 = tpu.matmul %2, %3, %cst {dimension_numbers = #tpu.dot_dimension_numbers<[1], [0], [0], [1], [0, 0, 1, 1], [], []>} : vector<16x16xbf16>, vector<16x512xbf16>, vector<16x512xf32> -> vector<16x512xf32>
    %5 = vector.broadcast %0 : vector<1x512xf32> to vector<16x512xf32>
    %6 = arith.addf %4, %5 : vector<16x512xf32>
    %cst_6 = arith.constant 0.000000e+00 : f32
    %7 = vector.broadcast %cst_6 : f32 to vector<2x128xf32>
    %8 = vector.extract_strided_slice %6 {offsets = [0, 0], sizes = [2, 512], strides = [1, 1]} : vector<16x512xf32> to vector<2x512xf32>
    %9 = vector.extract_strided_slice %8 {offsets = [0, 0], sizes = [2, 384], strides = [1, 1]} : vector<2x512xf32> to vector<2x384xf32>
    %10 = arith.negf %9 : vector<2x384xf32>
    %11 = math.exp %10 : vector<2x384xf32>
    %cst_7 = arith.constant 1.000000e+00 : f32
    %12 = vector.broadcast %cst_7 : f32 to vector<2x384xf32>
    %13 = arith.addf %12, %11 : vector<2x384xf32>
    %14 = arith.divf %12, %13 : vector<2x384xf32>
    %15 = vector.extract_strided_slice %8 {offsets = [0, 384], sizes = [2, 128], strides = [1, 1]} : vector<2x512xf32> to vector<2x128xf32>
    %16 = math.tanh %15 : vector<2x128xf32>
    %17 = vector.extract_strided_slice %14 {offsets = [0, 128], sizes = [2, 128], strides = [1, 1]} : vector<2x384xf32> to vector<2x128xf32>
    %18 = arith.mulf %17, %7 : vector<2x128xf32>
    %19 = vector.extract_strided_slice %14 {offsets = [0, 0], sizes = [2, 128], strides = [1, 1]} : vector<2x384xf32> to vector<2x128xf32>
    %20 = arith.mulf %19, %16 : vector<2x128xf32>
    %21 = arith.addf %18, %20 : vector<2x128xf32>
    %22 = vector.extract_strided_slice %14 {offsets = [0, 256], sizes = [2, 128], strides = [1, 1]} : vector<2x384xf32> to vector<2x128xf32>
    %23 = math.tanh %21 : vector<2x128xf32>
    %24 = arith.mulf %22, %23 : vector<2x128xf32>
    %25 = arith.truncf %24 : vector<2x128xf32> to vector<2x128xbf16>
    %26 = vector.extract_strided_slice %6 {offsets = [2, 0], sizes = [2, 512], strides = [1, 1]} : vector<16x512xf32> to vector<2x512xf32>
    %c16 = arith.constant 16 : index
    %c0_8 = arith.constant 0 : index
    %27 = vector.load %arg1[%c16, %c0_8] : memref<400x512xbf16, #tpu.memory_space<vmem>>, vector<128x512xbf16>
    %cst_9 = arith.constant dense<0.000000e+00> : vector<2x512xf32>
    %28 = tpu.matmul %25, %27, %cst_9 {dimension_numbers = #tpu.dot_dimension_numbers<[1], [0], [0], [1], [0, 0, 1, 1], [], []>} : vector<2x128xbf16>, vector<128x512xbf16>, vector<2x512xf32> -> vector<2x512xf32>
    %29 = arith.addf %26, %28 : vector<2x512xf32>
    %30 = arith.truncf %7 : vector<2x128xf32> to vector<2x128xbf16>
    %31 = tpu.concatenate %25, %30 in 1 : vector<2x128xbf16>, vector<2x128xbf16> -> vector<2x256xbf16>
    %c144 = arith.constant 144 : index
    %c0_10 = arith.constant 0 : index
    %32 = vector.load %arg1[%c144, %c0_10] : memref<400x512xbf16, #tpu.memory_space<vmem>>, vector<256x512xbf16>
    %cst_11 = arith.constant dense<0.000000e+00> : vector<2x512xf32>
    %33 = tpu.matmul %31, %32, %cst_11 {dimension_numbers = #tpu.dot_dimension_numbers<[1], [0], [0], [1], [0, 0, 1, 1], [], []>} : vector<2x256xbf16>, vector<256x512xbf16>, vector<2x512xf32> -> vector<2x512xf32>
    %34 = vector.broadcast %1 : vector<1x512xf32> to vector<2x512xf32>
    %35 = arith.addf %33, %34 : vector<2x512xf32>
    %36 = vector.extract_strided_slice %29 {offsets = [0, 0], sizes = [2, 384], strides = [1, 1]} : vector<2x512xf32> to vector<2x384xf32>
    %37 = arith.negf %36 : vector<2x384xf32>
    %38 = math.exp %37 : vector<2x384xf32>
    %cst_12 = arith.constant 1.000000e+00 : f32
    %39 = vector.broadcast %cst_12 : f32 to vector<2x384xf32>
    %40 = arith.addf %39, %38 : vector<2x384xf32>
    %41 = arith.divf %39, %40 : vector<2x384xf32>
    %42 = vector.extract_strided_slice %29 {offsets = [0, 384], sizes = [2, 128], strides = [1, 1]} : vector<2x512xf32> to vector<2x128xf32>
    %43 = math.tanh %42 : vector<2x128xf32>
    %44 = vector.extract_strided_slice %41 {offsets = [0, 128], sizes = [2, 128], strides = [1, 1]} : vector<2x384xf32> to vector<2x128xf32>
    %45 = arith.mulf %44, %21 : vector<2x128xf32>
    %46 = vector.extract_strided_slice %41 {offsets = [0, 0], sizes = [2, 128], strides = [1, 1]} : vector<2x384xf32> to vector<2x128xf32>
    %47 = arith.mulf %46, %43 : vector<2x128xf32>
    %48 = arith.addf %45, %47 : vector<2x128xf32>
    %49 = vector.extract_strided_slice %41 {offsets = [0, 256], sizes = [2, 128], strides = [1, 1]} : vector<2x384xf32> to vector<2x128xf32>
    %50 = math.tanh %48 : vector<2x128xf32>
    %51 = arith.mulf %49, %50 : vector<2x128xf32>
    %52 = vector.extract_strided_slice %35 {offsets = [0, 0], sizes = [2, 384], strides = [1, 1]} : vector<2x512xf32> to vector<2x384xf32>
    %53 = arith.negf %52 : vector<2x384xf32>
    %54 = math.exp %53 : vector<2x384xf32>
    %cst_13 = arith.constant 1.000000e+00 : f32
    %55 = vector.broadcast %cst_13 : f32 to vector<2x384xf32>
    %56 = arith.addf %55, %54 : vector<2x384xf32>
    %57 = arith.divf %55, %56 : vector<2x384xf32>
    %58 = vector.extract_strided_slice %35 {offsets = [0, 384], sizes = [2, 128], strides = [1, 1]} : vector<2x512xf32> to vector<2x128xf32>
    %59 = math.tanh %58 : vector<2x128xf32>
    %60 = vector.extract_strided_slice %57 {offsets = [0, 128], sizes = [2, 128], strides = [1, 1]} : vector<2x384xf32> to vector<2x128xf32>
    %61 = arith.mulf %60, %7 : vector<2x128xf32>
    %62 = vector.extract_strided_slice %57 {offsets = [0, 0], sizes = [2, 128], strides = [1, 1]} : vector<2x384xf32> to vector<2x128xf32>
    %63 = arith.mulf %62, %59 : vector<2x128xf32>
    %64 = arith.addf %61, %63 : vector<2x128xf32>
    %65 = vector.extract_strided_slice %57 {offsets = [0, 256], sizes = [2, 128], strides = [1, 1]} : vector<2x384xf32> to vector<2x128xf32>
    %66 = math.tanh %64 : vector<2x128xf32>
    %67 = arith.mulf %65, %66 : vector<2x128xf32>
    %68 = arith.truncf %51 : vector<2x128xf32> to vector<2x128xbf16>
    %69 = vector.extract_strided_slice %6 {offsets = [4, 0], sizes = [2, 512], strides = [1, 1]} : vector<16x512xf32> to vector<2x512xf32>
    %c16_14 = arith.constant 16 : index
    %c0_15 = arith.constant 0 : index
    %70 = vector.load %arg1[%c16_14, %c0_15] : memref<400x512xbf16, #tpu.memory_space<vmem>>, vector<128x512xbf16>
    %cst_16 = arith.constant dense<0.000000e+00> : vector<2x512xf32>
    %71 = tpu.matmul %68, %70, %cst_16 {dimension_numbers = #tpu.dot_dimension_numbers<[1], [0], [0], [1], [0, 0, 1, 1], [], []>} : vector<2x128xbf16>, vector<128x512xbf16>, vector<2x512xf32> -> vector<2x512xf32>
    %72 = arith.addf %69, %71 : vector<2x512xf32>
    %73 = arith.truncf %67 : vector<2x128xf32> to vector<2x128xbf16>
    %74 = tpu.concatenate %68, %73 in 1 : vector<2x128xbf16>, vector<2x128xbf16> -> vector<2x256xbf16>
    %c144_17 = arith.constant 144 : index
    %c0_18 = arith.constant 0 : index
    %75 = vector.load %arg1[%c144_17, %c0_18] : memref<400x512xbf16, #tpu.memory_space<vmem>>, vector<256x512xbf16>
    %cst_19 = arith.constant dense<0.000000e+00> : vector<2x512xf32>
    %76 = tpu.matmul %74, %75, %cst_19 {dimension_numbers = #tpu.dot_dimension_numbers<[1], [0], [0], [1], [0, 0, 1, 1], [], []>} : vector<2x256xbf16>, vector<256x512xbf16>, vector<2x512xf32> -> vector<2x512xf32>
    %77 = vector.broadcast %1 : vector<1x512xf32> to vector<2x512xf32>
    %78 = arith.addf %76, %77 : vector<2x512xf32>
    %79 = vector.extract_strided_slice %72 {offsets = [0, 0], sizes = [2, 384], strides = [1, 1]} : vector<2x512xf32> to vector<2x384xf32>
    %80 = arith.negf %79 : vector<2x384xf32>
    %81 = math.exp %80 : vector<2x384xf32>
    %cst_20 = arith.constant 1.000000e+00 : f32
    %82 = vector.broadcast %cst_20 : f32 to vector<2x384xf32>
    %83 = arith.addf %82, %81 : vector<2x384xf32>
    %84 = arith.divf %82, %83 : vector<2x384xf32>
    %85 = vector.extract_strided_slice %72 {offsets = [0, 384], sizes = [2, 128], strides = [1, 1]} : vector<2x512xf32> to vector<2x128xf32>
    %86 = math.tanh %85 : vector<2x128xf32>
    %87 = vector.extract_strided_slice %84 {offsets = [0, 128], sizes = [2, 128], strides = [1, 1]} : vector<2x384xf32> to vector<2x128xf32>
    %88 = arith.mulf %87, %48 : vector<2x128xf32>
    %89 = vector.extract_strided_slice %84 {offsets = [0, 0], sizes = [2, 128], strides = [1, 1]} : vector<2x384xf32> to vector<2x128xf32>
    %90 = arith.mulf %89, %86 : vector<2x128xf32>
    %91 = arith.addf %88, %90 : vector<2x128xf32>
    %92 = vector.extract_strided_slice %84 {offsets = [0, 256], sizes = [2, 128], strides = [1, 1]} : vector<2x384xf32> to vector<2x128xf32>
    %93 = math.tanh %91 : vector<2x128xf32>
    %94 = arith.mulf %92, %93 : vector<2x128xf32>
    %95 = vector.extract_strided_slice %78 {offsets = [0, 0], sizes = [2, 384], strides = [1, 1]} : vector<2x512xf32> to vector<2x384xf32>
    %96 = arith.negf %95 : vector<2x384xf32>
    %97 = math.exp %96 : vector<2x384xf32>
    %cst_21 = arith.constant 1.000000e+00 : f32
    %98 = vector.broadcast %cst_21 : f32 to vector<2x384xf32>
    %99 = arith.addf %98, %97 : vector<2x384xf32>
    %100 = arith.divf %98, %99 : vector<2x384xf32>
    %101 = vector.extract_strided_slice %78 {offsets = [0, 384], sizes = [2, 128], strides = [1, 1]} : vector<2x512xf32> to vector<2x128xf32>
    %102 = math.tanh %101 : vector<2x128xf32>
    %103 = vector.extract_strided_slice %100 {offsets = [0, 128], sizes = [2, 128], strides = [1, 1]} : vector<2x384xf32> to vector<2x128xf32>
    %104 = arith.mulf %103, %64 : vector<2x128xf32>
    %105 = vector.extract_strided_slice %100 {offsets = [0, 0], sizes = [2, 128], strides = [1, 1]} : vector<2x384xf32> to vector<2x128xf32>
    %106 = arith.mulf %105, %102 : vector<2x128xf32>
    %107 = arith.addf %104, %106 : vector<2x128xf32>
    %108 = vector.extract_strided_slice %100 {offsets = [0, 256], sizes = [2, 128], strides = [1, 1]} : vector<2x384xf32> to vector<2x128xf32>
    %109 = math.tanh %107 : vector<2x128xf32>
    %110 = arith.mulf %108, %109 : vector<2x128xf32>
    %111 = arith.truncf %94 : vector<2x128xf32> to vector<2x128xbf16>
    %112 = vector.extract_strided_slice %6 {offsets = [6, 0], sizes = [2, 512], strides = [1, 1]} : vector<16x512xf32> to vector<2x512xf32>
    %c16_22 = arith.constant 16 : index
    %c0_23 = arith.constant 0 : index
    %113 = vector.load %arg1[%c16_22, %c0_23] : memref<400x512xbf16, #tpu.memory_space<vmem>>, vector<128x512xbf16>
    %cst_24 = arith.constant dense<0.000000e+00> : vector<2x512xf32>
    %114 = tpu.matmul %111, %113, %cst_24 {dimension_numbers = #tpu.dot_dimension_numbers<[1], [0], [0], [1], [0, 0, 1, 1], [], []>} : vector<2x128xbf16>, vector<128x512xbf16>, vector<2x512xf32> -> vector<2x512xf32>
    %115 = arith.addf %112, %114 : vector<2x512xf32>
    %116 = arith.truncf %110 : vector<2x128xf32> to vector<2x128xbf16>
    %117 = tpu.concatenate %111, %116 in 1 : vector<2x128xbf16>, vector<2x128xbf16> -> vector<2x256xbf16>
    %c144_25 = arith.constant 144 : index
    %c0_26 = arith.constant 0 : index
    %118 = vector.load %arg1[%c144_25, %c0_26] : memref<400x512xbf16, #tpu.memory_space<vmem>>, vector<256x512xbf16>
    %cst_27 = arith.constant dense<0.000000e+00> : vector<2x512xf32>
    %119 = tpu.matmul %117, %118, %cst_27 {dimension_numbers = #tpu.dot_dimension_numbers<[1], [0], [0], [1], [0, 0, 1, 1], [], []>} : vector<2x256xbf16>, vector<256x512xbf16>, vector<2x512xf32> -> vector<2x512xf32>
    %120 = vector.broadcast %1 : vector<1x512xf32> to vector<2x512xf32>
    %121 = arith.addf %119, %120 : vector<2x512xf32>
    %122 = vector.extract_strided_slice %115 {offsets = [0, 0], sizes = [2, 384], strides = [1, 1]} : vector<2x512xf32> to vector<2x384xf32>
    %123 = arith.negf %122 : vector<2x384xf32>
    %124 = math.exp %123 : vector<2x384xf32>
    %cst_28 = arith.constant 1.000000e+00 : f32
    %125 = vector.broadcast %cst_28 : f32 to vector<2x384xf32>
    %126 = arith.addf %125, %124 : vector<2x384xf32>
    %127 = arith.divf %125, %126 : vector<2x384xf32>
    %128 = vector.extract_strided_slice %115 {offsets = [0, 384], sizes = [2, 128], strides = [1, 1]} : vector<2x512xf32> to vector<2x128xf32>
    %129 = math.tanh %128 : vector<2x128xf32>
    %130 = vector.extract_strided_slice %127 {offsets = [0, 128], sizes = [2, 128], strides = [1, 1]} : vector<2x384xf32> to vector<2x128xf32>
    %131 = arith.mulf %130, %91 : vector<2x128xf32>
    %132 = vector.extract_strided_slice %127 {offsets = [0, 0], sizes = [2, 128], strides = [1, 1]} : vector<2x384xf32> to vector<2x128xf32>
    %133 = arith.mulf %132, %129 : vector<2x128xf32>
    %134 = arith.addf %131, %133 : vector<2x128xf32>
    %135 = vector.extract_strided_slice %127 {offsets = [0, 256], sizes = [2, 128], strides = [1, 1]} : vector<2x384xf32> to vector<2x128xf32>
    %136 = math.tanh %134 : vector<2x128xf32>
    %137 = arith.mulf %135, %136 : vector<2x128xf32>
    %138 = vector.extract_strided_slice %121 {offsets = [0, 0], sizes = [2, 384], strides = [1, 1]} : vector<2x512xf32> to vector<2x384xf32>
    %139 = arith.negf %138 : vector<2x384xf32>
    %140 = math.exp %139 : vector<2x384xf32>
    %cst_29 = arith.constant 1.000000e+00 : f32
    %141 = vector.broadcast %cst_29 : f32 to vector<2x384xf32>
    %142 = arith.addf %141, %140 : vector<2x384xf32>
    %143 = arith.divf %141, %142 : vector<2x384xf32>
    %144 = vector.extract_strided_slice %121 {offsets = [0, 384], sizes = [2, 128], strides = [1, 1]} : vector<2x512xf32> to vector<2x128xf32>
    %145 = math.tanh %144 : vector<2x128xf32>
    %146 = vector.extract_strided_slice %143 {offsets = [0, 128], sizes = [2, 128], strides = [1, 1]} : vector<2x384xf32> to vector<2x128xf32>
    %147 = arith.mulf %146, %107 : vector<2x128xf32>
    %148 = vector.extract_strided_slice %143 {offsets = [0, 0], sizes = [2, 128], strides = [1, 1]} : vector<2x384xf32> to vector<2x128xf32>
    %149 = arith.mulf %148, %145 : vector<2x128xf32>
    %150 = arith.addf %147, %149 : vector<2x128xf32>
    %151 = vector.extract_strided_slice %143 {offsets = [0, 256], sizes = [2, 128], strides = [1, 1]} : vector<2x384xf32> to vector<2x128xf32>
    %152 = math.tanh %150 : vector<2x128xf32>
    %153 = arith.mulf %151, %152 : vector<2x128xf32>
    %154 = arith.truncf %137 : vector<2x128xf32> to vector<2x128xbf16>
    %155 = vector.extract_strided_slice %6 {offsets = [8, 0], sizes = [2, 512], strides = [1, 1]} : vector<16x512xf32> to vector<2x512xf32>
    %c16_30 = arith.constant 16 : index
    %c0_31 = arith.constant 0 : index
    %156 = vector.load %arg1[%c16_30, %c0_31] : memref<400x512xbf16, #tpu.memory_space<vmem>>, vector<128x512xbf16>
    %cst_32 = arith.constant dense<0.000000e+00> : vector<2x512xf32>
    %157 = tpu.matmul %154, %156, %cst_32 {dimension_numbers = #tpu.dot_dimension_numbers<[1], [0], [0], [1], [0, 0, 1, 1], [], []>} : vector<2x128xbf16>, vector<128x512xbf16>, vector<2x512xf32> -> vector<2x512xf32>
    %158 = arith.addf %155, %157 : vector<2x512xf32>
    %159 = arith.truncf %153 : vector<2x128xf32> to vector<2x128xbf16>
    %160 = tpu.concatenate %154, %159 in 1 : vector<2x128xbf16>, vector<2x128xbf16> -> vector<2x256xbf16>
    %c144_33 = arith.constant 144 : index
    %c0_34 = arith.constant 0 : index
    %161 = vector.load %arg1[%c144_33, %c0_34] : memref<400x512xbf16, #tpu.memory_space<vmem>>, vector<256x512xbf16>
    %cst_35 = arith.constant dense<0.000000e+00> : vector<2x512xf32>
    %162 = tpu.matmul %160, %161, %cst_35 {dimension_numbers = #tpu.dot_dimension_numbers<[1], [0], [0], [1], [0, 0, 1, 1], [], []>} : vector<2x256xbf16>, vector<256x512xbf16>, vector<2x512xf32> -> vector<2x512xf32>
    %163 = vector.broadcast %1 : vector<1x512xf32> to vector<2x512xf32>
    %164 = arith.addf %162, %163 : vector<2x512xf32>
    %165 = vector.extract_strided_slice %158 {offsets = [0, 0], sizes = [2, 384], strides = [1, 1]} : vector<2x512xf32> to vector<2x384xf32>
    %166 = arith.negf %165 : vector<2x384xf32>
    %167 = math.exp %166 : vector<2x384xf32>
    %cst_36 = arith.constant 1.000000e+00 : f32
    %168 = vector.broadcast %cst_36 : f32 to vector<2x384xf32>
    %169 = arith.addf %168, %167 : vector<2x384xf32>
    %170 = arith.divf %168, %169 : vector<2x384xf32>
    %171 = vector.extract_strided_slice %158 {offsets = [0, 384], sizes = [2, 128], strides = [1, 1]} : vector<2x512xf32> to vector<2x128xf32>
    %172 = math.tanh %171 : vector<2x128xf32>
    %173 = vector.extract_strided_slice %170 {offsets = [0, 128], sizes = [2, 128], strides = [1, 1]} : vector<2x384xf32> to vector<2x128xf32>
    %174 = arith.mulf %173, %134 : vector<2x128xf32>
    %175 = vector.extract_strided_slice %170 {offsets = [0, 0], sizes = [2, 128], strides = [1, 1]} : vector<2x384xf32> to vector<2x128xf32>
    %176 = arith.mulf %175, %172 : vector<2x128xf32>
    %177 = arith.addf %174, %176 : vector<2x128xf32>
    %178 = vector.extract_strided_slice %170 {offsets = [0, 256], sizes = [2, 128], strides = [1, 1]} : vector<2x384xf32> to vector<2x128xf32>
    %179 = math.tanh %177 : vector<2x128xf32>
    %180 = arith.mulf %178, %179 : vector<2x128xf32>
    %181 = vector.extract_strided_slice %164 {offsets = [0, 0], sizes = [2, 384], strides = [1, 1]} : vector<2x512xf32> to vector<2x384xf32>
    %182 = arith.negf %181 : vector<2x384xf32>
    %183 = math.exp %182 : vector<2x384xf32>
    %cst_37 = arith.constant 1.000000e+00 : f32
    %184 = vector.broadcast %cst_37 : f32 to vector<2x384xf32>
    %185 = arith.addf %184, %183 : vector<2x384xf32>
    %186 = arith.divf %184, %185 : vector<2x384xf32>
    %187 = vector.extract_strided_slice %164 {offsets = [0, 384], sizes = [2, 128], strides = [1, 1]} : vector<2x512xf32> to vector<2x128xf32>
    %188 = math.tanh %187 : vector<2x128xf32>
    %189 = vector.extract_strided_slice %186 {offsets = [0, 128], sizes = [2, 128], strides = [1, 1]} : vector<2x384xf32> to vector<2x128xf32>
    %190 = arith.mulf %189, %150 : vector<2x128xf32>
    %191 = vector.extract_strided_slice %186 {offsets = [0, 0], sizes = [2, 128], strides = [1, 1]} : vector<2x384xf32> to vector<2x128xf32>
    %192 = arith.mulf %191, %188 : vector<2x128xf32>
    %193 = arith.addf %190, %192 : vector<2x128xf32>
    %194 = vector.extract_strided_slice %186 {offsets = [0, 256], sizes = [2, 128], strides = [1, 1]} : vector<2x384xf32> to vector<2x128xf32>
    %195 = math.tanh %193 : vector<2x128xf32>
    %196 = arith.mulf %194, %195 : vector<2x128xf32>
    %197 = arith.truncf %180 : vector<2x128xf32> to vector<2x128xbf16>
    %198 = vector.extract_strided_slice %6 {offsets = [10, 0], sizes = [2, 512], strides = [1, 1]} : vector<16x512xf32> to vector<2x512xf32>
    %c16_38 = arith.constant 16 : index
    %c0_39 = arith.constant 0 : index
    %199 = vector.load %arg1[%c16_38, %c0_39] : memref<400x512xbf16, #tpu.memory_space<vmem>>, vector<128x512xbf16>
    %cst_40 = arith.constant dense<0.000000e+00> : vector<2x512xf32>
    %200 = tpu.matmul %197, %199, %cst_40 {dimension_numbers = #tpu.dot_dimension_numbers<[1], [0], [0], [1], [0, 0, 1, 1], [], []>} : vector<2x128xbf16>, vector<128x512xbf16>, vector<2x512xf32> -> vector<2x512xf32>
    %201 = arith.addf %198, %200 : vector<2x512xf32>
    %202 = arith.truncf %196 : vector<2x128xf32> to vector<2x128xbf16>
    %203 = tpu.concatenate %197, %202 in 1 : vector<2x128xbf16>, vector<2x128xbf16> -> vector<2x256xbf16>
    %c144_41 = arith.constant 144 : index
    %c0_42 = arith.constant 0 : index
    %204 = vector.load %arg1[%c144_41, %c0_42] : memref<400x512xbf16, #tpu.memory_space<vmem>>, vector<256x512xbf16>
    %cst_43 = arith.constant dense<0.000000e+00> : vector<2x512xf32>
    %205 = tpu.matmul %203, %204, %cst_43 {dimension_numbers = #tpu.dot_dimension_numbers<[1], [0], [0], [1], [0, 0, 1, 1], [], []>} : vector<2x256xbf16>, vector<256x512xbf16>, vector<2x512xf32> -> vector<2x512xf32>
    %206 = vector.broadcast %1 : vector<1x512xf32> to vector<2x512xf32>
    %207 = arith.addf %205, %206 : vector<2x512xf32>
    %208 = vector.extract_strided_slice %201 {offsets = [0, 0], sizes = [2, 384], strides = [1, 1]} : vector<2x512xf32> to vector<2x384xf32>
    %209 = arith.negf %208 : vector<2x384xf32>
    %210 = math.exp %209 : vector<2x384xf32>
    %cst_44 = arith.constant 1.000000e+00 : f32
    %211 = vector.broadcast %cst_44 : f32 to vector<2x384xf32>
    %212 = arith.addf %211, %210 : vector<2x384xf32>
    %213 = arith.divf %211, %212 : vector<2x384xf32>
    %214 = vector.extract_strided_slice %201 {offsets = [0, 384], sizes = [2, 128], strides = [1, 1]} : vector<2x512xf32> to vector<2x128xf32>
    %215 = math.tanh %214 : vector<2x128xf32>
    %216 = vector.extract_strided_slice %213 {offsets = [0, 128], sizes = [2, 128], strides = [1, 1]} : vector<2x384xf32> to vector<2x128xf32>
    %217 = arith.mulf %216, %177 : vector<2x128xf32>
    %218 = vector.extract_strided_slice %213 {offsets = [0, 0], sizes = [2, 128], strides = [1, 1]} : vector<2x384xf32> to vector<2x128xf32>
    %219 = arith.mulf %218, %215 : vector<2x128xf32>
    %220 = arith.addf %217, %219 : vector<2x128xf32>
    %221 = vector.extract_strided_slice %213 {offsets = [0, 256], sizes = [2, 128], strides = [1, 1]} : vector<2x384xf32> to vector<2x128xf32>
    %222 = math.tanh %220 : vector<2x128xf32>
    %223 = arith.mulf %221, %222 : vector<2x128xf32>
    %224 = vector.extract_strided_slice %207 {offsets = [0, 0], sizes = [2, 384], strides = [1, 1]} : vector<2x512xf32> to vector<2x384xf32>
    %225 = arith.negf %224 : vector<2x384xf32>
    %226 = math.exp %225 : vector<2x384xf32>
    %cst_45 = arith.constant 1.000000e+00 : f32
    %227 = vector.broadcast %cst_45 : f32 to vector<2x384xf32>
    %228 = arith.addf %227, %226 : vector<2x384xf32>
    %229 = arith.divf %227, %228 : vector<2x384xf32>
    %230 = vector.extract_strided_slice %207 {offsets = [0, 384], sizes = [2, 128], strides = [1, 1]} : vector<2x512xf32> to vector<2x128xf32>
    %231 = math.tanh %230 : vector<2x128xf32>
    %232 = vector.extract_strided_slice %229 {offsets = [0, 128], sizes = [2, 128], strides = [1, 1]} : vector<2x384xf32> to vector<2x128xf32>
    %233 = arith.mulf %232, %193 : vector<2x128xf32>
    %234 = vector.extract_strided_slice %229 {offsets = [0, 0], sizes = [2, 128], strides = [1, 1]} : vector<2x384xf32> to vector<2x128xf32>
    %235 = arith.mulf %234, %231 : vector<2x128xf32>
    %236 = arith.addf %233, %235 : vector<2x128xf32>
    %237 = vector.extract_strided_slice %229 {offsets = [0, 256], sizes = [2, 128], strides = [1, 1]} : vector<2x384xf32> to vector<2x128xf32>
    %238 = math.tanh %236 : vector<2x128xf32>
    %239 = arith.mulf %237, %238 : vector<2x128xf32>
    %240 = arith.truncf %223 : vector<2x128xf32> to vector<2x128xbf16>
    %241 = vector.extract_strided_slice %6 {offsets = [12, 0], sizes = [2, 512], strides = [1, 1]} : vector<16x512xf32> to vector<2x512xf32>
    %c16_46 = arith.constant 16 : index
    %c0_47 = arith.constant 0 : index
    %242 = vector.load %arg1[%c16_46, %c0_47] : memref<400x512xbf16, #tpu.memory_space<vmem>>, vector<128x512xbf16>
    %cst_48 = arith.constant dense<0.000000e+00> : vector<2x512xf32>
    %243 = tpu.matmul %240, %242, %cst_48 {dimension_numbers = #tpu.dot_dimension_numbers<[1], [0], [0], [1], [0, 0, 1, 1], [], []>} : vector<2x128xbf16>, vector<128x512xbf16>, vector<2x512xf32> -> vector<2x512xf32>
    %244 = arith.addf %241, %243 : vector<2x512xf32>
    %245 = arith.truncf %239 : vector<2x128xf32> to vector<2x128xbf16>
    %246 = tpu.concatenate %240, %245 in 1 : vector<2x128xbf16>, vector<2x128xbf16> -> vector<2x256xbf16>
    %c144_49 = arith.constant 144 : index
    %c0_50 = arith.constant 0 : index
    %247 = vector.load %arg1[%c144_49, %c0_50] : memref<400x512xbf16, #tpu.memory_space<vmem>>, vector<256x512xbf16>
    %cst_51 = arith.constant dense<0.000000e+00> : vector<2x512xf32>
    %248 = tpu.matmul %246, %247, %cst_51 {dimension_numbers = #tpu.dot_dimension_numbers<[1], [0], [0], [1], [0, 0, 1, 1], [], []>} : vector<2x256xbf16>, vector<256x512xbf16>, vector<2x512xf32> -> vector<2x512xf32>
    %249 = vector.broadcast %1 : vector<1x512xf32> to vector<2x512xf32>
    %250 = arith.addf %248, %249 : vector<2x512xf32>
    %251 = vector.extract_strided_slice %244 {offsets = [0, 0], sizes = [2, 384], strides = [1, 1]} : vector<2x512xf32> to vector<2x384xf32>
    %252 = arith.negf %251 : vector<2x384xf32>
    %253 = math.exp %252 : vector<2x384xf32>
    %cst_52 = arith.constant 1.000000e+00 : f32
    %254 = vector.broadcast %cst_52 : f32 to vector<2x384xf32>
    %255 = arith.addf %254, %253 : vector<2x384xf32>
    %256 = arith.divf %254, %255 : vector<2x384xf32>
    %257 = vector.extract_strided_slice %244 {offsets = [0, 384], sizes = [2, 128], strides = [1, 1]} : vector<2x512xf32> to vector<2x128xf32>
    %258 = math.tanh %257 : vector<2x128xf32>
    %259 = vector.extract_strided_slice %256 {offsets = [0, 128], sizes = [2, 128], strides = [1, 1]} : vector<2x384xf32> to vector<2x128xf32>
    %260 = arith.mulf %259, %220 : vector<2x128xf32>
    %261 = vector.extract_strided_slice %256 {offsets = [0, 0], sizes = [2, 128], strides = [1, 1]} : vector<2x384xf32> to vector<2x128xf32>
    %262 = arith.mulf %261, %258 : vector<2x128xf32>
    %263 = arith.addf %260, %262 : vector<2x128xf32>
    %264 = vector.extract_strided_slice %256 {offsets = [0, 256], sizes = [2, 128], strides = [1, 1]} : vector<2x384xf32> to vector<2x128xf32>
    %265 = math.tanh %263 : vector<2x128xf32>
    %266 = arith.mulf %264, %265 : vector<2x128xf32>
    %267 = vector.extract_strided_slice %250 {offsets = [0, 0], sizes = [2, 384], strides = [1, 1]} : vector<2x512xf32> to vector<2x384xf32>
    %268 = arith.negf %267 : vector<2x384xf32>
    %269 = math.exp %268 : vector<2x384xf32>
    %cst_53 = arith.constant 1.000000e+00 : f32
    %270 = vector.broadcast %cst_53 : f32 to vector<2x384xf32>
    %271 = arith.addf %270, %269 : vector<2x384xf32>
    %272 = arith.divf %270, %271 : vector<2x384xf32>
    %273 = vector.extract_strided_slice %250 {offsets = [0, 384], sizes = [2, 128], strides = [1, 1]} : vector<2x512xf32> to vector<2x128xf32>
    %274 = math.tanh %273 : vector<2x128xf32>
    %275 = vector.extract_strided_slice %272 {offsets = [0, 128], sizes = [2, 128], strides = [1, 1]} : vector<2x384xf32> to vector<2x128xf32>
    %276 = arith.mulf %275, %236 : vector<2x128xf32>
    %277 = vector.extract_strided_slice %272 {offsets = [0, 0], sizes = [2, 128], strides = [1, 1]} : vector<2x384xf32> to vector<2x128xf32>
    %278 = arith.mulf %277, %274 : vector<2x128xf32>
    %279 = arith.addf %276, %278 : vector<2x128xf32>
    %280 = vector.extract_strided_slice %272 {offsets = [0, 256], sizes = [2, 128], strides = [1, 1]} : vector<2x384xf32> to vector<2x128xf32>
    %281 = math.tanh %279 : vector<2x128xf32>
    %282 = arith.mulf %280, %281 : vector<2x128xf32>
    %283 = arith.truncf %266 : vector<2x128xf32> to vector<2x128xbf16>
    %284 = vector.extract_strided_slice %6 {offsets = [14, 0], sizes = [2, 512], strides = [1, 1]} : vector<16x512xf32> to vector<2x512xf32>
    %c16_54 = arith.constant 16 : index
    %c0_55 = arith.constant 0 : index
    %285 = vector.load %arg1[%c16_54, %c0_55] : memref<400x512xbf16, #tpu.memory_space<vmem>>, vector<128x512xbf16>
    %cst_56 = arith.constant dense<0.000000e+00> : vector<2x512xf32>
    %286 = tpu.matmul %283, %285, %cst_56 {dimension_numbers = #tpu.dot_dimension_numbers<[1], [0], [0], [1], [0, 0, 1, 1], [], []>} : vector<2x128xbf16>, vector<128x512xbf16>, vector<2x512xf32> -> vector<2x512xf32>
    %287 = arith.addf %284, %286 : vector<2x512xf32>
    %288 = arith.truncf %282 : vector<2x128xf32> to vector<2x128xbf16>
    %289 = tpu.concatenate %283, %288 in 1 : vector<2x128xbf16>, vector<2x128xbf16> -> vector<2x256xbf16>
    %c144_57 = arith.constant 144 : index
    %c0_58 = arith.constant 0 : index
    %290 = vector.load %arg1[%c144_57, %c0_58] : memref<400x512xbf16, #tpu.memory_space<vmem>>, vector<256x512xbf16>
    %cst_59 = arith.constant dense<0.000000e+00> : vector<2x512xf32>
    %291 = tpu.matmul %289, %290, %cst_59 {dimension_numbers = #tpu.dot_dimension_numbers<[1], [0], [0], [1], [0, 0, 1, 1], [], []>} : vector<2x256xbf16>, vector<256x512xbf16>, vector<2x512xf32> -> vector<2x512xf32>
    %292 = vector.broadcast %1 : vector<1x512xf32> to vector<2x512xf32>
    %293 = arith.addf %291, %292 : vector<2x512xf32>
    %294 = vector.extract_strided_slice %287 {offsets = [0, 0], sizes = [2, 384], strides = [1, 1]} : vector<2x512xf32> to vector<2x384xf32>
    %295 = arith.negf %294 : vector<2x384xf32>
    %296 = math.exp %295 : vector<2x384xf32>
    %cst_60 = arith.constant 1.000000e+00 : f32
    %297 = vector.broadcast %cst_60 : f32 to vector<2x384xf32>
    %298 = arith.addf %297, %296 : vector<2x384xf32>
    %299 = arith.divf %297, %298 : vector<2x384xf32>
    %300 = vector.extract_strided_slice %287 {offsets = [0, 384], sizes = [2, 128], strides = [1, 1]} : vector<2x512xf32> to vector<2x128xf32>
    %301 = math.tanh %300 : vector<2x128xf32>
    %302 = vector.extract_strided_slice %299 {offsets = [0, 128], sizes = [2, 128], strides = [1, 1]} : vector<2x384xf32> to vector<2x128xf32>
    %303 = arith.mulf %302, %263 : vector<2x128xf32>
    %304 = vector.extract_strided_slice %299 {offsets = [0, 0], sizes = [2, 128], strides = [1, 1]} : vector<2x384xf32> to vector<2x128xf32>
    %305 = arith.mulf %304, %301 : vector<2x128xf32>
    %306 = arith.addf %303, %305 : vector<2x128xf32>
    %307 = vector.extract_strided_slice %299 {offsets = [0, 256], sizes = [2, 128], strides = [1, 1]} : vector<2x384xf32> to vector<2x128xf32>
    %308 = math.tanh %306 : vector<2x128xf32>
    %309 = arith.mulf %307, %308 : vector<2x128xf32>
    %310 = vector.extract_strided_slice %293 {offsets = [0, 0], sizes = [2, 384], strides = [1, 1]} : vector<2x512xf32> to vector<2x384xf32>
    %311 = arith.negf %310 : vector<2x384xf32>
    %312 = math.exp %311 : vector<2x384xf32>
    %cst_61 = arith.constant 1.000000e+00 : f32
    %313 = vector.broadcast %cst_61 : f32 to vector<2x384xf32>
    %314 = arith.addf %313, %312 : vector<2x384xf32>
    %315 = arith.divf %313, %314 : vector<2x384xf32>
    %316 = vector.extract_strided_slice %293 {offsets = [0, 384], sizes = [2, 128], strides = [1, 1]} : vector<2x512xf32> to vector<2x128xf32>
    %317 = math.tanh %316 : vector<2x128xf32>
    %318 = vector.extract_strided_slice %315 {offsets = [0, 128], sizes = [2, 128], strides = [1, 1]} : vector<2x384xf32> to vector<2x128xf32>
    %319 = arith.mulf %318, %279 : vector<2x128xf32>
    %320 = vector.extract_strided_slice %315 {offsets = [0, 0], sizes = [2, 128], strides = [1, 1]} : vector<2x384xf32> to vector<2x128xf32>
    %321 = arith.mulf %320, %317 : vector<2x128xf32>
    %322 = arith.addf %319, %321 : vector<2x128xf32>
    %323 = vector.extract_strided_slice %315 {offsets = [0, 256], sizes = [2, 128], strides = [1, 1]} : vector<2x384xf32> to vector<2x128xf32>
    %324 = math.tanh %322 : vector<2x128xf32>
    %325 = arith.mulf %323, %324 : vector<2x128xf32>
    %326 = arith.truncf %309 : vector<2x128xf32> to vector<2x128xbf16>
    %327 = arith.truncf %325 : vector<2x128xf32> to vector<2x128xbf16>
    %328 = tpu.concatenate %326, %327 in 1 : vector<2x128xbf16>, vector<2x128xbf16> -> vector<2x256xbf16>
    %c144_62 = arith.constant 144 : index
    %c0_63 = arith.constant 0 : index
    %329 = vector.load %arg1[%c144_62, %c0_63] : memref<400x512xbf16, #tpu.memory_space<vmem>>, vector<256x512xbf16>
    %cst_64 = arith.constant dense<0.000000e+00> : vector<2x512xf32>
    %330 = tpu.matmul %328, %329, %cst_64 {dimension_numbers = #tpu.dot_dimension_numbers<[1], [0], [0], [1], [0, 0, 1, 1], [], []>} : vector<2x256xbf16>, vector<256x512xbf16>, vector<2x512xf32> -> vector<2x512xf32>
    %331 = vector.broadcast %1 : vector<1x512xf32> to vector<2x512xf32>
    %332 = arith.addf %330, %331 : vector<2x512xf32>
    %333 = vector.extract_strided_slice %332 {offsets = [0, 0], sizes = [2, 384], strides = [1, 1]} : vector<2x512xf32> to vector<2x384xf32>
    %334 = arith.negf %333 : vector<2x384xf32>
    %335 = math.exp %334 : vector<2x384xf32>
    %cst_65 = arith.constant 1.000000e+00 : f32
    %336 = vector.broadcast %cst_65 : f32 to vector<2x384xf32>
    %337 = arith.addf %336, %335 : vector<2x384xf32>
    %338 = arith.divf %336, %337 : vector<2x384xf32>
    %339 = vector.extract_strided_slice %332 {offsets = [0, 384], sizes = [2, 128], strides = [1, 1]} : vector<2x512xf32> to vector<2x128xf32>
    %340 = math.tanh %339 : vector<2x128xf32>
    %341 = vector.extract_strided_slice %338 {offsets = [0, 128], sizes = [2, 128], strides = [1, 1]} : vector<2x384xf32> to vector<2x128xf32>
    %342 = arith.mulf %341, %322 : vector<2x128xf32>
    %343 = vector.extract_strided_slice %338 {offsets = [0, 0], sizes = [2, 128], strides = [1, 1]} : vector<2x384xf32> to vector<2x128xf32>
    %344 = arith.mulf %343, %340 : vector<2x128xf32>
    %345 = arith.addf %342, %344 : vector<2x128xf32>
    %346 = vector.extract_strided_slice %338 {offsets = [0, 256], sizes = [2, 128], strides = [1, 1]} : vector<2x384xf32> to vector<2x128xf32>
    %347 = math.tanh %345 : vector<2x128xf32>
    %348 = arith.mulf %346, %347 : vector<2x128xf32>
    %349 = tpu.concatenate %67, %110, %153, %196, %239, %282, %325, %348 in 0 : vector<2x128xf32>, vector<2x128xf32>, vector<2x128xf32>, vector<2x128xf32>, vector<2x128xf32>, vector<2x128xf32>, vector<2x128xf32>, vector<2x128xf32> -> vector<16x128xf32>
    %350 = arith.truncf %349 : vector<16x128xf32> to vector<16x128xbf16>
    %c0_66 = arith.constant 0 : index
    %c0_67 = arith.constant 0 : index
    %351 = vector.load %arg2[%c0_66, %c0_67] : memref<384x128xbf16, #tpu.memory_space<vmem>>, vector<128x128xbf16>
    %cst_68 = arith.constant dense<0.000000e+00> : vector<16x128xf32>
    %352 = tpu.matmul %350, %351, %cst_68 {dimension_numbers = #tpu.dot_dimension_numbers<[1], [0], [0], [1], [0, 0, 1, 1], [], []>} : vector<16x128xbf16>, vector<128x128xbf16>, vector<16x128xf32> -> vector<16x128xf32>
    %c2 = arith.constant 2 : index
    %c0_69 = arith.constant 0 : index
    %353 = vector.load %arg3[%c2, %c0_69] : memref<8x512xf32, #tpu.memory_space<vmem>>, vector<1x128xf32>
    %354 = vector.broadcast %353 : vector<1x128xf32> to vector<16x128xf32>
    %355 = arith.addf %352, %354 : vector<16x128xf32>
    %356 = math.tanh %355 : vector<16x128xf32>
    %c3 = arith.constant 3 : index
    %c0_70 = arith.constant 0 : index
    %357 = vector.load %arg3[%c3, %c0_70] : memref<8x512xf32, #tpu.memory_space<vmem>>, vector<1x128xf32>
    %358 = vector.broadcast %357 : vector<1x128xf32> to vector<16x128xf32>
    %359 = arith.mulf %356, %358 : vector<16x128xf32>
    %cst_71 = arith.constant dense<0.000000e+00> : vector<16xf32>
    %360 = vector.multi_reduction <add>, %359, %cst_71 [1] : vector<16x128xf32> to vector<16xf32>
    %361 = vector.shape_cast %360 : vector<16xf32> to vector<16x1xf32>
    %362 = vector.shape_cast %361 : vector<16x1xf32> to vector<1x16x1xf32>
    %cst_72 = arith.constant dense<0xFF800000> : vector<1xf32>
    %363 = vector.multi_reduction <maximumf>, %362, %cst_72 [1, 2] : vector<1x16x1xf32> to vector<1xf32>
    %364 = vector.shape_cast %363 : vector<1xf32> to vector<1x1x1xf32>
    %365 = vector.extract %364[0, 0, 0] : f32 from vector<1x1x1xf32>
    %366 = vector.broadcast %365 : f32 to vector<16x1xf32>
    %367 = arith.subf %361, %366 : vector<16x1xf32>
    %368 = math.exp %367 : vector<16x1xf32>
    %369 = tpu.iota {dimensions = array<i32: 1>} : vector<2x16xi32>
    %c2_i32 = arith.constant 2 : i32
    %c0_i32 = arith.constant 0 : i32
    %370 = arith.cmpi eq, %c2_i32, %c0_i32 : i32
    %c1_i32 = arith.constant 1 : i32
    %371 = arith.select %370, %c1_i32, %c2_i32 : i32
    %372 = vector.broadcast %371 : i32 to vector<2x16xi32>
    %373 = arith.remsi %369, %372 : vector<2x16xi32>
    %c0_i32_73 = arith.constant 0 : i32
    %374 = vector.broadcast %c0_i32_73 : i32 to vector<2x16xi32>
    %375 = arith.cmpi ne, %373, %374 : vector<2x16xi32>
    %c0_i32_74 = arith.constant 0 : i32
    %376 = vector.broadcast %c0_i32_74 : i32 to vector<2x16xi32>
    %377 = arith.cmpi slt, %373, %376 : vector<2x16xi32>
    %c0_i32_75 = arith.constant 0 : i32
    %378 = arith.cmpi slt, %371, %c0_i32_75 : i32
    %379 = vector.broadcast %378 : i1 to vector<2x16xi1>
    %380 = vector.broadcast %379 : vector<2x16xi1> to vector<2x16xi1>
    %381 = arith.xori %377, %380 : vector<2x16xi1>
    %382 = arith.andi %381, %375 : vector<2x16xi1>
    %383 = vector.broadcast %371 : i32 to vector<2x16xi32>
    %384 = arith.addi %373, %383 : vector<2x16xi32>
    %385 = arith.select %382, %384, %373 : vector<2x16xi1>, vector<2x16xi32>
    %386 = tpu.iota {dimensions = array<i32: 0>} : vector<2x16xi32>
    %387 = arith.cmpi eq, %385, %386 : vector<2x16xi32>
    %388 = arith.extui %387 : vector<2x16xi1> to vector<2x16xi32>
    %389 = arith.sitofp %388 : vector<2x16xi32> to vector<2x16xf32>
    %390 = vector.broadcast %368 : vector<16x1xf32> to vector<16x128xf32>
    %391 = arith.mulf %390, %349 : vector<16x128xf32>
    %392 = vector.shape_cast %368 : vector<16x1xf32> to vector<16x1xf32>
    %393 = vector.broadcast %392 : vector<16x1xf32> to vector<16x128xf32>
    %394 = tpu.concatenate %391, %393 in 1 : vector<16x128xf32>, vector<16x128xf32> -> vector<16x256xf32>
    %cst_76 = arith.constant dense<0.000000e+00> : vector<2x256xf32>
    %395 = tpu.matmul %389, %394, %cst_76 {dimension_numbers = #tpu.dot_dimension_numbers<[1], [0], [0], [1], [0, 0, 1, 1], [], []>} : vector<2x16xf32>, vector<16x256xf32>, vector<2x256xf32> -> vector<2x256xf32>
    %396 = vector.extract_strided_slice %395 {offsets = [0, 0], sizes = [2, 128], strides = [1, 1]} : vector<2x256xf32> to vector<2x128xf32>
    %397 = vector.extract_strided_slice %395 {offsets = [0, 128], sizes = [2, 128], strides = [1, 1]} : vector<2x256xf32> to vector<2x128xf32>
    %398 = tpu.reciprocal %397 {approx = true} : vector<2x128xf32> -> vector<2x128xf32>
    %399 = arith.mulf %396, %398 : vector<2x128xf32>
    %400 = arith.truncf %399 : vector<2x128xf32> to vector<2x128xbf16>
    %c128 = arith.constant 128 : index
    %c0_77 = arith.constant 0 : index
    %401 = vector.load %arg2[%c128, %c0_77] : memref<384x128xbf16, #tpu.memory_space<vmem>>, vector<128x128xbf16>
    %cst_78 = arith.constant dense<0.000000e+00> : vector<2x128xf32>
    %402 = tpu.matmul %400, %401, %cst_78 {dimension_numbers = #tpu.dot_dimension_numbers<[1], [0], [0], [1], [0, 0, 1, 1], [], []>} : vector<2x128xbf16>, vector<128x128xbf16>, vector<2x128xf32> -> vector<2x128xf32>
    %c4 = arith.constant 4 : index
    %c0_79 = arith.constant 0 : index
    %403 = vector.load %arg3[%c4, %c0_79] : memref<8x512xf32, #tpu.memory_space<vmem>>, vector<1x128xf32>
    %404 = vector.broadcast %403 : vector<1x128xf32> to vector<2x128xf32>
    %405 = arith.addf %402, %404 : vector<2x128xf32>
    %cst_80 = arith.constant 0.000000e+00 : f32
    %406 = vector.broadcast %cst_80 : f32 to vector<2x128xf32>
    %407 = arith.maximumf %405, %406 : vector<2x128xf32>
    %408 = arith.truncf %407 : vector<2x128xf32> to vector<2x128xbf16>
    %c256 = arith.constant 256 : index
    %c0_81 = arith.constant 0 : index
    %409 = vector.load %arg2[%c256, %c0_81] : memref<384x128xbf16, #tpu.memory_space<vmem>>, vector<128x128xbf16>
    %cst_82 = arith.constant dense<0.000000e+00> : vector<2x128xf32>
    %410 = tpu.matmul %408, %409, %cst_82 {dimension_numbers = #tpu.dot_dimension_numbers<[1], [0], [0], [1], [0, 0, 1, 1], [], []>} : vector<2x128xbf16>, vector<128x128xbf16>, vector<2x128xf32> -> vector<2x128xf32>
    %c5 = arith.constant 5 : index
    %c0_83 = arith.constant 0 : index
    %411 = vector.load %arg3[%c5, %c0_83] : memref<8x512xf32, #tpu.memory_space<vmem>>, vector<1x128xf32>
    %412 = vector.broadcast %411 : vector<1x128xf32> to vector<2x128xf32>
    %413 = arith.addf %410, %412 : vector<2x128xf32>
    %cst_84 = arith.constant 0.000000e+00 : f32
    %414 = vector.broadcast %cst_84 : f32 to vector<2x128xf32>
    %415 = arith.maximumf %413, %414 : vector<2x128xf32>
    %c6 = arith.constant 6 : index
    %c0_85 = arith.constant 0 : index
    %416 = vector.load %arg3[%c6, %c0_85] : memref<8x512xf32, #tpu.memory_space<vmem>>, vector<1x128xf32>
    %417 = vector.broadcast %416 : vector<1x128xf32> to vector<2x128xf32>
    %418 = arith.mulf %415, %417 : vector<2x128xf32>
    %cst_86 = arith.constant dense<0.000000e+00> : vector<2xf32>
    %419 = vector.multi_reduction <add>, %418, %cst_86 [1] : vector<2x128xf32> to vector<2xf32>
    %420 = vector.shape_cast %419 : vector<2xf32> to vector<2x1xf32>
    %421 = arith.negf %420 : vector<2x1xf32>
    %422 = math.exp %421 : vector<2x1xf32>
    %cst_87 = arith.constant 1.000000e+00 : f32
    %423 = vector.broadcast %cst_87 : f32 to vector<2x1xf32>
    %424 = arith.addf %423, %422 : vector<2x1xf32>
    %425 = arith.divf %423, %424 : vector<2x1xf32>
    %c0_88 = arith.constant 0 : index
    %c0_89 = arith.constant 0 : index
    %426 = vector.load %arg4[%c0_88, %c0_89] : memref<2x1xf32, #tpu.memory_space<vmem>>, vector<2x1xf32>
    tpu.vector_store %arg4[%c0_88, %c0_89], %425 {strides = array<i32>} : memref<2x1xf32, #tpu.memory_space<vmem>>, vector<2x1xf32>,
    return
  }
}

</mosaic_0001>

<llo_original>
// kernel: regularized_lstm_forward.1
$region0: #{regularized_lstm_forward.1}
  #allocation0 [shape = 'u32[]', space=smem, size = 0x4, offset = 0x4, fixed_abs, tag = 'smem constant byte address 0x4 - core index']
  #allocation1 [shape = 'u32[144,128]{1,0:T(1,128)}', space=vmem, size = 0x12000, scoped, tag = 'internal scratch']
  %s0 = inlined_call_operand.vmem [shape: bf16[16,16], index: 0, kind: input, shape index: {}]
  %s1 = inlined_call_operand.hbm [shape: bf16[400,512], index: 1, kind: input, shape index: {}]
  %s2 = inlined_call_operand.hbm [shape: bf16[384,128], index: 2, kind: input, shape index: {}]
  %s3 = inlined_call_operand.vmem [shape: f32[8,512], index: 3, kind: input, shape index: {}]
  %s4 = inlined_call_operand.vmem [shape: f32[2,1], index: 4, kind: output, shape index: {}]
  %s5 = sld [smem:[#allocation0]]
  $region34: #{regularized_lstm_forward.1} parent=0
    _
  %s7 = ssub.s32 1, %s5
  %s8 = scalar_select 0, %s7, %s5
  $region1: #{regularized_lstm_forward.1} parent=0
    #allocation2 [shape = 'u8[409600]{0}', space=vmem, size = 0x64000, scoped, tag = 'input window, operand 1, single buffered']
    #allocation3 [shape = 's32[1]{0}', space=sflag, size = 0x4, scoped, tag = 'scoped memory for regularized_lstm_forward.1']
    #allocation4 [shape = 'u8[98304]{0}', space=vmem, size = 0x18000, scoped, tag = 'input window, operand 2, single buffered']
    #allocation5 [shape = 's32[1]{0}', space=sflag, size = 0x4, scoped, tag = 'scoped memory for regularized_lstm_forward.1']
    %9 = vsyncpa [#allocation3], 0
    %10 = vsyncpa [#allocation5], 0
    // Predicated region
    $region2: #{regularized_lstm_forward.1} parent=1 // pred_check
      _
    $region3: #{regularized_lstm_forward.1} parent=1 // pred_check_branch
      %12 = sbr.rel (0) target = $region5
    $region4: #{regularized_lstm_forward.1} parent=1 // pred_region
      _
    $region5: #{regularized_lstm_forward.1} parent=1 // pred_fallthru
      _
    // Predicated region
    $region6: #{regularized_lstm_forward.1} parent=1 // pred_check
      _
    $region7: #{regularized_lstm_forward.1} parent=1 // pred_check_branch
      %14 = sbr.rel (0) target = $region9
    $region8: #{regularized_lstm_forward.1} parent=1 // pred_region
      %s16 = ssub.s32 12800, 12800
      %17 = vsyncadd [#allocation3], %s16
      %s18 = sshll.u32 [#allocation2], 4
      %s19 = int_to_ptr.vmem [resolvable:$true] %s18
      %24 = dma.hbm_to_vmem [thread:$0]  %s1, 12800, %s19, [#allocation3], 256, 256, 16
    $region9: #{regularized_lstm_forward.1} parent=1 // pred_fallthru
      _
    // Predicated region
    $region10: #{regularized_lstm_forward.1} parent=1 // pred_check
      _
    $region11: #{regularized_lstm_forward.1} parent=1 // pred_check_branch
      %26 = sbr.rel (0) target = $region13
    $region12: #{regularized_lstm_forward.1} parent=1 // pred_region
      %s28 = ssub.s32 3072, 3072
      %29 = vsyncadd [#allocation5], %s28
      %s30 = sshll.u32 [#allocation4], 4
      %s31 = int_to_ptr.vmem [resolvable:$true] %s30
      %36 = dma.hbm_to_vmem [thread:$0]  %s2, 3072, %s31, [#allocation5], 64, 64, 4
    $region13: #{regularized_lstm_forward.1} parent=1 // pred_fallthru
      _
    // Predicated region
    $region14: #{regularized_lstm_forward.1} parent=1 // pred_check
      _
    $region15: #{regularized_lstm_forward.1} parent=1 // pred_check_branch
      %38 = sbr.rel (0) target = $region17
    $region16: #{regularized_lstm_forward.1} parent=1 // pred_region
      _
    $region17: #{regularized_lstm_forward.1} parent=1 // pred_fallthru
      _
    // Predicated region
    $region18: #{regularized_lstm_forward.1} parent=1 // pred_check
      _
    $region19: #{regularized_lstm_forward.1} parent=1 // pred_check_branch
      %40 = sbr.rel (0) target = $region21
    $region20: #{regularized_lstm_forward.1} parent=1 // pred_region
      %41 = dma.done [#allocation3], 12800
    $region21: #{regularized_lstm_forward.1} parent=1 // pred_fallthru
      _
    // Predicated region
    $region22: #{regularized_lstm_forward.1} parent=1 // pred_check
      _
    $region23: #{regularized_lstm_forward.1} parent=1 // pred_check_branch
      %43 = sbr.rel (0) target = $region25
    $region24: #{regularized_lstm_forward.1} parent=1 // pred_region
      %44 = dma.done [#allocation5], 3072
    $region25: #{regularized_lstm_forward.1} parent=1 // pred_fallthru
      _
    %v46 = vld [vmem:[%s3] ss:$8 sm:$0xf]
    %s47 = scalar_lea.vmem %s3, 1
    %v48 = vld [vmem:[%s47] ss:$8 sm:$0xf]
    %v49 = vld [vmem:[%s0] sm:$0xf]
    %v50 = vld [vmem:[%s0 + $0x4] sm:$0xf]
    %v51 = vld [vmem:[#allocation2] sm:$0xff]
    %v52 = vld [vmem:[#allocation2 + $0x8] sm:$0xff]
    %v53 = vld [vmem:[#allocation2 + $0x10] sm:$0xff]
    %v54 = vld [vmem:[#allocation2 + $0x18] sm:$0xff]
    %v56 = vlaneseq
    %v57 = vshrl.u32 %v56, 7
    %v58 = vsub.s32 0, %v57
    %v59 = vrot.slane %v46, %v58
    %v60 = vlaneseq
    %v61 = vshrl.u32 %v60, 7
    %v62 = vsub.s32 1, %v61
    %v63 = vrot.slane %v46, %v62
    %v64 = vlaneseq
    %v65 = vshrl.u32 %v64, 7
    %v66 = vsub.s32 2, %v65
    %v67 = vrot.slane %v46, %v66
    %v68 = vlaneseq
    %v69 = vshrl.u32 %v68, 7
    %v70 = vsub.s32 3, %v69
    %v71 = vrot.slane %v46, %v70
    %v78 = vunpack.c.l.b16 %v49
    %v79 = vunpack.c.l.b16 %v50
    %v80 = vpack.c.b16 %v79, %v78
    %v85 = vunpack.c.l.b16 %v51
    %v86 = vunpack.c.h.b16 %v51
    %v87 = vunpack.c.l.b16 %v52
    %v88 = vunpack.c.h.b16 %v52
    %v89 = vunpack.c.l.b16 %v53
    %v90 = vunpack.c.h.b16 %v53
    %v91 = vunpack.c.l.b16 %v54
    %v92 = vunpack.c.h.b16 %v54
    %v93 = vpack.c.b16 %v89, %v85
    %v94 = vpack.c.b16 %v90, %v86
    %v95 = vpack.c.b16 %v91, %v87
    %v96 = vpack.c.b16 %v92, %v88
    %vm101 = vcmask 130048
    %v103 = vsel %vm101, %v80, 0
    %105 = vmatprep.subr.bf16.mxu0 %v94
    %106 = vmatpush1.bf16.msra.mxu0 %v93
    %107 = vmatprep.subr.bf16.mxu0 0
    %108 = vmatpush1.bf16.msra.mxu0 0
    %109 = vmatprep.subr.bf16.mxu0 0
    %110 = vmatpush1.bf16.msra.mxu0 0
    %111 = vmatprep.subr.bf16.mxu0 0
    %112 = vmatpush1.bf16.msra.mxu0 0
    %113 = vmatprep.subr.bf16.mxu0 0
    %114 = vmatpush1.bf16.msra.mxu0 0
    %115 = vmatprep.subr.bf16.mxu0 0
    %116 = vmatpush1.bf16.msra.mxu0 0
    %117 = vmatprep.subr.bf16.mxu0 0
    %118 = vmatpush1.bf16.msra.mxu0 0
    %119 = vmatprep.subr.bf16.mxu0 0
    %120 = vmatpush1.bf16.msra.mxu0 0
    %121 = vmatprep.subr.bf16.mxu0 0
    %122 = vmatpush1.bf16.msra.mxu0 0
    %123 = vmatprep.subr.bf16.mxu0 0
    %124 = vmatpush1.bf16.msra.mxu0 0
    %125 = vmatprep.subr.bf16.mxu0 0
    %126 = vmatpush1.bf16.msra.mxu0 0
    %127 = vmatprep.subr.bf16.mxu0 0
    %128 = vmatpush1.bf16.msra.mxu0 0
    %129 = vmatprep.subr.bf16.mxu0 0
    %130 = vmatpush1.bf16.msra.mxu0 0
    %131 = vmatprep.subr.bf16.mxu0 0
    %132 = vmatpush1.bf16.msra.mxu0 0
    %133 = vmatprep.subr.bf16.mxu0 0
    %134 = vmatpush1.bf16.msra.mxu0 0
    %135 = vmatprep.subr.bf16.mxu0 0
    %136 = vmatpush1.bf16.msra.mxu0 0
    %137 = vmatprep.mubr.bf16.mxu0 0
    %138 = vmatmul.mubr.bf16.gmra.mrb[0].mxu0 %v103
    %v139 = vpop.f32.mrb[0].mxu0
    %v140 = vadd.f32 %v59, %v139
    %v141 = vpop.f32.mrb[0].mxu0
    %v142 = vadd.f32 %v63, %v141
    %v143 = vpop.f32.mrb[0].mxu0
    %v144 = vadd.f32 %v59, %v143
    %v145 = vpop.f32.mrb[0].mxu0
    %v146 = vadd.f32 %v63, %v145
    %147 = vdwg.mxu0
    %148 = vmatprep.subr.bf16.mxu0 %v96
    %149 = vmatpush1.bf16.msra.mxu0 %v95
    %150 = vmatprep.subr.bf16.mxu0 0
    %151 = vmatpush1.bf16.msra.mxu0 0
    %152 = vmatprep.subr.bf16.mxu0 0
    %153 = vmatpush1.bf16.msra.mxu0 0
    %154 = vmatprep.subr.bf16.mxu0 0
    %155 = vmatpush1.bf16.msra.mxu0 0
    %156 = vmatprep.subr.bf16.mxu0 0
    %157 = vmatpush1.bf16.msra.mxu0 0
    %158 = vmatprep.subr.bf16.mxu0 0
    %159 = vmatpush1.bf16.msra.mxu0 0
    %160 = vmatprep.subr.bf16.mxu0 0
    %161 = vmatpush1.bf16.msra.mxu0 0
    %162 = vmatprep.subr.bf16.mxu0 0
    %163 = vmatpush1.bf16.msra.mxu0 0
    %164 = vmatprep.subr.bf16.mxu0 0
    %165 = vmatpush1.bf16.msra.mxu0 0
    %166 = vmatprep.subr.bf16.mxu0 0
    %167 = vmatpush1.bf16.msra.mxu0 0
    %168 = vmatprep.subr.bf16.mxu0 0
    %169 = vmatpush1.bf16.msra.mxu0 0
    %170 = vmatprep.subr.bf16.mxu0 0
    %171 = vmatpush1.bf16.msra.mxu0 0
    %172 = vmatprep.subr.bf16.mxu0 0
    %173 = vmatpush1.bf16.msra.mxu0 0
    %174 = vmatprep.subr.bf16.mxu0 0
    %175 = vmatpush1.bf16.msra.mxu0 0
    %176 = vmatprep.subr.bf16.mxu0 0
    %177 = vmatpush1.bf16.msra.mxu0 0
    %178 = vmatprep.subr.bf16.mxu0 0
    %179 = vmatpush1.bf16.msra.mxu0 0
    %180 = vmatprep.mubr.bf16.mxu0 0
    %181 = vmatmul.mubr.bf16.gmra.mrb[0].mxu0 %v103
    %v182 = vpop.f32.mrb[0].mxu0
    %v183 = vadd.f32 %v67, %v182
    %v184 = vpop.f32.mrb[0].mxu0
    %v185 = vadd.f32 %v71, %v184
    %v186 = vpop.f32.mrb[0].mxu0
    %v187 = vadd.f32 %v67, %v186
    %v188 = vpop.f32.mrb[0].mxu0
    %v189 = vadd.f32 %v71, %v188
    %190 = vdwg.mxu0
    %v191 = vxor.u32 %v140, 2147483648
    %v192 = vxor.u32 %v142, 2147483648
    %v193 = vxor.u32 %v183, 2147483648
    %v194 = vmul.f32 %v191, 1.442695
    %v195 = vpow.pop %v194
    %v196 = vmul.f32 %v192, 1.442695
    %v197 = vpow.pop %v196
    %v198 = vmul.f32 %v193, 1.442695
    %v199 = vpow.pop %v198
    %v200 = vadd.f32 %v195, 1.0
    %v201 = vadd.f32 %v197, 1.0
    %v202 = vadd.f32 %v199, 1.0
    %v203 = vrcp.pop %v200
    %v204 = vmul.f32 1.0, %v203
    %v205 = vrcp.pop %v201
    %v206 = vmul.f32 1.0, %v205
    %v207 = vrcp.pop %v202
    %v208 = vmul.f32 1.0, %v207
    %v209 = vtanh.pop %v185
    %v210 = vmul.f32 %v206, 0.0
    %v211 = vmul.f32 %v204, %v209
    %v212 = vadd.f32 %v210, %v211
    %v213 = vtanh.pop %v212
    %v214 = vmul.f32 %v208, %v213
    %v215 = vpack.c.bf16 %v214, %v214
    %v216 = vld [vmem:[#allocation2 + $0x20] sm:$0xff]
    %v217 = vld [vmem:[#allocation2 + $0x28] sm:$0xff]
    %v218 = vld [vmem:[#allocation2 + $0x30] sm:$0xff]
    %v219 = vld [vmem:[#allocation2 + $0x38] sm:$0xff]
    %v220 = vld [vmem:[#allocation2 + $0x40] sm:$0xff]
    %v221 = vld [vmem:[#allocation2 + $0x48] sm:$0xff]
    %v222 = vld [vmem:[#allocation2 + $0x50] sm:$0xff]
    %v223 = vld [vmem:[#allocation2 + $0x58] sm:$0xff]
    %v224 = vld [vmem:[#allocation2 + $0x60] sm:$0xff]
    %v225 = vld [vmem:[#allocation2 + $0x68] sm:$0xff]
    %v226 = vld [vmem:[#allocation2 + $0x70] sm:$0xff]
    %v227 = vld [vmem:[#allocation2 + $0x78] sm:$0xff]
    %v228 = vld [vmem:[#allocation2 + $0x80] sm:$0xff]
    %v229 = vld [vmem:[#allocation2 + $0x88] sm:$0xff]
    %v230 = vld [vmem:[#allocation2 + $0x90] sm:$0xff]
    %v231 = vld [vmem:[#allocation2 + $0x98] sm:$0xff]
    %v232 = vld [vmem:[#allocation2 + $0xa0] sm:$0xff]
    %v233 = vld [vmem:[#allocation2 + $0xa8] sm:$0xff]
    %v234 = vld [vmem:[#allocation2 + $0xb0] sm:$0xff]
    %v235 = vld [vmem:[#allocation2 + $0xb8] sm:$0xff]
    %v236 = vld [vmem:[#allocation2 + $0xc0] sm:$0xff]
    %v237 = vld [vmem:[#allocation2 + $0xc8] sm:$0xff]
    %v238 = vld [vmem:[#allocation2 + $0xd0] sm:$0xff]
    %v239 = vld [vmem:[#allocation2 + $0xd8] sm:$0xff]
    %v240 = vld [vmem:[#allocation2 + $0xe0] sm:$0xff]
    %v241 = vld [vmem:[#allocation2 + $0xe8] sm:$0xff]
    %v242 = vld [vmem:[#allocation2 + $0xf0] sm:$0xff]
    %v243 = vld [vmem:[#allocation2 + $0xf8] sm:$0xff]
    %v244 = vld [vmem:[#allocation2 + $0x100] sm:$0xff]
    %v245 = vld [vmem:[#allocation2 + $0x108] sm:$0xff]
    %v246 = vld [vmem:[#allocation2 + $0x110] sm:$0xff]
    %v247 = vld [vmem:[#allocation2 + $0x118] sm:$0xff]
    %v280 = vunpack.c.l.b16 %v216
    %v281 = vunpack.c.h.b16 %v216
    %v282 = vunpack.c.l.b16 %v217
    %v283 = vunpack.c.h.b16 %v217
    %v284 = vunpack.c.l.b16 %v218
    %v285 = vunpack.c.h.b16 %v218
    %v286 = vunpack.c.l.b16 %v219
    %v287 = vunpack.c.h.b16 %v219
    %v288 = vunpack.c.l.b16 %v220
    %v289 = vunpack.c.h.b16 %v220
    %v290 = vunpack.c.l.b16 %v221
    %v291 = vunpack.c.h.b16 %v221
    %v292 = vunpack.c.l.b16 %v222
    %v293 = vunpack.c.h.b16 %v222
    %v294 = vunpack.c.l.b16 %v223
    %v295 = vunpack.c.h.b16 %v223
    %v296 = vunpack.c.l.b16 %v224
    %v297 = vunpack.c.h.b16 %v224
    %v298 = vunpack.c.l.b16 %v225
    %v299 = vunpack.c.h.b16 %v225
    %v300 = vunpack.c.l.b16 %v226
    %v301 = vunpack.c.h.b16 %v226
    %v302 = vunpack.c.l.b16 %v227
    %v303 = vunpack.c.h.b16 %v227
    %v304 = vunpack.c.l.b16 %v228
    %v305 = vunpack.c.h.b16 %v228
    %v306 = vunpack.c.l.b16 %v229
    %v307 = vunpack.c.h.b16 %v229
    %v308 = vunpack.c.l.b16 %v230
    %v309 = vunpack.c.h.b16 %v230
    %v310 = vunpack.c.l.b16 %v231
    %v311 = vunpack.c.h.b16 %v231
    %v312 = vunpack.c.l.b16 %v232
    %v313 = vunpack.c.h.b16 %v232
    %v314 = vunpack.c.l.b16 %v233
    %v315 = vunpack.c.h.b16 %v233
    %v316 = vunpack.c.l.b16 %v234
    %v317 = vunpack.c.h.b16 %v234
    %v318 = vunpack.c.l.b16 %v235
    %v319 = vunpack.c.h.b16 %v235
    %v320 = vunpack.c.l.b16 %v236
    %v321 = vunpack.c.h.b16 %v236
    %v322 = vunpack.c.l.b16 %v237
    %v323 = vunpack.c.h.b16 %v237
    %v324 = vunpack.c.l.b16 %v238
    %v325 = vunpack.c.h.b16 %v238
    %v326 = vunpack.c.l.b16 %v239
    %v327 = vunpack.c.h.b16 %v239
    %v328 = vunpack.c.l.b16 %v240
    %v329 = vunpack.c.h.b16 %v240
    %v330 = vunpack.c.l.b16 %v241
    %v331 = vunpack.c.h.b16 %v241
    %v332 = vunpack.c.l.b16 %v242
    %v333 = vunpack.c.h.b16 %v242
    %v334 = vunpack.c.l.b16 %v243
    %v335 = vunpack.c.h.b16 %v243
    %v336 = vunpack.c.l.b16 %v244
    %v337 = vunpack.c.h.b16 %v244
    %v338 = vunpack.c.l.b16 %v245
    %v339 = vunpack.c.h.b16 %v245
    %v340 = vunpack.c.l.b16 %v246
    %v341 = vunpack.c.h.b16 %v246
    %v342 = vunpack.c.l.b16 %v247
    %v343 = vunpack.c.h.b16 %v247
    %v344 = vpack.c.b16 %v284, %v280
    %v345 = vpack.c.b16 %v285, %v281
    %v346 = vpack.c.b16 %v286, %v282
    %v347 = vpack.c.b16 %v287, %v283
    %v348 = vpack.c.b16 %v292, %v288
    %v349 = vpack.c.b16 %v293, %v289
    %v350 = vpack.c.b16 %v294, %v290
    %v351 = vpack.c.b16 %v295, %v291
    %v352 = vpack.c.b16 %v300, %v296
    %v353 = vpack.c.b16 %v301, %v297
    %v354 = vpack.c.b16 %v302, %v298
    %v355 = vpack.c.b16 %v303, %v299
    %v356 = vpack.c.b16 %v308, %v304
    %v357 = vpack.c.b16 %v309, %v305
    %v358 = vpack.c.b16 %v310, %v306
    %v359 = vpack.c.b16 %v311, %v307
    %v360 = vpack.c.b16 %v316, %v312
    %v361 = vpack.c.b16 %v317, %v313
    %v362 = vpack.c.b16 %v318, %v314
    %v363 = vpack.c.b16 %v319, %v315
    %v364 = vpack.c.b16 %v324, %v320
    %v365 = vpack.c.b16 %v325, %v321
    %v366 = vpack.c.b16 %v326, %v322
    %v367 = vpack.c.b16 %v327, %v323
    %v368 = vpack.c.b16 %v332, %v328
    %v369 = vpack.c.b16 %v333, %v329
    %v370 = vpack.c.b16 %v334, %v330
    %v371 = vpack.c.b16 %v335, %v331
    %v372 = vpack.c.b16 %v340, %v336
    %v373 = vpack.c.b16 %v341, %v337
    %v374 = vpack.c.b16 %v342, %v338
    %v375 = vpack.c.b16 %v343, %v339
    %408 = vmatprep.subr.bf16.mxu0 %v345
    %409 = vmatpush1.bf16.msra.mxu0 %v344
    %410 = vmatprep.subr.bf16.mxu0 %v349
    %411 = vmatpush1.bf16.msra.mxu0 %v348
    %412 = vmatprep.subr.bf16.mxu0 %v353
    %413 = vmatpush1.bf16.msra.mxu0 %v352
    %414 = vmatprep.subr.bf16.mxu0 %v357
    %415 = vmatpush1.bf16.msra.mxu0 %v356
    %416 = vmatprep.subr.bf16.mxu0 %v361
    %417 = vmatpush1.bf16.msra.mxu0 %v360
    %418 = vmatprep.subr.bf16.mxu0 %v365
    %419 = vmatpush1.bf16.msra.mxu0 %v364
    %420 = vmatprep.subr.bf16.mxu0 %v369
    %421 = vmatpush1.bf16.msra.mxu0 %v368
    %422 = vmatprep.subr.bf16.mxu0 %v373
    %423 = vmatpush1.bf16.msra.mxu0 %v372
    %424 = vmatprep.subr.bf16.mxu0 0
    %425 = vmatpush1.bf16.msra.mxu0 0
    %426 = vmatprep.subr.bf16.mxu0 0
    %427 = vmatpush1.bf16.msra.mxu0 0
    %428 = vmatprep.subr.bf16.mxu0 0
    %429 = vmatpush1.bf16.msra.mxu0 0
    %430 = vmatprep.subr.bf16.mxu0 0
    %431 = vmatpush1.bf16.msra.mxu0 0
    %432 = vmatprep.subr.bf16.mxu0 0
    %433 = vmatpush1.bf16.msra.mxu0 0
    %434 = vmatprep.subr.bf16.mxu0 0
    %435 = vmatpush1.bf16.msra.mxu0 0
    %436 = vmatprep.subr.bf16.mxu0 0
    %437 = vmatpush1.bf16.msra.mxu0 0
    %438 = vmatprep.subr.bf16.mxu0 0
    %439 = vmatpush1.bf16.msra.mxu0 0
    %440 = vmatprep.mubr.bf16.mxu0 0
    %441 = vmatmul.mubr.bf16.gmra.mrb[0].mxu0 %v215
    %v442 = vpop.f32.mrb[0].mxu0
    %v443 = vadd.f32 0.0, %v442
    %v444 = vpop.f32.mrb[0].mxu0
    %v445 = vadd.f32 0.0, %v444
    %v446 = vpop.f32.mrb[0].mxu0
    %v447 = vpop.f32.mrb[0].mxu0
    %448 = vdwg.mxu0
    %449 = vmatprep.subr.bf16.mxu0 %v347
    %450 = vmatpush1.bf16.msra.mxu0 %v346
    %451 = vmatprep.subr.bf16.mxu0 %v351
    %452 = vmatpush1.bf16.msra.mxu0 %v350
    %453 = vmatprep.subr.bf16.mxu0 %v355
    %454 = vmatpush1.bf16.msra.mxu0 %v354
    %455 = vmatprep.subr.bf16.mxu0 %v359
    %456 = vmatpush1.bf16.msra.mxu0 %v358
    %457 = vmatprep.subr.bf16.mxu0 %v363
    %458 = vmatpush1.bf16.msra.mxu0 %v362
    %459 = vmatprep.subr.bf16.mxu0 %v367
    %460 = vmatpush1.bf16.msra.mxu0 %v366
    %461 = vmatprep.subr.bf16.mxu0 %v371
    %462 = vmatpush1.bf16.msra.mxu0 %v370
    %463 = vmatprep.subr.bf16.mxu0 %v375
    %464 = vmatpush1.bf16.msra.mxu0 %v374
    %465 = vmatprep.subr.bf16.mxu0 0
    %466 = vmatpush1.bf16.msra.mxu0 0
    %467 = vmatprep.subr.bf16.mxu0 0
    %468 = vmatpush1.bf16.msra.mxu0 0
    %469 = vmatprep.subr.bf16.mxu0 0
    %470 = vmatpush1.bf16.msra.mxu0 0
    %471 = vmatprep.subr.bf16.mxu0 0
    %472 = vmatpush1.bf16.msra.mxu0 0
    %473 = vmatprep.subr.bf16.mxu0 0
    %474 = vmatpush1.bf16.msra.mxu0 0
    %475 = vmatprep.subr.bf16.mxu0 0
    %476 = vmatpush1.bf16.msra.mxu0 0
    %477 = vmatprep.subr.bf16.mxu0 0
    %478 = vmatpush1.bf16.msra.mxu0 0
    %479 = vmatprep.subr.bf16.mxu0 0
    %480 = vmatpush1.bf16.msra.mxu0 0
    %481 = vmatprep.mubr.bf16.mxu0 0
    %482 = vmatmul.mubr.bf16.gmra.mrb[0].mxu0 %v215
    %v483 = vpop.f32.mrb[0].mxu0
    %v484 = vadd.f32 0.0, %v483
    %v485 = vpop.f32.mrb[0].mxu0
    %v486 = vadd.f32 0.0, %v485
    %v487 = vpop.f32.mrb[0].mxu0
    %v488 = vpop.f32.mrb[0].mxu0
    %489 = vdwg.mxu0
    %v494 = vrot.slane %v443, 6
    %v495 = vrot.slane %v445, 6
    %v496 = vrot.slane %v484, 6
    %v497 = vrot.slane %v486, 6
    %v502 = vadd.f32 %v140, %v494
    %v503 = vadd.f32 %v142, %v495
    %v504 = vadd.f32 %v183, %v496
    %v505 = vadd.f32 %v185, %v497
    %v506 = vld [vmem:[#allocation2 + $0x120] sm:$0xff]
    %v507 = vld [vmem:[#allocation2 + $0x128] sm:$0xff]
    %v508 = vld [vmem:[#allocation2 + $0x130] sm:$0xff]
    %v509 = vld [vmem:[#allocation2 + $0x138] sm:$0xff]
    %v510 = vld [vmem:[#allocation2 + $0x140] sm:$0xff]
    %v511 = vld [vmem:[#allocation2 + $0x148] sm:$0xff]
    %v512 = vld [vmem:[#allocation2 + $0x150] sm:$0xff]
    %v513 = vld [vmem:[#allocation2 + $0x158] sm:$0xff]
    %v514 = vld [vmem:[#allocation2 + $0x160] sm:$0xff]
    %v515 = vld [vmem:[#allocation2 + $0x168] sm:$0xff]
    %v516 = vld [vmem:[#allocation2 + $0x170] sm:$0xff]
    %v517 = vld [vmem:[#allocation2 + $0x178] sm:$0xff]
    %v518 = vld [vmem:[#allocation2 + $0x180] sm:$0xff]
    %v519 = vld [vmem:[#allocation2 + $0x188] sm:$0xff]
    %v520 = vld [vmem:[#allocation2 + $0x190] sm:$0xff]
    %v521 = vld [vmem:[#allocation2 + $0x198] sm:$0xff]
    %v522 = vld [vmem:[#allocation2 + $0x1a0] sm:$0xff]
    %v523 = vld [vmem:[#allocation2 + $0x1a8] sm:$0xff]
    %v524 = vld [vmem:[#allocation2 + $0x1b0] sm:$0xff]
    %v525 = vld [vmem:[#allocation2 + $0x1b8] sm:$0xff]
    %v526 = vld [vmem:[#allocation2 + $0x1c0] sm:$0xff]
    %v527 = vld [vmem:[#allocation2 + $0x1c8] sm:$0xff]
    %v528 = vld [vmem:[#allocation2 + $0x1d0] sm:$0xff]
    %v529 = vld [vmem:[#allocation2 + $0x1d8] sm:$0xff]
    %v530 = vld [vmem:[#allocation2 + $0x1e0] sm:$0xff]
    %v531 = vld [vmem:[#allocation2 + $0x1e8] sm:$0xff]
    %v532 = vld [vmem:[#allocation2 + $0x1f0] sm:$0xff]
    %v533 = vld [vmem:[#allocation2 + $0x1f8] sm:$0xff]
    %v534 = vld [vmem:[#allocation2 + $0x200] sm:$0xff]
    %v535 = vld [vmem:[#allocation2 + $0x208] sm:$0xff]
    %v536 = vld [vmem:[#allocation2 + $0x210] sm:$0xff]
    %v537 = vld [vmem:[#allocation2 + $0x218] sm:$0xff]
    %v538 = vld [vmem:[#allocation2 + $0x220] sm:$0xff]
    %v539 = vld [vmem:[#allocation2 + $0x228] sm:$0xff]
    %v540 = vld [vmem:[#allocation2 + $0x230] sm:$0xff]
    %v541 = vld [vmem:[#allocation2 + $0x238] sm:$0xff]
    %v542 = vld [vmem:[#allocation2 + $0x240] sm:$0xff]
    %v543 = vld [vmem:[#allocation2 + $0x248] sm:$0xff]
    %v544 = vld [vmem:[#allocation2 + $0x250] sm:$0xff]
    %v545 = vld [vmem:[#allocation2 + $0x258] sm:$0xff]
    %v546 = vld [vmem:[#allocation2 + $0x260] sm:$0xff]
    %v547 = vld [vmem:[#allocation2 + $0x268] sm:$0xff]
    %v548 = vld [vmem:[#allocation2 + $0x270] sm:$0xff]
    %v549 = vld [vmem:[#allocation2 + $0x278] sm:$0xff]
    %v550 = vld [vmem:[#allocation2 + $0x280] sm:$0xff]
    %v551 = vld [vmem:[#allocation2 + $0x288] sm:$0xff]
    %v552 = vld [vmem:[#allocation2 + $0x290] sm:$0xff]
    %v553 = vld [vmem:[#allocation2 + $0x298] sm:$0xff]
    %v554 = vld [vmem:[#allocation2 + $0x2a0] sm:$0xff]
    %v555 = vld [vmem:[#allocation2 + $0x2a8] sm:$0xff]
    %v556 = vld [vmem:[#allocation2 + $0x2b0] sm:$0xff]
    %v557 = vld [vmem:[#allocation2 + $0x2b8] sm:$0xff]
    %v558 = vld [vmem:[#allocation2 + $0x2c0] sm:$0xff]
    %v559 = vld [vmem:[#allocation2 + $0x2c8] sm:$0xff]
    %v560 = vld [vmem:[#allocation2 + $0x2d0] sm:$0xff]
    %v561 = vld [vmem:[#allocation2 + $0x2d8] sm:$0xff]
    %v562 = vld [vmem:[#allocation2 + $0x2e0] sm:$0xff]
    %v563 = vld [vmem:[#allocation2 + $0x2e8] sm:$0xff]
    %v564 = vld [vmem:[#allocation2 + $0x2f0] sm:$0xff]
    %v565 = vld [vmem:[#allocation2 + $0x2f8] sm:$0xff]
    %v566 = vld [vmem:[#allocation2 + $0x300] sm:$0xff]
    %v567 = vld [vmem:[#allocation2 + $0x308] sm:$0xff]
    %v568 = vld [vmem:[#allocation2 + $0x310] sm:$0xff]
    %v569 = vld [vmem:[#allocation2 + $0x318] sm:$0xff]
    %v571 = vlaneseq
    %v572 = vshrl.u32 %v571, 7
    %v573 = vsub.s32 0, %v572
    %v574 = vrot.slane %v48, %v573
    %v575 = vlaneseq
    %v576 = vshrl.u32 %v575, 7
    %v577 = vsub.s32 1, %v576
    %v578 = vrot.slane %v48, %v577
    %v579 = vlaneseq
    %v580 = vshrl.u32 %v579, 7
    %v581 = vsub.s32 2, %v580
    %v582 = vrot.slane %v48, %v581
    %v583 = vlaneseq
    %v584 = vshrl.u32 %v583, 7
    %v585 = vsub.s32 3, %v584
    %v586 = vrot.slane %v48, %v585
    %v655 = vunpack.c.l.b16 %v506
    %v656 = vunpack.c.h.b16 %v506
    %v657 = vunpack.c.l.b16 %v507
    %v658 = vunpack.c.h.b16 %v507
    %v659 = vunpack.c.l.b16 %v508
    %v660 = vunpack.c.h.b16 %v508
    %v661 = vunpack.c.l.b16 %v509
    %v662 = vunpack.c.h.b16 %v509
    %v663 = vunpack.c.l.b16 %v510
    %v664 = vunpack.c.h.b16 %v510
    %v665 = vunpack.c.l.b16 %v511
    %v666 = vunpack.c.h.b16 %v511
    %v667 = vunpack.c.l.b16 %v512
    %v668 = vunpack.c.h.b16 %v512
    %v669 = vunpack.c.l.b16 %v513
    %v670 = vunpack.c.h.b16 %v513
    %v671 = vunpack.c.l.b16 %v514
    %v672 = vunpack.c.h.b16 %v514
    %v673 = vunpack.c.l.b16 %v515
    %v674 = vunpack.c.h.b16 %v515
    %v675 = vunpack.c.l.b16 %v516
    %v676 = vunpack.c.h.b16 %v516
    %v677 = vunpack.c.l.b16 %v517
    %v678 = vunpack.c.h.b16 %v517
    %v679 = vunpack.c.l.b16 %v518
    %v680 = vunpack.c.h.b16 %v518
    %v681 = vunpack.c.l.b16 %v519
    %v682 = vunpack.c.h.b16 %v519
    %v683 = vunpack.c.l.b16 %v520
    %v684 = vunpack.c.h.b16 %v520
    %v685 = vunpack.c.l.b16 %v521
    %v686 = vunpack.c.h.b16 %v521
    %v687 = vunpack.c.l.b16 %v522
    %v688 = vunpack.c.h.b16 %v522
    %v689 = vunpack.c.l.b16 %v523
    %v690 = vunpack.c.h.b16 %v523
    %v691 = vunpack.c.l.b16 %v524
    %v692 = vunpack.c.h.b16 %v524
    %v693 = vunpack.c.l.b16 %v525
    %v694 = vunpack.c.h.b16 %v525
    %v695 = vunpack.c.l.b16 %v526
    %v696 = vunpack.c.h.b16 %v526
    %v697 = vunpack.c.l.b16 %v527
    %v698 = vunpack.c.h.b16 %v527
    %v699 = vunpack.c.l.b16 %v528
    %v700 = vunpack.c.h.b16 %v528
    %v701 = vunpack.c.l.b16 %v529
    %v702 = vunpack.c.h.b16 %v529
    %v703 = vunpack.c.l.b16 %v530
    %v704 = vunpack.c.h.b16 %v530
    %v705 = vunpack.c.l.b16 %v531
    %v706 = vunpack.c.h.b16 %v531
    %v707 = vunpack.c.l.b16 %v532
    %v708 = vunpack.c.h.b16 %v532
    %v709 = vunpack.c.l.b16 %v533
    %v710 = vunpack.c.h.b16 %v533
    %v711 = vunpack.c.l.b16 %v534
    %v712 = vunpack.c.h.b16 %v534
    %v713 = vunpack.c.l.b16 %v535
    %v714 = vunpack.c.h.b16 %v535
    %v715 = vunpack.c.l.b16 %v536
    %v716 = vunpack.c.h.b16 %v536
    %v717 = vunpack.c.l.b16 %v537
    %v718 = vunpack.c.h.b16 %v537
    %v719 = vunpack.c.l.b16 %v538
    %v720 = vunpack.c.h.b16 %v538
    %v721 = vunpack.c.l.b16 %v539
    %v722 = vunpack.c.h.b16 %v539
    %v723 = vunpack.c.l.b16 %v540
    %v724 = vunpack.c.h.b16 %v540
    %v725 = vunpack.c.l.b16 %v541
    %v726 = vunpack.c.h.b16 %v541
    %v727 = vunpack.c.l.b16 %v542
    %v728 = vunpack.c.h.b16 %v542
    %v729 = vunpack.c.l.b16 %v543
    %v730 = vunpack.c.h.b16 %v543
    %v731 = vunpack.c.l.b16 %v544
    %v732 = vunpack.c.h.b16 %v544
    %v733 = vunpack.c.l.b16 %v545
    %v734 = vunpack.c.h.b16 %v545
    %v735 = vunpack.c.l.b16 %v546
    %v736 = vunpack.c.h.b16 %v546
    %v737 = vunpack.c.l.b16 %v547
    %v738 = vunpack.c.h.b16 %v547
    %v739 = vunpack.c.l.b16 %v548
    %v740 = vunpack.c.h.b16 %v548
    %v741 = vunpack.c.l.b16 %v549
    %v742 = vunpack.c.h.b16 %v549
    %v743 = vunpack.c.l.b16 %v550
    %v744 = vunpack.c.h.b16 %v550
    %v745 = vunpack.c.l.b16 %v551
    %v746 = vunpack.c.h.b16 %v551
    %v747 = vunpack.c.l.b16 %v552
    %v748 = vunpack.c.h.b16 %v552
    %v749 = vunpack.c.l.b16 %v553
    %v750 = vunpack.c.h.b16 %v553
    %v751 = vunpack.c.l.b16 %v554
    %v752 = vunpack.c.h.b16 %v554
    %v753 = vunpack.c.l.b16 %v555
    %v754 = vunpack.c.h.b16 %v555
    %v755 = vunpack.c.l.b16 %v556
    %v756 = vunpack.c.h.b16 %v556
    %v757 = vunpack.c.l.b16 %v557
    %v758 = vunpack.c.h.b16 %v557
    %v759 = vunpack.c.l.b16 %v558
    %v760 = vunpack.c.h.b16 %v558
    %v761 = vunpack.c.l.b16 %v559
    %v762 = vunpack.c.h.b16 %v559
    %v763 = vunpack.c.l.b16 %v560
    %v764 = vunpack.c.h.b16 %v560
    %v765 = vunpack.c.l.b16 %v561
    %v766 = vunpack.c.h.b16 %v561
    %v767 = vunpack.c.l.b16 %v562
    %v768 = vunpack.c.h.b16 %v562
    %v769 = vunpack.c.l.b16 %v563
    %v770 = vunpack.c.h.b16 %v563
    %v771 = vunpack.c.l.b16 %v564
    %v772 = vunpack.c.h.b16 %v564
    %v773 = vunpack.c.l.b16 %v565
    %v774 = vunpack.c.h.b16 %v565
    %v775 = vunpack.c.l.b16 %v566
    %v776 = vunpack.c.h.b16 %v566
    %v777 = vunpack.c.l.b16 %v567
    %v778 = vunpack.c.h.b16 %v567
    %v779 = vunpack.c.l.b16 %v568
    %v780 = vunpack.c.h.b16 %v568
    %v781 = vunpack.c.l.b16 %v569
    %v782 = vunpack.c.h.b16 %v569
    %v783 = vpack.c.b16 %v659, %v655
    %v784 = vpack.c.b16 %v660, %v656
    %v785 = vpack.c.b16 %v661, %v657
    %v786 = vpack.c.b16 %v662, %v658
    %v787 = vpack.c.b16 %v667, %v663
    %v788 = vpack.c.b16 %v668, %v664
    %v789 = vpack.c.b16 %v669, %v665
    %v790 = vpack.c.b16 %v670, %v666
    %v791 = vpack.c.b16 %v675, %v671
    %v792 = vpack.c.b16 %v676, %v672
    %v793 = vpack.c.b16 %v677, %v673
    %v794 = vpack.c.b16 %v678, %v674
    %v795 = vpack.c.b16 %v683, %v679
    %v796 = vpack.c.b16 %v684, %v680
    %v797 = vpack.c.b16 %v685, %v681
    %v798 = vpack.c.b16 %v686, %v682
    %v799 = vpack.c.b16 %v691, %v687
    %v800 = vpack.c.b16 %v692, %v688
    %v801 = vpack.c.b16 %v693, %v689
    %v802 = vpack.c.b16 %v694, %v690
    %v803 = vpack.c.b16 %v699, %v695
    %v804 = vpack.c.b16 %v700, %v696
    %v805 = vpack.c.b16 %v701, %v697
    %v806 = vpack.c.b16 %v702, %v698
    %v807 = vpack.c.b16 %v707, %v703
    %v808 = vpack.c.b16 %v708, %v704
    %v809 = vpack.c.b16 %v709, %v705
    %v810 = vpack.c.b16 %v710, %v706
    %v811 = vpack.c.b16 %v715, %v711
    %v812 = vpack.c.b16 %v716, %v712
    %v813 = vpack.c.b16 %v717, %v713
    %v814 = vpack.c.b16 %v718, %v714
    %v815 = vpack.c.b16 %v723, %v719
    %v816 = vpack.c.b16 %v724, %v720
    %v817 = vpack.c.b16 %v725, %v721
    %v818 = vpack.c.b16 %v726, %v722
    %v819 = vpack.c.b16 %v731, %v727
    %v820 = vpack.c.b16 %v732, %v728
    %v821 = vpack.c.b16 %v733, %v729
    %v822 = vpack.c.b16 %v734, %v730
    %v823 = vpack.c.b16 %v739, %v735
    %v824 = vpack.c.b16 %v740, %v736
    %v825 = vpack.c.b16 %v741, %v737
    %v826 = vpack.c.b16 %v742, %v738
    %v827 = vpack.c.b16 %v747, %v743
    %v828 = vpack.c.b16 %v748, %v744
    %v829 = vpack.c.b16 %v749, %v745
    %v830 = vpack.c.b16 %v750, %v746
    %v831 = vpack.c.b16 %v755, %v751
    %v832 = vpack.c.b16 %v756, %v752
    %v833 = vpack.c.b16 %v757, %v753
    %v834 = vpack.c.b16 %v758, %v754
    %v835 = vpack.c.b16 %v763, %v759
    %v836 = vpack.c.b16 %v764, %v760
    %v837 = vpack.c.b16 %v765, %v761
    %v838 = vpack.c.b16 %v766, %v762
    %v839 = vpack.c.b16 %v771, %v767
    %v840 = vpack.c.b16 %v772, %v768
    %v841 = vpack.c.b16 %v773, %v769
    %v842 = vpack.c.b16 %v774, %v770
    %v843 = vpack.c.b16 %v779, %v775
    %v844 = vpack.c.b16 %v780, %v776
    %v845 = vpack.c.b16 %v781, %v777
    %v846 = vpack.c.b16 %v782, %v778
    %911 = vmatprep.subr.bf16.mxu0 %v784
    %912 = vmatpush1.bf16.msra.mxu0 %v783
    %913 = vmatprep.subr.bf16.mxu0 %v788
    %914 = vmatpush1.bf16.msra.mxu0 %v787
    %915 = vmatprep.subr.bf16.mxu0 %v792
    %916 = vmatpush1.bf16.msra.mxu0 %v791
    %917 = vmatprep.subr.bf16.mxu0 %v796
    %918 = vmatpush1.bf16.msra.mxu0 %v795
    %919 = vmatprep.subr.bf16.mxu0 %v800
    %920 = vmatpush1.bf16.msra.mxu0 %v799
    %921 = vmatprep.subr.bf16.mxu0 %v804
    %922 = vmatpush1.bf16.msra.mxu0 %v803
    %923 = vmatprep.subr.bf16.mxu0 %v808
    %924 = vmatpush1.bf16.msra.mxu0 %v807
    %925 = vmatprep.subr.bf16.mxu0 %v812
    %926 = vmatpush1.bf16.msra.mxu0 %v811
    %927 = vmatprep.subr.bf16.mxu0 %v816
    %928 = vmatpush1.bf16.msra.mxu0 %v815
    %929 = vmatprep.subr.bf16.mxu0 %v820
    %930 = vmatpush1.bf16.msra.mxu0 %v819
    %931 = vmatprep.subr.bf16.mxu0 %v824
    %932 = vmatpush1.bf16.msra.mxu0 %v823
    %933 = vmatprep.subr.bf16.mxu0 %v828
    %934 = vmatpush1.bf16.msra.mxu0 %v827
    %935 = vmatprep.subr.bf16.mxu0 %v832
    %936 = vmatpush1.bf16.msra.mxu0 %v831
    %937 = vmatprep.subr.bf16.mxu0 %v836
    %938 = vmatpush1.bf16.msra.mxu0 %v835
    %939 = vmatprep.subr.bf16.mxu0 %v840
    %940 = vmatpush1.bf16.msra.mxu0 %v839
    %941 = vmatprep.subr.bf16.mxu0 %v844
    %942 = vmatpush1.bf16.msra.mxu0 %v843
    %943 = vmatprep.mubr.bf16.mxu0 0
    %944 = vmatmul.mubr.bf16.gmra.mrb[0].mxu0 %v215
    %v945 = vpop.f32.mrb[0].mxu0
    %v946 = vadd.f32 %v574, %v945
    %v947 = vpop.f32.mrb[0].mxu0
    %v948 = vadd.f32 %v578, %v947
    %v949 = vpop.f32.mrb[0].mxu0
    %v950 = vpop.f32.mrb[0].mxu0
    %951 = vdwg.mxu0
    %952 = vmatprep.subr.bf16.mxu0 %v786
    %953 = vmatpush1.bf16.msra.mxu0 %v785
    %954 = vmatprep.subr.bf16.mxu0 %v790
    %955 = vmatpush1.bf16.msra.mxu0 %v789
    %956 = vmatprep.subr.bf16.mxu0 %v794
    %957 = vmatpush1.bf16.msra.mxu0 %v793
    %958 = vmatprep.subr.bf16.mxu0 %v798
    %959 = vmatpush1.bf16.msra.mxu0 %v797
    %960 = vmatprep.subr.bf16.mxu0 %v802
    %961 = vmatpush1.bf16.msra.mxu0 %v801
    %962 = vmatprep.subr.bf16.mxu0 %v806
    %963 = vmatpush1.bf16.msra.mxu0 %v805
    %964 = vmatprep.subr.bf16.mxu0 %v810
    %965 = vmatpush1.bf16.msra.mxu0 %v809
    %966 = vmatprep.subr.bf16.mxu0 %v814
    %967 = vmatpush1.bf16.msra.mxu0 %v813
    %968 = vmatprep.subr.bf16.mxu0 %v818
    %969 = vmatpush1.bf16.msra.mxu0 %v817
    %970 = vmatprep.subr.bf16.mxu0 %v822
    %971 = vmatpush1.bf16.msra.mxu0 %v821
    %972 = vmatprep.subr.bf16.mxu0 %v826
    %973 = vmatpush1.bf16.msra.mxu0 %v825
    %974 = vmatprep.subr.bf16.mxu0 %v830
    %975 = vmatpush1.bf16.msra.mxu0 %v829
    %976 = vmatprep.subr.bf16.mxu0 %v834
    %977 = vmatpush1.bf16.msra.mxu0 %v833
    %978 = vmatprep.subr.bf16.mxu0 %v838
    %979 = vmatpush1.bf16.msra.mxu0 %v837
    %980 = vmatprep.subr.bf16.mxu0 %v842
    %981 = vmatpush1.bf16.msra.mxu0 %v841
    %982 = vmatprep.subr.bf16.mxu0 %v846
    %983 = vmatpush1.bf16.msra.mxu0 %v845
    %984 = vmatprep.mubr.bf16.mxu0 0
    %985 = vmatmul.mubr.bf16.gmra.mrb[0].mxu0 %v215
    %v986 = vpop.f32.mrb[0].mxu0
    %v987 = vadd.f32 %v582, %v986
    %v988 = vpop.f32.mrb[0].mxu0
    %v989 = vadd.f32 %v586, %v988
    %v990 = vpop.f32.mrb[0].mxu0
    %v991 = vpop.f32.mrb[0].mxu0
    %992 = vdwg.mxu0
    %v993 = vxor.u32 %v502, 2147483648
    %v994 = vxor.u32 %v503, 2147483648
    %v995 = vxor.u32 %v504, 2147483648
    %v996 = vmul.f32 %v993, 1.442695
    %v997 = vpow.pop %v996
    %v998 = vmul.f32 %v994, 1.442695
    %v999 = vpow.pop %v998
    %v1000 = vmul.f32 %v995, 1.442695
    %v1001 = vpow.pop %v1000
    %v1002 = vadd.f32 %v997, 1.0
    %v1003 = vadd.f32 %v999, 1.0
    %v1004 = vadd.f32 %v1001, 1.0
    %v1005 = vrcp.pop %v1002
    %v1006 = vmul.f32 1.0, %v1005
    %v1007 = vrcp.pop %v1003
    %v1008 = vmul.f32 1.0, %v1007
    %v1009 = vrcp.pop %v1004
    %v1010 = vmul.f32 1.0, %v1009
    %v1011 = vtanh.pop %v505
    %v1013 = vrot.slane %v212, 6
    %v1015 = vmul.f32 %v1008, %v1013
    %v1016 = vmul.f32 %v1006, %v1011
    %v1017 = vadd.f32 %v1015, %v1016
    %v1018 = vtanh.pop %v1017
    %v1019 = vmul.f32 %v1010, %v1018
    %v1020 = vxor.u32 %v946, 2147483648
    %v1021 = vxor.u32 %v948, 2147483648
    %v1022 = vxor.u32 %v987, 2147483648
    %v1023 = vmul.f32 %v1020, 1.442695
    %v1024 = vpow.pop %v1023
    %v1025 = vmul.f32 %v1021, 1.442695
    %v1026 = vpow.pop %v1025
    %v1027 = vmul.f32 %v1022, 1.442695
    %v1028 = vpow.pop %v1027
    %v1029 = vadd.f32 %v1024, 1.0
    %v1030 = vadd.f32 %v1026, 1.0
    %v1031 = vadd.f32 %v1028, 1.0
    %v1032 = vrcp.pop %v1029
    %v1033 = vmul.f32 1.0, %v1032
    %v1034 = vrcp.pop %v1030
    %v1035 = vmul.f32 1.0, %v1034
    %v1036 = vrcp.pop %v1031
    %v1037 = vmul.f32 1.0, %v1036
    %v1038 = vtanh.pop %v989
    %v1039 = vmul.f32 %v1035, 0.0
    %v1040 = vmul.f32 %v1033, %v1038
    %v1041 = vadd.f32 %v1039, %v1040
    %v1042 = vtanh.pop %v1041
    %v1043 = vmul.f32 %v1037, %v1042
    %v1044 = vpack.c.bf16 %v1019, %v1019
    %v1046 = vrot.slane %v1044, 1
    %1048 = vmatprep.subr.bf16.mxu0 %v345
    %1049 = vmatpush1.bf16.msra.mxu0 %v344
    %1050 = vmatprep.subr.bf16.mxu0 %v349
    %1051 = vmatpush1.bf16.msra.mxu0 %v348
    %1052 = vmatprep.subr.bf16.mxu0 %v353
    %1053 = vmatpush1.bf16.msra.mxu0 %v352
    %1054 = vmatprep.subr.bf16.mxu0 %v357
    %1055 = vmatpush1.bf16.msra.mxu0 %v356
    %1056 = vmatprep.subr.bf16.mxu0 %v361
    %1057 = vmatpush1.bf16.msra.mxu0 %v360
    %1058 = vmatprep.subr.bf16.mxu0 %v365
    %1059 = vmatpush1.bf16.msra.mxu0 %v364
    %1060 = vmatprep.subr.bf16.mxu0 %v369
    %1061 = vmatpush1.bf16.msra.mxu0 %v368
    %1062 = vmatprep.subr.bf16.mxu0 %v373
    %1063 = vmatpush1.bf16.msra.mxu0 %v372
    %1064 = vmatprep.subr.bf16.mxu0 0
    %1065 = vmatpush1.bf16.msra.mxu0 0
    %1066 = vmatprep.subr.bf16.mxu0 0
    %1067 = vmatpush1.bf16.msra.mxu0 0
    %1068 = vmatprep.subr.bf16.mxu0 0
    %1069 = vmatpush1.bf16.msra.mxu0 0
    %1070 = vmatprep.subr.bf16.mxu0 0
    %1071 = vmatpush1.bf16.msra.mxu0 0
    %1072 = vmatprep.subr.bf16.mxu0 0
    %1073 = vmatpush1.bf16.msra.mxu0 0
    %1074 = vmatprep.subr.bf16.mxu0 0
    %1075 = vmatpush1.bf16.msra.mxu0 0
    %1076 = vmatprep.subr.bf16.mxu0 0
    %1077 = vmatpush1.bf16.msra.mxu0 0
    %1078 = vmatprep.subr.bf16.mxu0 0
    %1079 = vmatpush1.bf16.msra.mxu0 0
    %1080 = vmatprep.mubr.bf16.mxu0 0
    %1081 = vmatmul.mubr.bf16.gmra.mrb[0].mxu0 %v1046
    %v1082 = vpop.f32.mrb[0].mxu0
    %v1083 = vadd.f32 0.0, %v1082
    %v1084 = vpop.f32.mrb[0].mxu0
    %v1085 = vadd.f32 0.0, %v1084
    %v1086 = vpop.f32.mrb[0].mxu0
    %v1087 = vpop.f32.mrb[0].mxu0
    %1088 = vdwg.mxu0
    %1089 = vmatprep.subr.bf16.mxu0 %v347
    %1090 = vmatpush1.bf16.msra.mxu0 %v346
    %1091 = vmatprep.subr.bf16.mxu0 %v351
    %1092 = vmatpush1.bf16.msra.mxu0 %v350
    %1093 = vmatprep.subr.bf16.mxu0 %v355
    %1094 = vmatpush1.bf16.msra.mxu0 %v354
    %1095 = vmatprep.subr.bf16.mxu0 %v359
    %1096 = vmatpush1.bf16.msra.mxu0 %v358
    %1097 = vmatprep.subr.bf16.mxu0 %v363
    %1098 = vmatpush1.bf16.msra.mxu0 %v362
    %1099 = vmatprep.subr.bf16.mxu0 %v367
    %1100 = vmatpush1.bf16.msra.mxu0 %v366
    %1101 = vmatprep.subr.bf16.mxu0 %v371
    %1102 = vmatpush1.bf16.msra.mxu0 %v370
    %1103 = vmatprep.subr.bf16.mxu0 %v375
    %1104 = vmatpush1.bf16.msra.mxu0 %v374
    %1105 = vmatprep.subr.bf16.mxu0 0
    %1106 = vmatpush1.bf16.msra.mxu0 0
    %1107 = vmatprep.subr.bf16.mxu0 0
    %1108 = vmatpush1.bf16.msra.mxu0 0
    %1109 = vmatprep.subr.bf16.mxu0 0
    %1110 = vmatpush1.bf16.msra.mxu0 0
    %1111 = vmatprep.subr.bf16.mxu0 0
    %1112 = vmatpush1.bf16.msra.mxu0 0
    %1113 = vmatprep.subr.bf16.mxu0 0
    %1114 = vmatpush1.bf16.msra.mxu0 0
    %1115 = vmatprep.subr.bf16.mxu0 0
    %1116 = vmatpush1.bf16.msra.mxu0 0
    %1117 = vmatprep.subr.bf16.mxu0 0
    %1118 = vmatpush1.bf16.msra.mxu0 0
    %1119 = vmatprep.subr.bf16.mxu0 0
    %1120 = vmatpush1.bf16.msra.mxu0 0
    %1121 = vmatprep.mubr.bf16.mxu0 0
    %1122 = vmatmul.mubr.bf16.gmra.mrb[0].mxu0 %v1046
    %v1123 = vpop.f32.mrb[0].mxu0
    %v1124 = vadd.f32 0.0, %v1123
    %v1125 = vpop.f32.mrb[0].mxu0
    %v1126 = vadd.f32 0.0, %v1125
    %v1127 = vpop.f32.mrb[0].mxu0
    %v1128 = vpop.f32.mrb[0].mxu0
    %1129 = vdwg.mxu0
    %v1134 = vrot.slane %v1083, 4
    %v1135 = vrot.slane %v1085, 4
    %v1136 = vrot.slane %v1124, 4
    %v1137 = vrot.slane %v1126, 4
    %v1142 = vadd.f32 %v140, %v1134
    %v1143 = vadd.f32 %v142, %v1135
    %v1144 = vadd.f32 %v183, %v1136
    %v1145 = vadd.f32 %v185, %v1137
    %v1146 = vpack.c.bf16 %v1043, %v1043
    %v1148 = vrot.slane %v1146, 7
    %v1149 = vrot.slane %v1148, 1
    %1151 = vmatprep.subr.bf16.mxu0 %v784
    %1152 = vmatpush1.bf16.msra.mxu0 %v783
    %1153 = vmatprep.subr.bf16.mxu0 %v788
    %1154 = vmatpush1.bf16.msra.mxu0 %v787
    %1155 = vmatprep.subr.bf16.mxu0 %v792
    %1156 = vmatpush1.bf16.msra.mxu0 %v791
    %1157 = vmatprep.subr.bf16.mxu0 %v796
    %1158 = vmatpush1.bf16.msra.mxu0 %v795
    %1159 = vmatprep.subr.bf16.mxu0 %v800
    %1160 = vmatpush1.bf16.msra.mxu0 %v799
    %1161 = vmatprep.subr.bf16.mxu0 %v804
    %1162 = vmatpush1.bf16.msra.mxu0 %v803
    %1163 = vmatprep.subr.bf16.mxu0 %v808
    %1164 = vmatpush1.bf16.msra.mxu0 %v807
    %1165 = vmatprep.subr.bf16.mxu0 %v812
    %1166 = vmatpush1.bf16.msra.mxu0 %v811
    %1167 = vmatprep.subr.bf16.mxu0 %v816
    %1168 = vmatpush1.bf16.msra.mxu0 %v815
    %1169 = vmatprep.subr.bf16.mxu0 %v820
    %1170 = vmatpush1.bf16.msra.mxu0 %v819
    %1171 = vmatprep.subr.bf16.mxu0 %v824
    %1172 = vmatpush1.bf16.msra.mxu0 %v823
    %1173 = vmatprep.subr.bf16.mxu0 %v828
    %1174 = vmatpush1.bf16.msra.mxu0 %v827
    %1175 = vmatprep.subr.bf16.mxu0 %v832
    %1176 = vmatpush1.bf16.msra.mxu0 %v831
    %1177 = vmatprep.subr.bf16.mxu0 %v836
    %1178 = vmatpush1.bf16.msra.mxu0 %v835
    %1179 = vmatprep.subr.bf16.mxu0 %v840
    %1180 = vmatpush1.bf16.msra.mxu0 %v839
    %1181 = vmatprep.subr.bf16.mxu0 %v844
    %1182 = vmatpush1.bf16.msra.mxu0 %v843
    %1183 = vmatprep.mubr.bf16.mxu0 %v1149
    %1184 = vmatmul.mubr.bf16.gmra.mrb[0].mxu0 %v1046
    %v1185 = vpop.f32.mrb[0].mxu0
    %v1186 = vadd.f32 %v574, %v1185
    %v1187 = vpop.f32.mrb[0].mxu0
    %v1188 = vadd.f32 %v578, %v1187
    %v1189 = vpop.f32.mrb[0].mxu0
    %v1190 = vpop.f32.mrb[0].mxu0
    %1191 = vdwg.mxu0
    %1192 = vmatprep.subr.bf16.mxu0 %v786
    %1193 = vmatpush1.bf16.msra.mxu0 %v785
    %1194 = vmatprep.subr.bf16.mxu0 %v790
    %1195 = vmatpush1.bf16.msra.mxu0 %v789
    %1196 = vmatprep.subr.bf16.mxu0 %v794
    %1197 = vmatpush1.bf16.msra.mxu0 %v793
    %1198 = vmatprep.subr.bf16.mxu0 %v798
    %1199 = vmatpush1.bf16.msra.mxu0 %v797
    %1200 = vmatprep.subr.bf16.mxu0 %v802
    %1201 = vmatpush1.bf16.msra.mxu0 %v801
    %1202 = vmatprep.subr.bf16.mxu0 %v806
    %1203 = vmatpush1.bf16.msra.mxu0 %v805
    %1204 = vmatprep.subr.bf16.mxu0 %v810
    %1205 = vmatpush1.bf16.msra.mxu0 %v809
    %1206 = vmatprep.subr.bf16.mxu0 %v814
    %1207 = vmatpush1.bf16.msra.mxu0 %v813
    %1208 = vmatprep.subr.bf16.mxu0 %v818
    %1209 = vmatpush1.bf16.msra.mxu0 %v817
    %1210 = vmatprep.subr.bf16.mxu0 %v822
    %1211 = vmatpush1.bf16.msra.mxu0 %v821
    %1212 = vmatprep.subr.bf16.mxu0 %v826
    %1213 = vmatpush1.bf16.msra.mxu0 %v825
    %1214 = vmatprep.subr.bf16.mxu0 %v830
    %1215 = vmatpush1.bf16.msra.mxu0 %v829
    %1216 = vmatprep.subr.bf16.mxu0 %v834
    %1217 = vmatpush1.bf16.msra.mxu0 %v833
    %1218 = vmatprep.subr.bf16.mxu0 %v838
    %1219 = vmatpush1.bf16.msra.mxu0 %v837
    %1220 = vmatprep.subr.bf16.mxu0 %v842
    %1221 = vmatpush1.bf16.msra.mxu0 %v841
    %1222 = vmatprep.subr.bf16.mxu0 %v846
    %1223 = vmatpush1.bf16.msra.mxu0 %v845
    %1224 = vmatprep.mubr.bf16.mxu0 %v1149
    %1225 = vmatmul.mubr.bf16.gmra.mrb[0].mxu0 %v1046
    %v1226 = vpop.f32.mrb[0].mxu0
    %v1227 = vadd.f32 %v582, %v1226
    %v1228 = vpop.f32.mrb[0].mxu0
    %v1229 = vadd.f32 %v586, %v1228
    %v1230 = vpop.f32.mrb[0].mxu0
    %v1231 = vpop.f32.mrb[0].mxu0
    %1232 = vdwg.mxu0
    %v1233 = vxor.u32 %v1142, 2147483648
    %v1234 = vxor.u32 %v1143, 2147483648
    %v1235 = vxor.u32 %v1144, 2147483648
    %v1236 = vmul.f32 %v1233, 1.442695
    %v1237 = vpow.pop %v1236
    %v1238 = vmul.f32 %v1234, 1.442695
    %v1239 = vpow.pop %v1238
    %v1240 = vmul.f32 %v1235, 1.442695
    %v1241 = vpow.pop %v1240
    %v1242 = vadd.f32 %v1237, 1.0
    %v1243 = vadd.f32 %v1239, 1.0
    %v1244 = vadd.f32 %v1241, 1.0
    %v1245 = vrcp.pop %v1242
    %v1246 = vmul.f32 1.0, %v1245
    %v1247 = vrcp.pop %v1243
    %v1248 = vmul.f32 1.0, %v1247
    %v1249 = vrcp.pop %v1244
    %v1250 = vmul.f32 1.0, %v1249
    %v1251 = vtanh.pop %v1145
    %v1253 = vrot.slane %v1017, 6
    %v1255 = vmul.f32 %v1248, %v1253
    %v1256 = vmul.f32 %v1246, %v1251
    %v1257 = vadd.f32 %v1255, %v1256
    %v1258 = vtanh.pop %v1257
    %v1259 = vmul.f32 %v1250, %v1258
    %v1260 = vxor.u32 %v1186, 2147483648
    %v1261 = vxor.u32 %v1188, 2147483648
    %v1262 = vxor.u32 %v1227, 2147483648
    %v1263 = vmul.f32 %v1260, 1.442695
    %v1264 = vpow.pop %v1263
    %v1265 = vmul.f32 %v1261, 1.442695
    %v1266 = vpow.pop %v1265
    %v1267 = vmul.f32 %v1262, 1.442695
    %v1268 = vpow.pop %v1267
    %v1269 = vadd.f32 %v1264, 1.0
    %v1270 = vadd.f32 %v1266, 1.0
    %v1271 = vadd.f32 %v1268, 1.0
    %v1272 = vrcp.pop %v1269
    %v1273 = vmul.f32 1.0, %v1272
    %v1274 = vrcp.pop %v1270
    %v1275 = vmul.f32 1.0, %v1274
    %v1276 = vrcp.pop %v1271
    %v1277 = vmul.f32 1.0, %v1276
    %v1278 = vtanh.pop %v1229
    %v1279 = vmul.f32 %v1275, %v1041
    %v1280 = vmul.f32 %v1273, %v1278
    %v1281 = vadd.f32 %v1279, %v1280
    %v1282 = vtanh.pop %v1281
    %v1283 = vmul.f32 %v1277, %v1282
    %v1284 = vpack.c.bf16 %v1259, %v1259
    %v1286 = vrot.slane %v1284, 2
    %1288 = vmatprep.subr.bf16.mxu0 %v345
    %1289 = vmatpush1.bf16.msra.mxu0 %v344
    %1290 = vmatprep.subr.bf16.mxu0 %v349
    %1291 = vmatpush1.bf16.msra.mxu0 %v348
    %1292 = vmatprep.subr.bf16.mxu0 %v353
    %1293 = vmatpush1.bf16.msra.mxu0 %v352
    %1294 = vmatprep.subr.bf16.mxu0 %v357
    %1295 = vmatpush1.bf16.msra.mxu0 %v356
    %1296 = vmatprep.subr.bf16.mxu0 %v361
    %1297 = vmatpush1.bf16.msra.mxu0 %v360
    %1298 = vmatprep.subr.bf16.mxu0 %v365
    %1299 = vmatpush1.bf16.msra.mxu0 %v364
    %1300 = vmatprep.subr.bf16.mxu0 %v369
    %1301 = vmatpush1.bf16.msra.mxu0 %v368
    %1302 = vmatprep.subr.bf16.mxu0 %v373
    %1303 = vmatpush1.bf16.msra.mxu0 %v372
    %1304 = vmatprep.subr.bf16.mxu0 0
    %1305 = vmatpush1.bf16.msra.mxu0 0
    %1306 = vmatprep.subr.bf16.mxu0 0
    %1307 = vmatpush1.bf16.msra.mxu0 0
    %1308 = vmatprep.subr.bf16.mxu0 0
    %1309 = vmatpush1.bf16.msra.mxu0 0
    %1310 = vmatprep.subr.bf16.mxu0 0
    %1311 = vmatpush1.bf16.msra.mxu0 0
    %1312 = vmatprep.subr.bf16.mxu0 0
    %1313 = vmatpush1.bf16.msra.mxu0 0
    %1314 = vmatprep.subr.bf16.mxu0 0
    %1315 = vmatpush1.bf16.msra.mxu0 0
    %1316 = vmatprep.subr.bf16.mxu0 0
    %1317 = vmatpush1.bf16.msra.mxu0 0
    %1318 = vmatprep.subr.bf16.mxu0 0
    %1319 = vmatpush1.bf16.msra.mxu0 0
    %1320 = vmatprep.mubr.bf16.mxu0 0
    %1321 = vmatmul.mubr.bf16.gmra.mrb[0].mxu0 %v1286
    %v1322 = vpop.f32.mrb[0].mxu0
    %v1323 = vadd.f32 0.0, %v1322
    %v1324 = vpop.f32.mrb[0].mxu0
    %v1325 = vadd.f32 0.0, %v1324
    %v1326 = vpop.f32.mrb[0].mxu0
    %v1327 = vpop.f32.mrb[0].mxu0
    %1328 = vdwg.mxu0
    %1329 = vmatprep.subr.bf16.mxu0 %v347
    %1330 = vmatpush1.bf16.msra.mxu0 %v346
    %1331 = vmatprep.subr.bf16.mxu0 %v351
    %1332 = vmatpush1.bf16.msra.mxu0 %v350
    %1333 = vmatprep.subr.bf16.mxu0 %v355
    %1334 = vmatpush1.bf16.msra.mxu0 %v354
    %1335 = vmatprep.subr.bf16.mxu0 %v359
    %1336 = vmatpush1.bf16.msra.mxu0 %v358
    %1337 = vmatprep.subr.bf16.mxu0 %v363
    %1338 = vmatpush1.bf16.msra.mxu0 %v362
    %1339 = vmatprep.subr.bf16.mxu0 %v367
    %1340 = vmatpush1.bf16.msra.mxu0 %v366
    %1341 = vmatprep.subr.bf16.mxu0 %v371
    %1342 = vmatpush1.bf16.msra.mxu0 %v370
    %1343 = vmatprep.subr.bf16.mxu0 %v375
    %1344 = vmatpush1.bf16.msra.mxu0 %v374
    %1345 = vmatprep.subr.bf16.mxu0 0
    %1346 = vmatpush1.bf16.msra.mxu0 0
    %1347 = vmatprep.subr.bf16.mxu0 0
    %1348 = vmatpush1.bf16.msra.mxu0 0
    %1349 = vmatprep.subr.bf16.mxu0 0
    %1350 = vmatpush1.bf16.msra.mxu0 0
    %1351 = vmatprep.subr.bf16.mxu0 0
    %1352 = vmatpush1.bf16.msra.mxu0 0
    %1353 = vmatprep.subr.bf16.mxu0 0
    %1354 = vmatpush1.bf16.msra.mxu0 0
    %1355 = vmatprep.subr.bf16.mxu0 0
    %1356 = vmatpush1.bf16.msra.mxu0 0
    %1357 = vmatprep.subr.bf16.mxu0 0
    %1358 = vmatpush1.bf16.msra.mxu0 0
    %1359 = vmatprep.subr.bf16.mxu0 0
    %1360 = vmatpush1.bf16.msra.mxu0 0
    %1361 = vmatprep.mubr.bf16.mxu0 0
    %1362 = vmatmul.mubr.bf16.gmra.mrb[0].mxu0 %v1286
    %v1363 = vpop.f32.mrb[0].mxu0
    %v1364 = vadd.f32 0.0, %v1363
    %v1365 = vpop.f32.mrb[0].mxu0
    %v1366 = vadd.f32 0.0, %v1365
    %v1367 = vpop.f32.mrb[0].mxu0
    %v1368 = vpop.f32.mrb[0].mxu0
    %1369 = vdwg.mxu0
    %v1374 = vrot.slane %v1323, 2
    %v1375 = vrot.slane %v1325, 2
    %v1376 = vrot.slane %v1364, 2
    %v1377 = vrot.slane %v1366, 2
    %v1382 = vadd.f32 %v140, %v1374
    %v1383 = vadd.f32 %v142, %v1375
    %v1384 = vadd.f32 %v183, %v1376
    %v1385 = vadd.f32 %v185, %v1377
    %v1386 = vpack.c.bf16 %v1283, %v1283
    %v1388 = vrot.slane %v1386, 6
    %v1389 = vrot.slane %v1388, 2
    %1391 = vmatprep.subr.bf16.mxu0 %v784
    %1392 = vmatpush1.bf16.msra.mxu0 %v783
    %1393 = vmatprep.subr.bf16.mxu0 %v788
    %1394 = vmatpush1.bf16.msra.mxu0 %v787
    %1395 = vmatprep.subr.bf16.mxu0 %v792
    %1396 = vmatpush1.bf16.msra.mxu0 %v791
    %1397 = vmatprep.subr.bf16.mxu0 %v796
    %1398 = vmatpush1.bf16.msra.mxu0 %v795
    %1399 = vmatprep.subr.bf16.mxu0 %v800
    %1400 = vmatpush1.bf16.msra.mxu0 %v799
    %1401 = vmatprep.subr.bf16.mxu0 %v804
    %1402 = vmatpush1.bf16.msra.mxu0 %v803
    %1403 = vmatprep.subr.bf16.mxu0 %v808
    %1404 = vmatpush1.bf16.msra.mxu0 %v807
    %1405 = vmatprep.subr.bf16.mxu0 %v812
    %1406 = vmatpush1.bf16.msra.mxu0 %v811
    %1407 = vmatprep.subr.bf16.mxu0 %v816
    %1408 = vmatpush1.bf16.msra.mxu0 %v815
    %1409 = vmatprep.subr.bf16.mxu0 %v820
    %1410 = vmatpush1.bf16.msra.mxu0 %v819
    %1411 = vmatprep.subr.bf16.mxu0 %v824
    %1412 = vmatpush1.bf16.msra.mxu0 %v823
    %1413 = vmatprep.subr.bf16.mxu0 %v828
    %1414 = vmatpush1.bf16.msra.mxu0 %v827
    %1415 = vmatprep.subr.bf16.mxu0 %v832
    %1416 = vmatpush1.bf16.msra.mxu0 %v831
    %1417 = vmatprep.subr.bf16.mxu0 %v836
    %1418 = vmatpush1.bf16.msra.mxu0 %v835
    %1419 = vmatprep.subr.bf16.mxu0 %v840
    %1420 = vmatpush1.bf16.msra.mxu0 %v839
    %1421 = vmatprep.subr.bf16.mxu0 %v844
    %1422 = vmatpush1.bf16.msra.mxu0 %v843
    %1423 = vmatprep.mubr.bf16.mxu0 %v1389
    %1424 = vmatmul.mubr.bf16.gmra.mrb[0].mxu0 %v1286
    %v1425 = vpop.f32.mrb[0].mxu0
    %v1426 = vadd.f32 %v574, %v1425
    %v1427 = vpop.f32.mrb[0].mxu0
    %v1428 = vadd.f32 %v578, %v1427
    %v1429 = vpop.f32.mrb[0].mxu0
    %v1430 = vpop.f32.mrb[0].mxu0
    %1431 = vdwg.mxu0
    %1432 = vmatprep.subr.bf16.mxu0 %v786
    %1433 = vmatpush1.bf16.msra.mxu0 %v785
    %1434 = vmatprep.subr.bf16.mxu0 %v790
    %1435 = vmatpush1.bf16.msra.mxu0 %v789
    %1436 = vmatprep.subr.bf16.mxu0 %v794
    %1437 = vmatpush1.bf16.msra.mxu0 %v793
    %1438 = vmatprep.subr.bf16.mxu0 %v798
    %1439 = vmatpush1.bf16.msra.mxu0 %v797
    %1440 = vmatprep.subr.bf16.mxu0 %v802
    %1441 = vmatpush1.bf16.msra.mxu0 %v801
    %1442 = vmatprep.subr.bf16.mxu0 %v806
    %1443 = vmatpush1.bf16.msra.mxu0 %v805
    %1444 = vmatprep.subr.bf16.mxu0 %v810
    %1445 = vmatpush1.bf16.msra.mxu0 %v809
    %1446 = vmatprep.subr.bf16.mxu0 %v814
    %1447 = vmatpush1.bf16.msra.mxu0 %v813
    %1448 = vmatprep.subr.bf16.mxu0 %v818
    %1449 = vmatpush1.bf16.msra.mxu0 %v817
    %1450 = vmatprep.subr.bf16.mxu0 %v822
    %1451 = vmatpush1.bf16.msra.mxu0 %v821
    %1452 = vmatprep.subr.bf16.mxu0 %v826
    %1453 = vmatpush1.bf16.msra.mxu0 %v825
    %1454 = vmatprep.subr.bf16.mxu0 %v830
    %1455 = vmatpush1.bf16.msra.mxu0 %v829
    %1456 = vmatprep.subr.bf16.mxu0 %v834
    %1457 = vmatpush1.bf16.msra.mxu0 %v833
    %1458 = vmatprep.subr.bf16.mxu0 %v838
    %1459 = vmatpush1.bf16.msra.mxu0 %v837
    %1460 = vmatprep.subr.bf16.mxu0 %v842
    %1461 = vmatpush1.bf16.msra.mxu0 %v841
    %1462 = vmatprep.subr.bf16.mxu0 %v846
    %1463 = vmatpush1.bf16.msra.mxu0 %v845
    %1464 = vmatprep.mubr.bf16.mxu0 %v1389
    %1465 = vmatmul.mubr.bf16.gmra.mrb[0].mxu0 %v1286
    %v1466 = vpop.f32.mrb[0].mxu0
    %v1467 = vadd.f32 %v582, %v1466
    %v1468 = vpop.f32.mrb[0].mxu0
    %v1469 = vadd.f32 %v586, %v1468
    %v1470 = vpop.f32.mrb[0].mxu0
    %v1471 = vpop.f32.mrb[0].mxu0
    %1472 = vdwg.mxu0
    %v1473 = vxor.u32 %v1382, 2147483648
    %v1474 = vxor.u32 %v1383, 2147483648
    %v1475 = vxor.u32 %v1384, 2147483648
    %v1476 = vmul.f32 %v1473, 1.442695
    %v1477 = vpow.pop %v1476
    %v1478 = vmul.f32 %v1474, 1.442695
    %v1479 = vpow.pop %v1478
    %v1480 = vmul.f32 %v1475, 1.442695
    %v1481 = vpow.pop %v1480
    %v1482 = vadd.f32 %v1477, 1.0
    %v1483 = vadd.f32 %v1479, 1.0
    %v1484 = vadd.f32 %v1481, 1.0
    %v1485 = vrcp.pop %v1482
    %v1486 = vmul.f32 1.0, %v1485
    %v1487 = vrcp.pop %v1483
    %v1488 = vmul.f32 1.0, %v1487
    %v1489 = vrcp.pop %v1484
    %v1490 = vmul.f32 1.0, %v1489
    %v1491 = vtanh.pop %v1385
    %v1493 = vrot.slane %v1257, 6
    %v1495 = vmul.f32 %v1488, %v1493
    %v1496 = vmul.f32 %v1486, %v1491
    %v1497 = vadd.f32 %v1495, %v1496
    %v1498 = vtanh.pop %v1497
    %v1499 = vmul.f32 %v1490, %v1498
    %v1500 = vxor.u32 %v1426, 2147483648
    %v1501 = vxor.u32 %v1428, 2147483648
    %v1502 = vxor.u32 %v1467, 2147483648
    %v1503 = vmul.f32 %v1500, 1.442695
    %v1504 = vpow.pop %v1503
    %v1505 = vmul.f32 %v1501, 1.442695
    %v1506 = vpow.pop %v1505
    %v1507 = vmul.f32 %v1502, 1.442695
    %v1508 = vpow.pop %v1507
    %v1509 = vadd.f32 %v1504, 1.0
    %v1510 = vadd.f32 %v1506, 1.0
    %v1511 = vadd.f32 %v1508, 1.0
    %v1512 = vrcp.pop %v1509
    %v1513 = vmul.f32 1.0, %v1512
    %v1514 = vrcp.pop %v1510
    %v1515 = vmul.f32 1.0, %v1514
    %v1516 = vrcp.pop %v1511
    %v1517 = vmul.f32 1.0, %v1516
    %v1518 = vtanh.pop %v1469
    %v1519 = vmul.f32 %v1515, %v1281
    %v1520 = vmul.f32 %v1513, %v1518
    %v1521 = vadd.f32 %v1519, %v1520
    %v1522 = vtanh.pop %v1521
    %v1523 = vmul.f32 %v1517, %v1522
    %v1524 = vpack.c.bf16 %v1499, %v1499
    %v1526 = vrot.slane %v1524, 3
    %1528 = vmatprep.subr.bf16.mxu0 %v345
    %1529 = vmatpush1.bf16.msra.mxu0 %v344
    %1530 = vmatprep.subr.bf16.mxu0 %v349
    %1531 = vmatpush1.bf16.msra.mxu0 %v348
    %1532 = vmatprep.subr.bf16.mxu0 %v353
    %1533 = vmatpush1.bf16.msra.mxu0 %v352
    %1534 = vmatprep.subr.bf16.mxu0 %v357
    %1535 = vmatpush1.bf16.msra.mxu0 %v356
    %1536 = vmatprep.subr.bf16.mxu0 %v361
    %1537 = vmatpush1.bf16.msra.mxu0 %v360
    %1538 = vmatprep.subr.bf16.mxu0 %v365
    %1539 = vmatpush1.bf16.msra.mxu0 %v364
    %1540 = vmatprep.subr.bf16.mxu0 %v369
    %1541 = vmatpush1.bf16.msra.mxu0 %v368
    %1542 = vmatprep.subr.bf16.mxu0 %v373
    %1543 = vmatpush1.bf16.msra.mxu0 %v372
    %1544 = vmatprep.subr.bf16.mxu0 0
    %1545 = vmatpush1.bf16.msra.mxu0 0
    %1546 = vmatprep.subr.bf16.mxu0 0
    %1547 = vmatpush1.bf16.msra.mxu0 0
    %1548 = vmatprep.subr.bf16.mxu0 0
    %1549 = vmatpush1.bf16.msra.mxu0 0
    %1550 = vmatprep.subr.bf16.mxu0 0
    %1551 = vmatpush1.bf16.msra.mxu0 0
    %1552 = vmatprep.subr.bf16.mxu0 0
    %1553 = vmatpush1.bf16.msra.mxu0 0
    %1554 = vmatprep.subr.bf16.mxu0 0
    %1555 = vmatpush1.bf16.msra.mxu0 0
    %1556 = vmatprep.subr.bf16.mxu0 0
    %1557 = vmatpush1.bf16.msra.mxu0 0
    %1558 = vmatprep.subr.bf16.mxu0 0
    %1559 = vmatpush1.bf16.msra.mxu0 0
    %1560 = vmatprep.mubr.bf16.mxu0 0
    %1561 = vmatmul.mubr.bf16.gmra.mrb[0].mxu0 %v1526
    %v1562 = vpop.f32.mrb[0].mxu0
    %v1563 = vadd.f32 0.0, %v1562
    %v1564 = vpop.f32.mrb[0].mxu0
    %v1565 = vadd.f32 0.0, %v1564
    %v1566 = vpop.f32.mrb[0].mxu0
    %v1567 = vpop.f32.mrb[0].mxu0
    %1568 = vdwg.mxu0
    %1569 = vmatprep.subr.bf16.mxu0 %v347
    %1570 = vmatpush1.bf16.msra.mxu0 %v346
    %1571 = vmatprep.subr.bf16.mxu0 %v351
    %1572 = vmatpush1.bf16.msra.mxu0 %v350
    %1573 = vmatprep.subr.bf16.mxu0 %v355
    %1574 = vmatpush1.bf16.msra.mxu0 %v354
    %1575 = vmatprep.subr.bf16.mxu0 %v359
    %1576 = vmatpush1.bf16.msra.mxu0 %v358
    %1577 = vmatprep.subr.bf16.mxu0 %v363
    %1578 = vmatpush1.bf16.msra.mxu0 %v362
    %1579 = vmatprep.subr.bf16.mxu0 %v367
    %1580 = vmatpush1.bf16.msra.mxu0 %v366
    %1581 = vmatprep.subr.bf16.mxu0 %v371
    %1582 = vmatpush1.bf16.msra.mxu0 %v370
    %1583 = vmatprep.subr.bf16.mxu0 %v375
    %1584 = vmatpush1.bf16.msra.mxu0 %v374
    %1585 = vmatprep.subr.bf16.mxu0 0
    %1586 = vmatpush1.bf16.msra.mxu0 0
    %1587 = vmatprep.subr.bf16.mxu0 0
    %1588 = vmatpush1.bf16.msra.mxu0 0
    %1589 = vmatprep.subr.bf16.mxu0 0
    %1590 = vmatpush1.bf16.msra.mxu0 0
    %1591 = vmatprep.subr.bf16.mxu0 0
    %1592 = vmatpush1.bf16.msra.mxu0 0
    %1593 = vmatprep.subr.bf16.mxu0 0
    %1594 = vmatpush1.bf16.msra.mxu0 0
    %1595 = vmatprep.subr.bf16.mxu0 0
    %1596 = vmatpush1.bf16.msra.mxu0 0
    %1597 = vmatprep.subr.bf16.mxu0 0
    %1598 = vmatpush1.bf16.msra.mxu0 0
    %1599 = vmatprep.subr.bf16.mxu0 0
    %1600 = vmatpush1.bf16.msra.mxu0 0
    %1601 = vmatprep.mubr.bf16.mxu0 0
    %1602 = vmatmul.mubr.bf16.gmra.mrb[0].mxu0 %v1526
    %v1603 = vpop.f32.mrb[0].mxu0
    %v1604 = vadd.f32 0.0, %v1603
    %v1605 = vpop.f32.mrb[0].mxu0
    %v1606 = vadd.f32 0.0, %v1605
    %v1607 = vpop.f32.mrb[0].mxu0
    %v1608 = vpop.f32.mrb[0].mxu0
    %1609 = vdwg.mxu0
    %v1610 = vadd.f32 %v144, %v1563
    %v1611 = vadd.f32 %v146, %v1565
    %v1612 = vadd.f32 %v187, %v1604
    %v1613 = vadd.f32 %v189, %v1606
    %v1614 = vpack.c.bf16 %v1523, %v1523
    %v1616 = vrot.slane %v1614, 5
    %v1617 = vrot.slane %v1616, 3
    %1619 = vmatprep.subr.bf16.mxu0 %v784
    %1620 = vmatpush1.bf16.msra.mxu0 %v783
    %1621 = vmatprep.subr.bf16.mxu0 %v788
    %1622 = vmatpush1.bf16.msra.mxu0 %v787
    %1623 = vmatprep.subr.bf16.mxu0 %v792
    %1624 = vmatpush1.bf16.msra.mxu0 %v791
    %1625 = vmatprep.subr.bf16.mxu0 %v796
    %1626 = vmatpush1.bf16.msra.mxu0 %v795
    %1627 = vmatprep.subr.bf16.mxu0 %v800
    %1628 = vmatpush1.bf16.msra.mxu0 %v799
    %1629 = vmatprep.subr.bf16.mxu0 %v804
    %1630 = vmatpush1.bf16.msra.mxu0 %v803
    %1631 = vmatprep.subr.bf16.mxu0 %v808
    %1632 = vmatpush1.bf16.msra.mxu0 %v807
    %1633 = vmatprep.subr.bf16.mxu0 %v812
    %1634 = vmatpush1.bf16.msra.mxu0 %v811
    %1635 = vmatprep.subr.bf16.mxu0 %v816
    %1636 = vmatpush1.bf16.msra.mxu0 %v815
    %1637 = vmatprep.subr.bf16.mxu0 %v820
    %1638 = vmatpush1.bf16.msra.mxu0 %v819
    %1639 = vmatprep.subr.bf16.mxu0 %v824
    %1640 = vmatpush1.bf16.msra.mxu0 %v823
    %1641 = vmatprep.subr.bf16.mxu0 %v828
    %1642 = vmatpush1.bf16.msra.mxu0 %v827
    %1643 = vmatprep.subr.bf16.mxu0 %v832
    %1644 = vmatpush1.bf16.msra.mxu0 %v831
    %1645 = vmatprep.subr.bf16.mxu0 %v836
    %1646 = vmatpush1.bf16.msra.mxu0 %v835
    %1647 = vmatprep.subr.bf16.mxu0 %v840
    %1648 = vmatpush1.bf16.msra.mxu0 %v839
    %1649 = vmatprep.subr.bf16.mxu0 %v844
    %1650 = vmatpush1.bf16.msra.mxu0 %v843
    %1651 = vmatprep.mubr.bf16.mxu0 %v1617
    %1652 = vmatmul.mubr.bf16.gmra.mrb[0].mxu0 %v1526
    %v1653 = vpop.f32.mrb[0].mxu0
    %v1654 = vadd.f32 %v574, %v1653
    %v1655 = vpop.f32.mrb[0].mxu0
    %v1656 = vadd.f32 %v578, %v1655
    %v1657 = vpop.f32.mrb[0].mxu0
    %v1658 = vpop.f32.mrb[0].mxu0
    %1659 = vdwg.mxu0
    %1660 = vmatprep.subr.bf16.mxu0 %v786
    %1661 = vmatpush1.bf16.msra.mxu0 %v785
    %1662 = vmatprep.subr.bf16.mxu0 %v790
    %1663 = vmatpush1.bf16.msra.mxu0 %v789
    %1664 = vmatprep.subr.bf16.mxu0 %v794
    %1665 = vmatpush1.bf16.msra.mxu0 %v793
    %1666 = vmatprep.subr.bf16.mxu0 %v798
    %1667 = vmatpush1.bf16.msra.mxu0 %v797
    %1668 = vmatprep.subr.bf16.mxu0 %v802
    %1669 = vmatpush1.bf16.msra.mxu0 %v801
    %1670 = vmatprep.subr.bf16.mxu0 %v806
    %1671 = vmatpush1.bf16.msra.mxu0 %v805
    %1672 = vmatprep.subr.bf16.mxu0 %v810
    %1673 = vmatpush1.bf16.msra.mxu0 %v809
    %1674 = vmatprep.subr.bf16.mxu0 %v814
    %1675 = vmatpush1.bf16.msra.mxu0 %v813
    %1676 = vmatprep.subr.bf16.mxu0 %v818
    %1677 = vmatpush1.bf16.msra.mxu0 %v817
    %1678 = vmatprep.subr.bf16.mxu0 %v822
    %1679 = vmatpush1.bf16.msra.mxu0 %v821
    %1680 = vmatprep.subr.bf16.mxu0 %v826
    %1681 = vmatpush1.bf16.msra.mxu0 %v825
    %1682 = vmatprep.subr.bf16.mxu0 %v830
    %1683 = vmatpush1.bf16.msra.mxu0 %v829
    %1684 = vmatprep.subr.bf16.mxu0 %v834
    %1685 = vmatpush1.bf16.msra.mxu0 %v833
    %1686 = vmatprep.subr.bf16.mxu0 %v838
    %1687 = vmatpush1.bf16.msra.mxu0 %v837
    %1688 = vmatprep.subr.bf16.mxu0 %v842
    %1689 = vmatpush1.bf16.msra.mxu0 %v841
    %1690 = vmatprep.subr.bf16.mxu0 %v846
    %1691 = vmatpush1.bf16.msra.mxu0 %v845
    %1692 = vmatprep.mubr.bf16.mxu0 %v1617
    %1693 = vmatmul.mubr.bf16.gmra.mrb[0].mxu0 %v1526
    %v1694 = vpop.f32.mrb[0].mxu0
    %v1695 = vadd.f32 %v582, %v1694
    %v1696 = vpop.f32.mrb[0].mxu0
    %v1697 = vadd.f32 %v586, %v1696
    %v1698 = vpop.f32.mrb[0].mxu0
    %v1699 = vpop.f32.mrb[0].mxu0
    %1700 = vdwg.mxu0
    %v1701 = vxor.u32 %v1610, 2147483648
    %v1702 = vxor.u32 %v1611, 2147483648
    %v1703 = vxor.u32 %v1612, 2147483648
    %v1704 = vmul.f32 %v1701, 1.442695
    %v1705 = vpow.pop %v1704
    %v1706 = vmul.f32 %v1702, 1.442695
    %v1707 = vpow.pop %v1706
    %v1708 = vmul.f32 %v1703, 1.442695
    %v1709 = vpow.pop %v1708
    %v1710 = vadd.f32 %v1705, 1.0
    %v1711 = vadd.f32 %v1707, 1.0
    %v1712 = vadd.f32 %v1709, 1.0
    %v1713 = vrcp.pop %v1710
    %v1714 = vmul.f32 1.0, %v1713
    %v1715 = vrcp.pop %v1711
    %v1716 = vmul.f32 1.0, %v1715
    %v1717 = vrcp.pop %v1712
    %v1718 = vmul.f32 1.0, %v1717
    %v1719 = vtanh.pop %v1613
    %v1721 = vrot.slane %v1497, 6
    %v1723 = vmul.f32 %v1716, %v1721
    %v1724 = vmul.f32 %v1714, %v1719
    %v1725 = vadd.f32 %v1723, %v1724
    %v1726 = vtanh.pop %v1725
    %v1727 = vmul.f32 %v1718, %v1726
    %v1728 = vxor.u32 %v1654, 2147483648
    %v1729 = vxor.u32 %v1656, 2147483648
    %v1730 = vxor.u32 %v1695, 2147483648
    %v1731 = vmul.f32 %v1728, 1.442695
    %v1732 = vpow.pop %v1731
    %v1733 = vmul.f32 %v1729, 1.442695
    %v1734 = vpow.pop %v1733
    %v1735 = vmul.f32 %v1730, 1.442695
    %v1736 = vpow.pop %v1735
    %v1737 = vadd.f32 %v1732, 1.0
    %v1738 = vadd.f32 %v1734, 1.0
    %v1739 = vadd.f32 %v1736, 1.0
    %v1740 = vrcp.pop %v1737
    %v1741 = vmul.f32 1.0, %v1740
    %v1742 = vrcp.pop %v1738
    %v1743 = vmul.f32 1.0, %v1742
    %v1744 = vrcp.pop %v1739
    %v1745 = vmul.f32 1.0, %v1744
    %v1746 = vtanh.pop %v1697
    %v1747 = vmul.f32 %v1743, %v1521
    %v1748 = vmul.f32 %v1741, %v1746
    %v1749 = vadd.f32 %v1747, %v1748
    %v1750 = vtanh.pop %v1749
    %v1751 = vmul.f32 %v1745, %v1750
    %v1752 = vpack.c.bf16 %v1727, %v1727
    %1753 = vmatprep.subr.bf16.mxu0 %v345
    %1754 = vmatpush1.bf16.msra.mxu0 %v344
    %1755 = vmatprep.subr.bf16.mxu0 %v349
    %1756 = vmatpush1.bf16.msra.mxu0 %v348
    %1757 = vmatprep.subr.bf16.mxu0 %v353
    %1758 = vmatpush1.bf16.msra.mxu0 %v352
    %1759 = vmatprep.subr.bf16.mxu0 %v357
    %1760 = vmatpush1.bf16.msra.mxu0 %v356
    %1761 = vmatprep.subr.bf16.mxu0 %v361
    %1762 = vmatpush1.bf16.msra.mxu0 %v360
    %1763 = vmatprep.subr.bf16.mxu0 %v365
    %1764 = vmatpush1.bf16.msra.mxu0 %v364
    %1765 = vmatprep.subr.bf16.mxu0 %v369
    %1766 = vmatpush1.bf16.msra.mxu0 %v368
    %1767 = vmatprep.subr.bf16.mxu0 %v373
    %1768 = vmatpush1.bf16.msra.mxu0 %v372
    %1769 = vmatprep.subr.bf16.mxu0 0
    %1770 = vmatpush1.bf16.msra.mxu0 0
    %1771 = vmatprep.subr.bf16.mxu0 0
    %1772 = vmatpush1.bf16.msra.mxu0 0
    %1773 = vmatprep.subr.bf16.mxu0 0
    %1774 = vmatpush1.bf16.msra.mxu0 0
    %1775 = vmatprep.subr.bf16.mxu0 0
    %1776 = vmatpush1.bf16.msra.mxu0 0
    %1777 = vmatprep.subr.bf16.mxu0 0
    %1778 = vmatpush1.bf16.msra.mxu0 0
    %1779 = vmatprep.subr.bf16.mxu0 0
    %1780 = vmatpush1.bf16.msra.mxu0 0
    %1781 = vmatprep.subr.bf16.mxu0 0
    %1782 = vmatpush1.bf16.msra.mxu0 0
    %1783 = vmatprep.subr.bf16.mxu0 0
    %1784 = vmatpush1.bf16.msra.mxu0 0
    %1785 = vmatprep.mubr.bf16.mxu0 0
    %1786 = vmatmul.mubr.bf16.gmra.mrb[0].mxu0 %v1752
    %v1787 = vpop.f32.mrb[0].mxu0
    %v1788 = vadd.f32 0.0, %v1787
    %v1789 = vpop.f32.mrb[0].mxu0
    %v1790 = vadd.f32 0.0, %v1789
    %v1791 = vpop.f32.mrb[0].mxu0
    %v1792 = vpop.f32.mrb[0].mxu0
    %1793 = vdwg.mxu0
    %1794 = vmatprep.subr.bf16.mxu0 %v347
    %1795 = vmatpush1.bf16.msra.mxu0 %v346
    %1796 = vmatprep.subr.bf16.mxu0 %v351
    %1797 = vmatpush1.bf16.msra.mxu0 %v350
    %1798 = vmatprep.subr.bf16.mxu0 %v355
    %1799 = vmatpush1.bf16.msra.mxu0 %v354
    %1800 = vmatprep.subr.bf16.mxu0 %v359
    %1801 = vmatpush1.bf16.msra.mxu0 %v358
    %1802 = vmatprep.subr.bf16.mxu0 %v363
    %1803 = vmatpush1.bf16.msra.mxu0 %v362
    %1804 = vmatprep.subr.bf16.mxu0 %v367
    %1805 = vmatpush1.bf16.msra.mxu0 %v366
    %1806 = vmatprep.subr.bf16.mxu0 %v371
    %1807 = vmatpush1.bf16.msra.mxu0 %v370
    %1808 = vmatprep.subr.bf16.mxu0 %v375
    %1809 = vmatpush1.bf16.msra.mxu0 %v374
    %1810 = vmatprep.subr.bf16.mxu0 0
    %1811 = vmatpush1.bf16.msra.mxu0 0
    %1812 = vmatprep.subr.bf16.mxu0 0
    %1813 = vmatpush1.bf16.msra.mxu0 0
    %1814 = vmatprep.subr.bf16.mxu0 0
    %1815 = vmatpush1.bf16.msra.mxu0 0
    %1816 = vmatprep.subr.bf16.mxu0 0
    %1817 = vmatpush1.bf16.msra.mxu0 0
    %1818 = vmatprep.subr.bf16.mxu0 0
    %1819 = vmatpush1.bf16.msra.mxu0 0
    %1820 = vmatprep.subr.bf16.mxu0 0
    %1821 = vmatpush1.bf16.msra.mxu0 0
    %1822 = vmatprep.subr.bf16.mxu0 0
    %1823 = vmatpush1.bf16.msra.mxu0 0
    %1824 = vmatprep.subr.bf16.mxu0 0
    %1825 = vmatpush1.bf16.msra.mxu0 0
    %1826 = vmatprep.mubr.bf16.mxu0 0
    %1827 = vmatmul.mubr.bf16.gmra.mrb[0].mxu0 %v1752
    %v1828 = vpop.f32.mrb[0].mxu0
    %v1829 = vadd.f32 0.0, %v1828
    %v1830 = vpop.f32.mrb[0].mxu0
    %v1831 = vadd.f32 0.0, %v1830
    %v1832 = vpop.f32.mrb[0].mxu0
    %v1833 = vpop.f32.mrb[0].mxu0
    %1834 = vdwg.mxu0
    %v1839 = vrot.slane %v1788, 6
    %v1840 = vrot.slane %v1790, 6
    %v1841 = vrot.slane %v1829, 6
    %v1842 = vrot.slane %v1831, 6
    %v1847 = vadd.f32 %v144, %v1839
    %v1848 = vadd.f32 %v146, %v1840
    %v1849 = vadd.f32 %v187, %v1841
    %v1850 = vadd.f32 %v189, %v1842
    %v1851 = vpack.c.bf16 %v1751, %v1751
    %1852 = vmatprep.subr.bf16.mxu0 %v784
    %1853 = vmatpush1.bf16.msra.mxu0 %v783
    %1854 = vmatprep.subr.bf16.mxu0 %v788
    %1855 = vmatpush1.bf16.msra.mxu0 %v787
    %1856 = vmatprep.subr.bf16.mxu0 %v792
    %1857 = vmatpush1.bf16.msra.mxu0 %v791
    %1858 = vmatprep.subr.bf16.mxu0 %v796
    %1859 = vmatpush1.bf16.msra.mxu0 %v795
    %1860 = vmatprep.subr.bf16.mxu0 %v800
    %1861 = vmatpush1.bf16.msra.mxu0 %v799
    %1862 = vmatprep.subr.bf16.mxu0 %v804
    %1863 = vmatpush1.bf16.msra.mxu0 %v803
    %1864 = vmatprep.subr.bf16.mxu0 %v808
    %1865 = vmatpush1.bf16.msra.mxu0 %v807
    %1866 = vmatprep.subr.bf16.mxu0 %v812
    %1867 = vmatpush1.bf16.msra.mxu0 %v811
    %1868 = vmatprep.subr.bf16.mxu0 %v816
    %1869 = vmatpush1.bf16.msra.mxu0 %v815
    %1870 = vmatprep.subr.bf16.mxu0 %v820
    %1871 = vmatpush1.bf16.msra.mxu0 %v819
    %1872 = vmatprep.subr.bf16.mxu0 %v824
    %1873 = vmatpush1.bf16.msra.mxu0 %v823
    %1874 = vmatprep.subr.bf16.mxu0 %v828
    %1875 = vmatpush1.bf16.msra.mxu0 %v827
    %1876 = vmatprep.subr.bf16.mxu0 %v832
    %1877 = vmatpush1.bf16.msra.mxu0 %v831
    %1878 = vmatprep.subr.bf16.mxu0 %v836
    %1879 = vmatpush1.bf16.msra.mxu0 %v835
    %1880 = vmatprep.subr.bf16.mxu0 %v840
    %1881 = vmatpush1.bf16.msra.mxu0 %v839
    %1882 = vmatprep.subr.bf16.mxu0 %v844
    %1883 = vmatpush1.bf16.msra.mxu0 %v843
    %1884 = vmatprep.mubr.bf16.mxu0 %v1851
    %1885 = vmatmul.mubr.bf16.gmra.mrb[0].mxu0 %v1752
    %v1886 = vpop.f32.mrb[0].mxu0
    %v1887 = vadd.f32 %v574, %v1886
    %v1888 = vpop.f32.mrb[0].mxu0
    %v1889 = vadd.f32 %v578, %v1888
    %v1890 = vpop.f32.mrb[0].mxu0
    %v1891 = vpop.f32.mrb[0].mxu0
    %1892 = vdwg.mxu0
    %1893 = vmatprep.subr.bf16.mxu0 %v786
    %1894 = vmatpush1.bf16.msra.mxu0 %v785
    %1895 = vmatprep.subr.bf16.mxu0 %v790
    %1896 = vmatpush1.bf16.msra.mxu0 %v789
    %1897 = vmatprep.subr.bf16.mxu0 %v794
    %1898 = vmatpush1.bf16.msra.mxu0 %v793
    %1899 = vmatprep.subr.bf16.mxu0 %v798
    %1900 = vmatpush1.bf16.msra.mxu0 %v797
    %1901 = vmatprep.subr.bf16.mxu0 %v802
    %1902 = vmatpush1.bf16.msra.mxu0 %v801
    %1903 = vmatprep.subr.bf16.mxu0 %v806
    %1904 = vmatpush1.bf16.msra.mxu0 %v805
    %1905 = vmatprep.subr.bf16.mxu0 %v810
    %1906 = vmatpush1.bf16.msra.mxu0 %v809
    %1907 = vmatprep.subr.bf16.mxu0 %v814
    %1908 = vmatpush1.bf16.msra.mxu0 %v813
    %1909 = vmatprep.subr.bf16.mxu0 %v818
    %1910 = vmatpush1.bf16.msra.mxu0 %v817
    %1911 = vmatprep.subr.bf16.mxu0 %v822
    %1912 = vmatpush1.bf16.msra.mxu0 %v821
    %1913 = vmatprep.subr.bf16.mxu0 %v826
    %1914 = vmatpush1.bf16.msra.mxu0 %v825
    %1915 = vmatprep.subr.bf16.mxu0 %v830
    %1916 = vmatpush1.bf16.msra.mxu0 %v829
    %1917 = vmatprep.subr.bf16.mxu0 %v834
    %1918 = vmatpush1.bf16.msra.mxu0 %v833
    %1919 = vmatprep.subr.bf16.mxu0 %v838
    %1920 = vmatpush1.bf16.msra.mxu0 %v837
    %1921 = vmatprep.subr.bf16.mxu0 %v842
    %1922 = vmatpush1.bf16.msra.mxu0 %v841
    %1923 = vmatprep.subr.bf16.mxu0 %v846
    %1924 = vmatpush1.bf16.msra.mxu0 %v845
    %1925 = vmatprep.mubr.bf16.mxu0 %v1851
    %1926 = vmatmul.mubr.bf16.gmra.mrb[0].mxu0 %v1752
    %v1927 = vpop.f32.mrb[0].mxu0
    %v1928 = vadd.f32 %v582, %v1927
    %v1929 = vpop.f32.mrb[0].mxu0
    %v1930 = vadd.f32 %v586, %v1929
    %v1931 = vpop.f32.mrb[0].mxu0
    %v1932 = vpop.f32.mrb[0].mxu0
    %1933 = vdwg.mxu0
    %v1934 = vxor.u32 %v1847, 2147483648
    %v1935 = vxor.u32 %v1848, 2147483648
    %v1936 = vxor.u32 %v1849, 2147483648
    %v1937 = vmul.f32 %v1934, 1.442695
    %v1938 = vpow.pop %v1937
    %v1939 = vmul.f32 %v1935, 1.442695
    %v1940 = vpow.pop %v1939
    %v1941 = vmul.f32 %v1936, 1.442695
    %v1942 = vpow.pop %v1941
    %v1943 = vadd.f32 %v1938, 1.0
    %v1944 = vadd.f32 %v1940, 1.0
    %v1945 = vadd.f32 %v1942, 1.0
    %v1946 = vrcp.pop %v1943
    %v1947 = vmul.f32 1.0, %v1946
    %v1948 = vrcp.pop %v1944
    %v1949 = vmul.f32 1.0, %v1948
    %v1950 = vrcp.pop %v1945
    %v1951 = vmul.f32 1.0, %v1950
    %v1952 = vtanh.pop %v1850
    %v1954 = vrot.slane %v1725, 6
    %v1956 = vmul.f32 %v1949, %v1954
    %v1957 = vmul.f32 %v1947, %v1952
    %v1958 = vadd.f32 %v1956, %v1957
    %v1959 = vtanh.pop %v1958
    %v1960 = vmul.f32 %v1951, %v1959
    %v1961 = vxor.u32 %v1887, 2147483648
    %v1962 = vxor.u32 %v1889, 2147483648
    %v1963 = vxor.u32 %v1928, 2147483648
    %v1964 = vmul.f32 %v1961, 1.442695
    %v1965 = vpow.pop %v1964
    %v1966 = vmul.f32 %v1962, 1.442695
    %v1967 = vpow.pop %v1966
    %v1968 = vmul.f32 %v1963, 1.442695
    %v1969 = vpow.pop %v1968
    %v1970 = vadd.f32 %v1965, 1.0
    %v1971 = vadd.f32 %v1967, 1.0
    %v1972 = vadd.f32 %v1969, 1.0
    %v1973 = vrcp.pop %v1970
    %v1974 = vmul.f32 1.0, %v1973
    %v1975 = vrcp.pop %v1971
    %v1976 = vmul.f32 1.0, %v1975
    %v1977 = vrcp.pop %v1972
    %v1978 = vmul.f32 1.0, %v1977
    %v1979 = vtanh.pop %v1930
    %v1980 = vmul.f32 %v1976, %v1749
    %v1981 = vmul.f32 %v1974, %v1979
    %v1982 = vadd.f32 %v1980, %v1981
    %v1983 = vtanh.pop %v1982
    %v1984 = vmul.f32 %v1978, %v1983
    %v1985 = vpack.c.bf16 %v1960, %v1960
    %v1987 = vrot.slane %v1985, 1
    %1989 = vmatprep.subr.bf16.mxu0 %v345
    %1990 = vmatpush1.bf16.msra.mxu0 %v344
    %1991 = vmatprep.subr.bf16.mxu0 %v349
    %1992 = vmatpush1.bf16.msra.mxu0 %v348
    %1993 = vmatprep.subr.bf16.mxu0 %v353
    %1994 = vmatpush1.bf16.msra.mxu0 %v352
    %1995 = vmatprep.subr.bf16.mxu0 %v357
    %1996 = vmatpush1.bf16.msra.mxu0 %v356
    %1997 = vmatprep.subr.bf16.mxu0 %v361
    %1998 = vmatpush1.bf16.msra.mxu0 %v360
    %1999 = vmatprep.subr.bf16.mxu0 %v365
    %2000 = vmatpush1.bf16.msra.mxu0 %v364
    %2001 = vmatprep.subr.bf16.mxu0 %v369
    %2002 = vmatpush1.bf16.msra.mxu0 %v368
    %2003 = vmatprep.subr.bf16.mxu0 %v373
    %2004 = vmatpush1.bf16.msra.mxu0 %v372
    %2005 = vmatprep.subr.bf16.mxu0 0
    %2006 = vmatpush1.bf16.msra.mxu0 0
    %2007 = vmatprep.subr.bf16.mxu0 0
    %2008 = vmatpush1.bf16.msra.mxu0 0
    %2009 = vmatprep.subr.bf16.mxu0 0
    %2010 = vmatpush1.bf16.msra.mxu0 0
    %2011 = vmatprep.subr.bf16.mxu0 0
    %2012 = vmatpush1.bf16.msra.mxu0 0
    %2013 = vmatprep.subr.bf16.mxu0 0
    %2014 = vmatpush1.bf16.msra.mxu0 0
    %2015 = vmatprep.subr.bf16.mxu0 0
    %2016 = vmatpush1.bf16.msra.mxu0 0
    %2017 = vmatprep.subr.bf16.mxu0 0
    %2018 = vmatpush1.bf16.msra.mxu0 0
    %2019 = vmatprep.subr.bf16.mxu0 0
    %2020 = vmatpush1.bf16.msra.mxu0 0
    %2021 = vmatprep.mubr.bf16.mxu0 0
    %2022 = vmatmul.mubr.bf16.gmra.mrb[0].mxu0 %v1987
    %v2023 = vpop.f32.mrb[0].mxu0
    %v2024 = vadd.f32 0.0, %v2023
    %v2025 = vpop.f32.mrb[0].mxu0
    %v2026 = vadd.f32 0.0, %v2025
    %v2027 = vpop.f32.mrb[0].mxu0
    %v2028 = vpop.f32.mrb[0].mxu0
    %2029 = vdwg.mxu0
    %2030 = vmatprep.subr.bf16.mxu0 %v347
    %2031 = vmatpush1.bf16.msra.mxu0 %v346
    %2032 = vmatprep.subr.bf16.mxu0 %v351
    %2033 = vmatpush1.bf16.msra.mxu0 %v350
    %2034 = vmatprep.subr.bf16.mxu0 %v355
    %2035 = vmatpush1.bf16.msra.mxu0 %v354
    %2036 = vmatprep.subr.bf16.mxu0 %v359
    %2037 = vmatpush1.bf16.msra.mxu0 %v358
    %2038 = vmatprep.subr.bf16.mxu0 %v363
    %2039 = vmatpush1.bf16.msra.mxu0 %v362
    %2040 = vmatprep.subr.bf16.mxu0 %v367
    %2041 = vmatpush1.bf16.msra.mxu0 %v366
    %2042 = vmatprep.subr.bf16.mxu0 %v371
    %2043 = vmatpush1.bf16.msra.mxu0 %v370
    %2044 = vmatprep.subr.bf16.mxu0 %v375
    %2045 = vmatpush1.bf16.msra.mxu0 %v374
    %2046 = vmatprep.subr.bf16.mxu0 0
    %2047 = vmatpush1.bf16.msra.mxu0 0
    %2048 = vmatprep.subr.bf16.mxu0 0
    %2049 = vmatpush1.bf16.msra.mxu0 0
    %2050 = vmatprep.subr.bf16.mxu0 0
    %2051 = vmatpush1.bf16.msra.mxu0 0
    %2052 = vmatprep.subr.bf16.mxu0 0
    %2053 = vmatpush1.bf16.msra.mxu0 0
    %2054 = vmatprep.subr.bf16.mxu0 0
    %2055 = vmatpush1.bf16.msra.mxu0 0
    %2056 = vmatprep.subr.bf16.mxu0 0
    %2057 = vmatpush1.bf16.msra.mxu0 0
    %2058 = vmatprep.subr.bf16.mxu0 0
    %2059 = vmatpush1.bf16.msra.mxu0 0
    %2060 = vmatprep.subr.bf16.mxu0 0
    %2061 = vmatpush1.bf16.msra.mxu0 0
    %2062 = vmatprep.mubr.bf16.mxu0 0
    %2063 = vmatmul.mubr.bf16.gmra.mrb[0].mxu0 %v1987
    %v2064 = vpop.f32.mrb[0].mxu0
    %v2065 = vadd.f32 0.0, %v2064
    %v2066 = vpop.f32.mrb[0].mxu0
    %v2067 = vadd.f32 0.0, %v2066
    %v2068 = vpop.f32.mrb[0].mxu0
    %v2069 = vpop.f32.mrb[0].mxu0
    %2070 = vdwg.mxu0
    %v2075 = vrot.slane %v2024, 4
    %v2076 = vrot.slane %v2026, 4
    %v2077 = vrot.slane %v2065, 4
    %v2078 = vrot.slane %v2067, 4
    %v2083 = vadd.f32 %v144, %v2075
    %v2084 = vadd.f32 %v146, %v2076
    %v2085 = vadd.f32 %v187, %v2077
    %v2086 = vadd.f32 %v189, %v2078
    %v2087 = vpack.c.bf16 %v1984, %v1984
    %v2089 = vrot.slane %v2087, 7
    %v2090 = vrot.slane %v2089, 1
    %2092 = vmatprep.subr.bf16.mxu0 %v784
    %2093 = vmatpush1.bf16.msra.mxu0 %v783
    %2094 = vmatprep.subr.bf16.mxu0 %v788
    %2095 = vmatpush1.bf16.msra.mxu0 %v787
    %2096 = vmatprep.subr.bf16.mxu0 %v792
    %2097 = vmatpush1.bf16.msra.mxu0 %v791
    %2098 = vmatprep.subr.bf16.mxu0 %v796
    %2099 = vmatpush1.bf16.msra.mxu0 %v795
    %2100 = vmatprep.subr.bf16.mxu0 %v800
    %2101 = vmatpush1.bf16.msra.mxu0 %v799
    %2102 = vmatprep.subr.bf16.mxu0 %v804
    %2103 = vmatpush1.bf16.msra.mxu0 %v803
    %2104 = vmatprep.subr.bf16.mxu0 %v808
    %2105 = vmatpush1.bf16.msra.mxu0 %v807
    %2106 = vmatprep.subr.bf16.mxu0 %v812
    %2107 = vmatpush1.bf16.msra.mxu0 %v811
    %2108 = vmatprep.subr.bf16.mxu0 %v816
    %2109 = vmatpush1.bf16.msra.mxu0 %v815
    %2110 = vmatprep.subr.bf16.mxu0 %v820
    %2111 = vmatpush1.bf16.msra.mxu0 %v819
    %2112 = vmatprep.subr.bf16.mxu0 %v824
    %2113 = vmatpush1.bf16.msra.mxu0 %v823
    %2114 = vmatprep.subr.bf16.mxu0 %v828
    %2115 = vmatpush1.bf16.msra.mxu0 %v827
    %2116 = vmatprep.subr.bf16.mxu0 %v832
    %2117 = vmatpush1.bf16.msra.mxu0 %v831
    %2118 = vmatprep.subr.bf16.mxu0 %v836
    %2119 = vmatpush1.bf16.msra.mxu0 %v835
    %2120 = vmatprep.subr.bf16.mxu0 %v840
    %2121 = vmatpush1.bf16.msra.mxu0 %v839
    %2122 = vmatprep.subr.bf16.mxu0 %v844
    %2123 = vmatpush1.bf16.msra.mxu0 %v843
    %2124 = vmatprep.mubr.bf16.mxu0 %v2090
    %2125 = vmatmul.mubr.bf16.gmra.mrb[0].mxu0 %v1987
    %v2126 = vpop.f32.mrb[0].mxu0
    %v2127 = vadd.f32 %v574, %v2126
    %v2128 = vpop.f32.mrb[0].mxu0
    %v2129 = vadd.f32 %v578, %v2128
    %v2130 = vpop.f32.mrb[0].mxu0
    %v2131 = vpop.f32.mrb[0].mxu0
    %2132 = vdwg.mxu0
    %2133 = vmatprep.subr.bf16.mxu0 %v786
    %2134 = vmatpush1.bf16.msra.mxu0 %v785
    %2135 = vmatprep.subr.bf16.mxu0 %v790
    %2136 = vmatpush1.bf16.msra.mxu0 %v789
    %2137 = vmatprep.subr.bf16.mxu0 %v794
    %2138 = vmatpush1.bf16.msra.mxu0 %v793
    %2139 = vmatprep.subr.bf16.mxu0 %v798
    %2140 = vmatpush1.bf16.msra.mxu0 %v797
    %2141 = vmatprep.subr.bf16.mxu0 %v802
    %2142 = vmatpush1.bf16.msra.mxu0 %v801
    %2143 = vmatprep.subr.bf16.mxu0 %v806
    %2144 = vmatpush1.bf16.msra.mxu0 %v805
    %2145 = vmatprep.subr.bf16.mxu0 %v810
    %2146 = vmatpush1.bf16.msra.mxu0 %v809
    %2147 = vmatprep.subr.bf16.mxu0 %v814
    %2148 = vmatpush1.bf16.msra.mxu0 %v813
    %2149 = vmatprep.subr.bf16.mxu0 %v818
    %2150 = vmatpush1.bf16.msra.mxu0 %v817
    %2151 = vmatprep.subr.bf16.mxu0 %v822
    %2152 = vmatpush1.bf16.msra.mxu0 %v821
    %2153 = vmatprep.subr.bf16.mxu0 %v826
    %2154 = vmatpush1.bf16.msra.mxu0 %v825
    %2155 = vmatprep.subr.bf16.mxu0 %v830
    %2156 = vmatpush1.bf16.msra.mxu0 %v829
    %2157 = vmatprep.subr.bf16.mxu0 %v834
    %2158 = vmatpush1.bf16.msra.mxu0 %v833
    %2159 = vmatprep.subr.bf16.mxu0 %v838
    %2160 = vmatpush1.bf16.msra.mxu0 %v837
    %2161 = vmatprep.subr.bf16.mxu0 %v842
    %2162 = vmatpush1.bf16.msra.mxu0 %v841
    %2163 = vmatprep.subr.bf16.mxu0 %v846
    %2164 = vmatpush1.bf16.msra.mxu0 %v845
    %2165 = vmatprep.mubr.bf16.mxu0 %v2090
    %2166 = vmatmul.mubr.bf16.gmra.mrb[0].mxu0 %v1987
    %v2167 = vpop.f32.mrb[0].mxu0
    %v2168 = vadd.f32 %v582, %v2167
    %v2169 = vpop.f32.mrb[0].mxu0
    %v2170 = vadd.f32 %v586, %v2169
    %v2171 = vpop.f32.mrb[0].mxu0
    %v2172 = vpop.f32.mrb[0].mxu0
    %2173 = vdwg.mxu0
    %v2174 = vxor.u32 %v2083, 2147483648
    %v2175 = vxor.u32 %v2084, 2147483648
    %v2176 = vxor.u32 %v2085, 2147483648
    %v2177 = vmul.f32 %v2174, 1.442695
    %v2178 = vpow.pop %v2177
    %v2179 = vmul.f32 %v2175, 1.442695
    %v2180 = vpow.pop %v2179
    %v2181 = vmul.f32 %v2176, 1.442695
    %v2182 = vpow.pop %v2181
    %v2183 = vadd.f32 %v2178, 1.0
    %v2184 = vadd.f32 %v2180, 1.0
    %v2185 = vadd.f32 %v2182, 1.0
    %v2186 = vrcp.pop %v2183
    %v2187 = vmul.f32 1.0, %v2186
    %v2188 = vrcp.pop %v2184
    %v2189 = vmul.f32 1.0, %v2188
    %v2190 = vrcp.pop %v2185
    %v2191 = vmul.f32 1.0, %v2190
    %v2192 = vtanh.pop %v2086
    %v2194 = vrot.slane %v1958, 6
    %v2196 = vmul.f32 %v2189, %v2194
    %v2197 = vmul.f32 %v2187, %v2192
    %v2198 = vadd.f32 %v2196, %v2197
    %v2199 = vtanh.pop %v2198
    %v2200 = vmul.f32 %v2191, %v2199
    %v2201 = vxor.u32 %v2127, 2147483648
    %v2202 = vxor.u32 %v2129, 2147483648
    %v2203 = vxor.u32 %v2168, 2147483648
    %v2204 = vmul.f32 %v2201, 1.442695
    %v2205 = vpow.pop %v2204
    %v2206 = vmul.f32 %v2202, 1.442695
    %v2207 = vpow.pop %v2206
    %v2208 = vmul.f32 %v2203, 1.442695
    %v2209 = vpow.pop %v2208
    %v2210 = vadd.f32 %v2205, 1.0
    %v2211 = vadd.f32 %v2207, 1.0
    %v2212 = vadd.f32 %v2209, 1.0
    %v2213 = vrcp.pop %v2210
    %v2214 = vmul.f32 1.0, %v2213
    %v2215 = vrcp.pop %v2211
    %v2216 = vmul.f32 1.0, %v2215
    %v2217 = vrcp.pop %v2212
    %v2218 = vmul.f32 1.0, %v2217
    %v2219 = vtanh.pop %v2170
    %v2220 = vmul.f32 %v2216, %v1982
    %v2221 = vmul.f32 %v2214, %v2219
    %v2222 = vadd.f32 %v2220, %v2221
    %v2223 = vtanh.pop %v2222
    %v2224 = vmul.f32 %v2218, %v2223
    %v2225 = vpack.c.bf16 %v2200, %v2200
    %v2227 = vrot.slane %v2225, 2
    %2229 = vmatprep.subr.bf16.mxu0 %v345
    %2230 = vmatpush1.bf16.msra.mxu0 %v344
    %2231 = vmatprep.subr.bf16.mxu0 %v349
    %2232 = vmatpush1.bf16.msra.mxu0 %v348
    %2233 = vmatprep.subr.bf16.mxu0 %v353
    %2234 = vmatpush1.bf16.msra.mxu0 %v352
    %2235 = vmatprep.subr.bf16.mxu0 %v357
    %2236 = vmatpush1.bf16.msra.mxu0 %v356
    %2237 = vmatprep.subr.bf16.mxu0 %v361
    %2238 = vmatpush1.bf16.msra.mxu0 %v360
    %2239 = vmatprep.subr.bf16.mxu0 %v365
    %2240 = vmatpush1.bf16.msra.mxu0 %v364
    %2241 = vmatprep.subr.bf16.mxu0 %v369
    %2242 = vmatpush1.bf16.msra.mxu0 %v368
    %2243 = vmatprep.subr.bf16.mxu0 %v373
    %2244 = vmatpush1.bf16.msra.mxu0 %v372
    %2245 = vmatprep.subr.bf16.mxu0 0
    %2246 = vmatpush1.bf16.msra.mxu0 0
    %2247 = vmatprep.subr.bf16.mxu0 0
    %2248 = vmatpush1.bf16.msra.mxu0 0
    %2249 = vmatprep.subr.bf16.mxu0 0
    %2250 = vmatpush1.bf16.msra.mxu0 0
    %2251 = vmatprep.subr.bf16.mxu0 0
    %2252 = vmatpush1.bf16.msra.mxu0 0
    %2253 = vmatprep.subr.bf16.mxu0 0
    %2254 = vmatpush1.bf16.msra.mxu0 0
    %2255 = vmatprep.subr.bf16.mxu0 0
    %2256 = vmatpush1.bf16.msra.mxu0 0
    %2257 = vmatprep.subr.bf16.mxu0 0
    %2258 = vmatpush1.bf16.msra.mxu0 0
    %2259 = vmatprep.subr.bf16.mxu0 0
    %2260 = vmatpush1.bf16.msra.mxu0 0
    %2261 = vmatprep.mubr.bf16.mxu0 0
    %2262 = vmatmul.mubr.bf16.gmra.mrb[0].mxu0 %v2227
    %v2263 = vpop.f32.mrb[0].mxu0
    %v2264 = vadd.f32 0.0, %v2263
    %v2265 = vpop.f32.mrb[0].mxu0
    %v2266 = vadd.f32 0.0, %v2265
    %v2267 = vpop.f32.mrb[0].mxu0
    %v2268 = vpop.f32.mrb[0].mxu0
    %2269 = vdwg.mxu0
    %2270 = vmatprep.subr.bf16.mxu0 %v347
    %2271 = vmatpush1.bf16.msra.mxu0 %v346
    %2272 = vmatprep.subr.bf16.mxu0 %v351
    %2273 = vmatpush1.bf16.msra.mxu0 %v350
    %2274 = vmatprep.subr.bf16.mxu0 %v355
    %2275 = vmatpush1.bf16.msra.mxu0 %v354
    %2276 = vmatprep.subr.bf16.mxu0 %v359
    %2277 = vmatpush1.bf16.msra.mxu0 %v358
    %2278 = vmatprep.subr.bf16.mxu0 %v363
    %2279 = vmatpush1.bf16.msra.mxu0 %v362
    %2280 = vmatprep.subr.bf16.mxu0 %v367
    %2281 = vmatpush1.bf16.msra.mxu0 %v366
    %2282 = vmatprep.subr.bf16.mxu0 %v371
    %2283 = vmatpush1.bf16.msra.mxu0 %v370
    %2284 = vmatprep.subr.bf16.mxu0 %v375
    %2285 = vmatpush1.bf16.msra.mxu0 %v374
    %2286 = vmatprep.subr.bf16.mxu0 0
    %2287 = vmatpush1.bf16.msra.mxu0 0
    %2288 = vmatprep.subr.bf16.mxu0 0
    %2289 = vmatpush1.bf16.msra.mxu0 0
    %2290 = vmatprep.subr.bf16.mxu0 0
    %2291 = vmatpush1.bf16.msra.mxu0 0
    %2292 = vmatprep.subr.bf16.mxu0 0
    %2293 = vmatpush1.bf16.msra.mxu0 0
    %2294 = vmatprep.subr.bf16.mxu0 0
    %2295 = vmatpush1.bf16.msra.mxu0 0
    %2296 = vmatprep.subr.bf16.mxu0 0
    %2297 = vmatpush1.bf16.msra.mxu0 0
    %2298 = vmatprep.subr.bf16.mxu0 0
    %2299 = vmatpush1.bf16.msra.mxu0 0
    %2300 = vmatprep.subr.bf16.mxu0 0
    %2301 = vmatpush1.bf16.msra.mxu0 0
    %2302 = vmatprep.mubr.bf16.mxu0 0
    %2303 = vmatmul.mubr.bf16.gmra.mrb[0].mxu0 %v2227
    %v2304 = vpop.f32.mrb[0].mxu0
    %v2305 = vadd.f32 0.0, %v2304
    %v2306 = vpop.f32.mrb[0].mxu0
    %v2307 = vadd.f32 0.0, %v2306
    %v2308 = vpop.f32.mrb[0].mxu0
    %v2309 = vpop.f32.mrb[0].mxu0
    %2310 = vdwg.mxu0
    %v2315 = vrot.slane %v2264, 2
    %v2316 = vrot.slane %v2266, 2
    %v2317 = vrot.slane %v2305, 2
    %v2318 = vrot.slane %v2307, 2
    %v2323 = vadd.f32 %v144, %v2315
    %v2324 = vadd.f32 %v146, %v2316
    %v2325 = vadd.f32 %v187, %v2317
    %v2326 = vadd.f32 %v189, %v2318
    %v2327 = vpack.c.bf16 %v2224, %v2224
    %v2329 = vrot.slane %v2327, 6
    %v2330 = vrot.slane %v2329, 2
    %2332 = vmatprep.subr.bf16.mxu0 %v784
    %2333 = vmatpush1.bf16.msra.mxu0 %v783
    %2334 = vmatprep.subr.bf16.mxu0 %v788
    %2335 = vmatpush1.bf16.msra.mxu0 %v787
    %2336 = vmatprep.subr.bf16.mxu0 %v792
    %2337 = vmatpush1.bf16.msra.mxu0 %v791
    %2338 = vmatprep.subr.bf16.mxu0 %v796
    %2339 = vmatpush1.bf16.msra.mxu0 %v795
    %2340 = vmatprep.subr.bf16.mxu0 %v800
    %2341 = vmatpush1.bf16.msra.mxu0 %v799
    %2342 = vmatprep.subr.bf16.mxu0 %v804
    %2343 = vmatpush1.bf16.msra.mxu0 %v803
    %2344 = vmatprep.subr.bf16.mxu0 %v808
    %2345 = vmatpush1.bf16.msra.mxu0 %v807
    %2346 = vmatprep.subr.bf16.mxu0 %v812
    %2347 = vmatpush1.bf16.msra.mxu0 %v811
    %2348 = vmatprep.subr.bf16.mxu0 %v816
    %2349 = vmatpush1.bf16.msra.mxu0 %v815
    %2350 = vmatprep.subr.bf16.mxu0 %v820
    %2351 = vmatpush1.bf16.msra.mxu0 %v819
    %2352 = vmatprep.subr.bf16.mxu0 %v824
    %2353 = vmatpush1.bf16.msra.mxu0 %v823
    %2354 = vmatprep.subr.bf16.mxu0 %v828
    %2355 = vmatpush1.bf16.msra.mxu0 %v827
    %2356 = vmatprep.subr.bf16.mxu0 %v832
    %2357 = vmatpush1.bf16.msra.mxu0 %v831
    %2358 = vmatprep.subr.bf16.mxu0 %v836
    %2359 = vmatpush1.bf16.msra.mxu0 %v835
    %2360 = vmatprep.subr.bf16.mxu0 %v840
    %2361 = vmatpush1.bf16.msra.mxu0 %v839
    %2362 = vmatprep.subr.bf16.mxu0 %v844
    %2363 = vmatpush1.bf16.msra.mxu0 %v843
    %2364 = vmatprep.mubr.bf16.mxu0 %v2330
    %2365 = vmatmul.mubr.bf16.gmra.mrb[0].mxu0 %v2227
    %v2366 = vpop.f32.mrb[0].mxu0
    %v2367 = vadd.f32 %v574, %v2366
    %v2368 = vpop.f32.mrb[0].mxu0
    %v2369 = vadd.f32 %v578, %v2368
    %v2370 = vpop.f32.mrb[0].mxu0
    %v2371 = vpop.f32.mrb[0].mxu0
    %2372 = vdwg.mxu0
    %2373 = vmatprep.subr.bf16.mxu0 %v786
    %2374 = vmatpush1.bf16.msra.mxu0 %v785
    %2375 = vmatprep.subr.bf16.mxu0 %v790
    %2376 = vmatpush1.bf16.msra.mxu0 %v789
    %2377 = vmatprep.subr.bf16.mxu0 %v794
    %2378 = vmatpush1.bf16.msra.mxu0 %v793
    %2379 = vmatprep.subr.bf16.mxu0 %v798
    %2380 = vmatpush1.bf16.msra.mxu0 %v797
    %2381 = vmatprep.subr.bf16.mxu0 %v802
    %2382 = vmatpush1.bf16.msra.mxu0 %v801
    %2383 = vmatprep.subr.bf16.mxu0 %v806
    %2384 = vmatpush1.bf16.msra.mxu0 %v805
    %2385 = vmatprep.subr.bf16.mxu0 %v810
    %2386 = vmatpush1.bf16.msra.mxu0 %v809
    %2387 = vmatprep.subr.bf16.mxu0 %v814
    %2388 = vmatpush1.bf16.msra.mxu0 %v813
    %2389 = vmatprep.subr.bf16.mxu0 %v818
    %2390 = vmatpush1.bf16.msra.mxu0 %v817
    %2391 = vmatprep.subr.bf16.mxu0 %v822
    %2392 = vmatpush1.bf16.msra.mxu0 %v821
    %2393 = vmatprep.subr.bf16.mxu0 %v826
    %2394 = vmatpush1.bf16.msra.mxu0 %v825
    %2395 = vmatprep.subr.bf16.mxu0 %v830
    %2396 = vmatpush1.bf16.msra.mxu0 %v829
    %2397 = vmatprep.subr.bf16.mxu0 %v834
    %2398 = vmatpush1.bf16.msra.mxu0 %v833
    %2399 = vmatprep.subr.bf16.mxu0 %v838
    %2400 = vmatpush1.bf16.msra.mxu0 %v837
    %2401 = vmatprep.subr.bf16.mxu0 %v842
    %2402 = vmatpush1.bf16.msra.mxu0 %v841
    %2403 = vmatprep.subr.bf16.mxu0 %v846
    %2404 = vmatpush1.bf16.msra.mxu0 %v845
    %2405 = vmatprep.mubr.bf16.mxu0 %v2330
    %2406 = vmatmul.mubr.bf16.gmra.mrb[0].mxu0 %v2227
    %v2407 = vpop.f32.mrb[0].mxu0
    %v2408 = vadd.f32 %v582, %v2407
    %v2409 = vpop.f32.mrb[0].mxu0
    %v2410 = vadd.f32 %v586, %v2409
    %v2411 = vpop.f32.mrb[0].mxu0
    %v2412 = vpop.f32.mrb[0].mxu0
    %2413 = vdwg.mxu0
    %v2414 = vxor.u32 %v2323, 2147483648
    %v2415 = vxor.u32 %v2324, 2147483648
    %v2416 = vxor.u32 %v2325, 2147483648
    %v2417 = vmul.f32 %v2414, 1.442695
    %v2418 = vpow.pop %v2417
    %v2419 = vmul.f32 %v2415, 1.442695
    %v2420 = vpow.pop %v2419
    %v2421 = vmul.f32 %v2416, 1.442695
    %v2422 = vpow.pop %v2421
    %v2423 = vadd.f32 %v2418, 1.0
    %v2424 = vadd.f32 %v2420, 1.0
    %v2425 = vadd.f32 %v2422, 1.0
    %v2426 = vrcp.pop %v2423
    %v2427 = vmul.f32 1.0, %v2426
    %v2428 = vrcp.pop %v2424
    %v2429 = vmul.f32 1.0, %v2428
    %v2430 = vrcp.pop %v2425
    %v2431 = vmul.f32 1.0, %v2430
    %v2432 = vtanh.pop %v2326
    %v2434 = vrot.slane %v2198, 6
    %v2436 = vmul.f32 %v2429, %v2434
    %v2437 = vmul.f32 %v2427, %v2432
    %v2438 = vadd.f32 %v2436, %v2437
    %v2439 = vtanh.pop %v2438
    %v2440 = vmul.f32 %v2431, %v2439
    %v2441 = vxor.u32 %v2367, 2147483648
    %v2442 = vxor.u32 %v2369, 2147483648
    %v2443 = vxor.u32 %v2408, 2147483648
    %v2444 = vmul.f32 %v2441, 1.442695
    %v2445 = vpow.pop %v2444
    %v2446 = vmul.f32 %v2442, 1.442695
    %v2447 = vpow.pop %v2446
    %v2448 = vmul.f32 %v2443, 1.442695
    %v2449 = vpow.pop %v2448
    %v2450 = vadd.f32 %v2445, 1.0
    %v2451 = vadd.f32 %v2447, 1.0
    %v2452 = vadd.f32 %v2449, 1.0
    %v2453 = vrcp.pop %v2450
    %v2454 = vmul.f32 1.0, %v2453
    %v2455 = vrcp.pop %v2451
    %v2456 = vmul.f32 1.0, %v2455
    %v2457 = vrcp.pop %v2452
    %v2458 = vmul.f32 1.0, %v2457
    %v2459 = vtanh.pop %v2410
    %v2460 = vmul.f32 %v2456, %v2222
    %v2461 = vmul.f32 %v2454, %v2459
    %v2462 = vadd.f32 %v2460, %v2461
    %v2463 = vtanh.pop %v2462
    %v2464 = vmul.f32 %v2458, %v2463
    %v2465 = vpack.c.bf16 %v2440, %v2440
    %v2466 = vpack.c.bf16 %v2464, %v2464
    %v2468 = vrot.slane %v2466, 5
    %v2470 = vrot.slane %v2465, 3
    %v2471 = vrot.slane %v2468, 3
    %2474 = vmatprep.subr.bf16.mxu0 %v784
    %2475 = vmatpush1.bf16.msra.mxu0 %v783
    %2476 = vmatprep.subr.bf16.mxu0 %v788
    %2477 = vmatpush1.bf16.msra.mxu0 %v787
    %2478 = vmatprep.subr.bf16.mxu0 %v792
    %2479 = vmatpush1.bf16.msra.mxu0 %v791
    %2480 = vmatprep.subr.bf16.mxu0 %v796
    %2481 = vmatpush1.bf16.msra.mxu0 %v795
    %2482 = vmatprep.subr.bf16.mxu0 %v800
    %2483 = vmatpush1.bf16.msra.mxu0 %v799
    %2484 = vmatprep.subr.bf16.mxu0 %v804
    %2485 = vmatpush1.bf16.msra.mxu0 %v803
    %2486 = vmatprep.subr.bf16.mxu0 %v808
    %2487 = vmatpush1.bf16.msra.mxu0 %v807
    %2488 = vmatprep.subr.bf16.mxu0 %v812
    %2489 = vmatpush1.bf16.msra.mxu0 %v811
    %2490 = vmatprep.subr.bf16.mxu0 %v816
    %2491 = vmatpush1.bf16.msra.mxu0 %v815
    %2492 = vmatprep.subr.bf16.mxu0 %v820
    %2493 = vmatpush1.bf16.msra.mxu0 %v819
    %2494 = vmatprep.subr.bf16.mxu0 %v824
    %2495 = vmatpush1.bf16.msra.mxu0 %v823
    %2496 = vmatprep.subr.bf16.mxu0 %v828
    %2497 = vmatpush1.bf16.msra.mxu0 %v827
    %2498 = vmatprep.subr.bf16.mxu0 %v832
    %2499 = vmatpush1.bf16.msra.mxu0 %v831
    %2500 = vmatprep.subr.bf16.mxu0 %v836
    %2501 = vmatpush1.bf16.msra.mxu0 %v835
    %2502 = vmatprep.subr.bf16.mxu0 %v840
    %2503 = vmatpush1.bf16.msra.mxu0 %v839
    %2504 = vmatprep.subr.bf16.mxu0 %v844
    %2505 = vmatpush1.bf16.msra.mxu0 %v843
    %2506 = vmatprep.mubr.bf16.mxu0 %v2471
    %2507 = vmatmul.mubr.bf16.gmra.mrb[0].mxu0 %v2470
    %v2508 = vpop.f32.mrb[0].mxu0
    %v2509 = vadd.f32 %v574, %v2508
    %v2510 = vpop.f32.mrb[0].mxu0
    %v2511 = vadd.f32 %v578, %v2510
    %v2512 = vpop.f32.mrb[0].mxu0
    %v2513 = vpop.f32.mrb[0].mxu0
    %2514 = vdwg.mxu0
    %2515 = vmatprep.subr.bf16.mxu0 %v786
    %2516 = vmatpush1.bf16.msra.mxu0 %v785
    %2517 = vmatprep.subr.bf16.mxu0 %v790
    %2518 = vmatpush1.bf16.msra.mxu0 %v789
    %2519 = vmatprep.subr.bf16.mxu0 %v794
    %2520 = vmatpush1.bf16.msra.mxu0 %v793
    %2521 = vmatprep.subr.bf16.mxu0 %v798
    %2522 = vmatpush1.bf16.msra.mxu0 %v797
    %2523 = vmatprep.subr.bf16.mxu0 %v802
    %2524 = vmatpush1.bf16.msra.mxu0 %v801
    %2525 = vmatprep.subr.bf16.mxu0 %v806
    %2526 = vmatpush1.bf16.msra.mxu0 %v805
    %2527 = vmatprep.subr.bf16.mxu0 %v810
    %2528 = vmatpush1.bf16.msra.mxu0 %v809
    %2529 = vmatprep.subr.bf16.mxu0 %v814
    %2530 = vmatpush1.bf16.msra.mxu0 %v813
    %2531 = vmatprep.subr.bf16.mxu0 %v818
    %2532 = vmatpush1.bf16.msra.mxu0 %v817
    %2533 = vmatprep.subr.bf16.mxu0 %v822
    %2534 = vmatpush1.bf16.msra.mxu0 %v821
    %2535 = vmatprep.subr.bf16.mxu0 %v826
    %2536 = vmatpush1.bf16.msra.mxu0 %v825
    %2537 = vmatprep.subr.bf16.mxu0 %v830
    %2538 = vmatpush1.bf16.msra.mxu0 %v829
    %2539 = vmatprep.subr.bf16.mxu0 %v834
    %2540 = vmatpush1.bf16.msra.mxu0 %v833
    %2541 = vmatprep.subr.bf16.mxu0 %v838
    %2542 = vmatpush1.bf16.msra.mxu0 %v837
    %2543 = vmatprep.subr.bf16.mxu0 %v842
    %2544 = vmatpush1.bf16.msra.mxu0 %v841
    %2545 = vmatprep.subr.bf16.mxu0 %v846
    %2546 = vmatpush1.bf16.msra.mxu0 %v845
    %2547 = vmatprep.mubr.bf16.mxu0 %v2471
    %2548 = vmatmul.mubr.bf16.gmra.mrb[0].mxu0 %v2470
    %v2549 = vpop.f32.mrb[0].mxu0
    %v2550 = vadd.f32 %v582, %v2549
    %v2551 = vpop.f32.mrb[0].mxu0
    %v2552 = vadd.f32 %v586, %v2551
    %v2553 = vpop.f32.mrb[0].mxu0
    %v2554 = vpop.f32.mrb[0].mxu0
    %2555 = vdwg.mxu0
    %v2556 = vxor.u32 %v2509, 2147483648
    %v2557 = vxor.u32 %v2511, 2147483648
    %v2558 = vxor.u32 %v2550, 2147483648
    %v2559 = vmul.f32 %v2556, 1.442695
    %v2560 = vpow.pop %v2559
    %v2561 = vmul.f32 %v2557, 1.442695
    %v2562 = vpow.pop %v2561
    %v2563 = vmul.f32 %v2558, 1.442695
    %v2564 = vpow.pop %v2563
    %v2565 = vadd.f32 %v2560, 1.0
    %v2566 = vadd.f32 %v2562, 1.0
    %v2567 = vadd.f32 %v2564, 1.0
    %v2568 = vrcp.pop %v2565
    %v2569 = vmul.f32 1.0, %v2568
    %v2570 = vrcp.pop %v2566
    %v2571 = vmul.f32 1.0, %v2570
    %v2572 = vrcp.pop %v2567
    %v2573 = vmul.f32 1.0, %v2572
    %v2574 = vtanh.pop %v2552
    %v2575 = vmul.f32 %v2571, %v2462
    %v2576 = vmul.f32 %v2569, %v2574
    %v2577 = vadd.f32 %v2575, %v2576
    %v2578 = vtanh.pop %v2577
    %v2579 = vmul.f32 %v2573, %v2578
    %v2581 = vrot.slane %v1283, 6
    %v2584 = vrot.slane %v1523, 4
    %v2587 = vrot.slane %v1751, 2
    %v2590 = vrot.slane %v2224, 6
    %v2593 = vrot.slane %v2464, 4
    %v2596 = vrot.slane %v2579, 2
    %vm2598 = vcmask 1041408
    %v2599 = vsel %vm2598, %v1043, %v2581
    %vm2600 = vcmask 1043456
    %v2601 = vsel %vm2600, %v2599, %v2584
    %vm2602 = vcmask 1045504
    %v2603 = vsel %vm2602, %v2601, %v2587
    %v2604 = vsel %vm2598, %v1984, %v2590
    %v2605 = vsel %vm2600, %v2604, %v2593
    %v2606 = vsel %vm2602, %v2605, %v2596
    %v2607 = vpack.c.bf16 %v2606, %v2603
    %v2608 = vld [vmem:[#allocation4] sm:$0xf]
    %v2609 = vld [vmem:[#allocation4 + $0x4] sm:$0xf]
    %v2610 = vld [vmem:[#allocation4 + $0x8] sm:$0xf]
    %v2611 = vld [vmem:[#allocation4 + $0xc] sm:$0xf]
    %v2612 = vld [vmem:[#allocation4 + $0x10] sm:$0xf]
    %v2613 = vld [vmem:[#allocation4 + $0x14] sm:$0xf]
    %v2614 = vld [vmem:[#allocation4 + $0x18] sm:$0xf]
    %v2615 = vld [vmem:[#allocation4 + $0x1c] sm:$0xf]
    %v2616 = vld [vmem:[#allocation4 + $0x20] sm:$0xf]
    %v2617 = vld [vmem:[#allocation4 + $0x24] sm:$0xf]
    %v2618 = vld [vmem:[#allocation4 + $0x28] sm:$0xf]
    %v2619 = vld [vmem:[#allocation4 + $0x2c] sm:$0xf]
    %v2620 = vld [vmem:[#allocation4 + $0x30] sm:$0xf]
    %v2621 = vld [vmem:[#allocation4 + $0x34] sm:$0xf]
    %v2622 = vld [vmem:[#allocation4 + $0x38] sm:$0xf]
    %v2623 = vld [vmem:[#allocation4 + $0x3c] sm:$0xf]
    %v2624 = vld [vmem:[%s3 + $0x2] ss:$0 sm:$0xff]
    %v2641 = vunpack.c.l.b16 %v2608
    %v2642 = vunpack.c.l.b16 %v2609
    %v2643 = vunpack.c.l.b16 %v2610
    %v2644 = vunpack.c.l.b16 %v2611
    %v2645 = vunpack.c.l.b16 %v2612
    %v2646 = vunpack.c.l.b16 %v2613
    %v2647 = vunpack.c.l.b16 %v2614
    %v2648 = vunpack.c.l.b16 %v2615
    %v2649 = vunpack.c.l.b16 %v2616
    %v2650 = vunpack.c.l.b16 %v2617
    %v2651 = vunpack.c.l.b16 %v2618
    %v2652 = vunpack.c.l.b16 %v2619
    %v2653 = vunpack.c.l.b16 %v2620
    %v2654 = vunpack.c.l.b16 %v2621
    %v2655 = vunpack.c.l.b16 %v2622
    %v2656 = vunpack.c.l.b16 %v2623
    %v2657 = vpack.c.b16 %v2642, %v2641
    %v2658 = vpack.c.b16 %v2644, %v2643
    %v2659 = vpack.c.b16 %v2646, %v2645
    %v2660 = vpack.c.b16 %v2648, %v2647
    %v2661 = vpack.c.b16 %v2650, %v2649
    %v2662 = vpack.c.b16 %v2652, %v2651
    %v2663 = vpack.c.b16 %v2654, %v2653
    %v2664 = vpack.c.b16 %v2656, %v2655
    %2673 = vmatprep.subr.bf16.mxu0 0
    %2674 = vmatpush1.bf16.msra.mxu0 %v2657
    %2675 = vmatprep.subr.bf16.mxu0 0
    %2676 = vmatpush1.bf16.msra.mxu0 %v2658
    %2677 = vmatprep.subr.bf16.mxu0 0
    %2678 = vmatpush1.bf16.msra.mxu0 %v2659
    %2679 = vmatprep.subr.bf16.mxu0 0
    %2680 = vmatpush1.bf16.msra.mxu0 %v2660
    %2681 = vmatprep.subr.bf16.mxu0 0
    %2682 = vmatpush1.bf16.msra.mxu0 %v2661
    %2683 = vmatprep.subr.bf16.mxu0 0
    %2684 = vmatpush1.bf16.msra.mxu0 %v2662
    %2685 = vmatprep.subr.bf16.mxu0 0
    %2686 = vmatpush1.bf16.msra.mxu0 %v2663
    %2687 = vmatprep.subr.bf16.mxu0 0
    %2688 = vmatpush1.bf16.msra.mxu0 %v2664
    %2689 = vmatprep.subr.bf16.mxu0 0
    %2690 = vmatpush1.bf16.msra.mxu0 0
    %2691 = vmatprep.subr.bf16.mxu0 0
    %2692 = vmatpush1.bf16.msra.mxu0 0
    %2693 = vmatprep.subr.bf16.mxu0 0
    %2694 = vmatpush1.bf16.msra.mxu0 0
    %2695 = vmatprep.subr.bf16.mxu0 0
    %2696 = vmatpush1.bf16.msra.mxu0 0
    %2697 = vmatprep.subr.bf16.mxu0 0
    %2698 = vmatpush1.bf16.msra.mxu0 0
    %2699 = vmatprep.subr.bf16.mxu0 0
    %2700 = vmatpush1.bf16.msra.mxu0 0
    %2701 = vmatprep.subr.bf16.mxu0 0
    %2702 = vmatpush1.bf16.msra.mxu0 0
    %2703 = vmatprep.subr.bf16.mxu0 0
    %2704 = vmatpush1.bf16.msra.mxu0 0
    %2705 = vmatprep.mubr.bf16.mxu0 0
    %2706 = vmatmul.mubr.bf16.gmra.mrb[0].mxu0 %v2607
    %v2707 = vpop.f32.mrb[0].mxu0
    %v2708 = vadd.f32 %v2624, %v2707
    %v2709 = vpop.f32.mrb[0].mxu0
    %v2710 = vpop.f32.mrb[0].mxu0
    %v2711 = vadd.f32 %v2624, %v2710
    %v2712 = vpop.f32.mrb[0].mxu0
    %2713 = vdwg.mxu0
    %v2714 = vtanh.pop %v2708
    %v2715 = vtanh.pop %v2711
    %v2716 = vld [vmem:[%s3 + $0x3] ss:$0 sm:$0xff]
    %v2717 = vmul.f32 %v2714, %v2716
    %v2718 = vmul.f32 %v2715, %v2716
    %2719 = vadd.xlane.f32.xlu0 %v2717
    %v2720 = vpop.xlane.xlu0 %2719
    %2721 = vadd.xlane.f32.xlu0 %v2718
    %v2722 = vpop.xlane.xlu0 %2721
    %v2723 = vmax.f32 %v2720, %v2722
    %v2724 = vrot.slane %v2723, 4
    %v2725 = vmax.f32 %v2723, %v2724
    %v2726 = vrot.slane %v2725, 2
    %v2727 = vmax.f32 %v2725, %v2726
    %v2728 = vrot.slane %v2727, 1
    %v2729 = vmax.f32 %v2727, %v2728
    %s2730 = vtos %v2729
    %v2731 = vstv %s2730
    %v2732 = vsub.f32 %v2720, %v2731
    %v2733 = vsub.f32 %v2722, %v2731
    %v2734 = vmul.f32 %v2732, 1.442695
    %v2735 = vpow.pop %v2734
    %v2736 = vmul.f32 %v2733, 1.442695
    %v2737 = vpow.pop %v2736
    %v2738 = vlaneseq
    %v2739 = vand.u32 %v2738, 127
    %vm2740 = vcmp.lt.s32.totalorder %v2739, 0
    %v2741 = vsub.s32 0, %v2739
    %v2742 = vsel %vm2740, %v2741, %v2739
    %v2743 = vshrl.u32 %v2742, 1
    %v2744 = vand.u32 %v2742, 1
    %v2745 = vsub.s32 0, %v2744
    %v2746 = vsel %vm2740, %v2745, %v2744
    %vm2747 = vcmp.ne.s32.totalorder %v2746, 0
    %vm2748 = vcmp.lt.s32.totalorder %v2746, 0
    %vm2749 = vmand %vm2748, %vm2747
    %v2750 = vadd.s32 %v2746, 2
    %v2751 = vsel %vm2749, %v2750, %v2746
    %v2752 = vlaneseq
    %v2753 = vshrl.u32 %v2752, 7
    %vm2754 = vcmp.eq.s32.totalorder %v2751, %v2753
    %v2755 = vsel %vm2754, 1, 0
    %v2756 = vcvt.s32.f32 %v2755
    %v2757 = vmul.f32 %v2735, %v2603
    %v2758 = vmul.f32 %v2737, %v2606
    %v2760 = vsel %vm101, %v2756, 0
    %2762 = vmatprep.subr.mxu0 %v2735
    %2763 = vmatpush1.msra.mxu0 %v2757
    %2764 = vmatprep.subr.mxu0 %v2737
    %2765 = vmatpush1.msra.mxu0 %v2758
    %2766 = vmatprep.subr.mxu0 0.0
    %2767 = vmatpush1.msra.mxu0 0.0
    %2768 = vmatprep.subr.mxu0 0.0
    %2769 = vmatpush1.msra.mxu0 0.0
    %2770 = vmatprep.subr.mxu0 0.0
    %2771 = vmatpush1.msra.mxu0 0.0
    %2772 = vmatprep.subr.mxu0 0.0
    %2773 = vmatpush1.msra.mxu0 0.0
    %2774 = vmatprep.subr.mxu0 0.0
    %2775 = vmatpush1.msra.mxu0 0.0
    %2776 = vmatprep.subr.mxu0 0.0
    %2777 = vmatpush1.msra.mxu0 0.0
    %2778 = vmatprep.subr.mxu0 0.0
    %2779 = vmatpush1.msra.mxu0 0.0
    %2780 = vmatprep.subr.mxu0 0.0
    %2781 = vmatpush1.msra.mxu0 0.0
    %2782 = vmatprep.subr.mxu0 0.0
    %2783 = vmatpush1.msra.mxu0 0.0
    %2784 = vmatprep.subr.mxu0 0.0
    %2785 = vmatpush1.msra.mxu0 0.0
    %2786 = vmatprep.subr.mxu0 0.0
    %2787 = vmatpush1.msra.mxu0 0.0
    %2788 = vmatprep.subr.mxu0 0.0
    %2789 = vmatpush1.msra.mxu0 0.0
    %2790 = vmatprep.subr.mxu0 0.0
    %2791 = vmatpush1.msra.mxu0 0.0
    %2792 = vmatprep.subr.mxu0 0.0
    %2793 = vmatpush1.msra.mxu0 0.0
    %2794 = vmatprep.subr.mxu0 0.0
    %2795 = vmatpush1.msra.mxu0 0.0
    %2796 = vmatprep.subr.mxu0 0.0
    %2797 = vmatpush1.msra.mxu0 0.0
    %2798 = vmatprep.subr.mxu0 0.0
    %2799 = vmatpush1.msra.mxu0 0.0
    %2800 = vmatprep.subr.mxu0 0.0
    %2801 = vmatpush1.msra.mxu0 0.0
    %2802 = vmatprep.subr.mxu0 0.0
    %2803 = vmatpush1.msra.mxu0 0.0
    %2804 = vmatprep.subr.mxu0 0.0
    %2805 = vmatpush1.msra.mxu0 0.0
    %2806 = vmatprep.subr.mxu0 0.0
    %2807 = vmatpush1.msra.mxu0 0.0
    %2808 = vmatprep.subr.mxu0 0.0
    %2809 = vmatpush1.msra.mxu0 0.0
    %2810 = vmatprep.subr.mxu0 0.0
    %2811 = vmatpush1.msra.mxu0 0.0
    %2812 = vmatprep.subr.mxu0 0.0
    %2813 = vmatpush1.msra.mxu0 0.0
    %2814 = vmatprep.subr.mxu0 0.0
    %2815 = vmatpush1.msra.mxu0 0.0
    %2816 = vmatprep.subr.mxu0 0.0
    %2817 = vmatpush1.msra.mxu0 0.0
    %2818 = vmatprep.subr.mxu0 0.0
    %2819 = vmatpush1.msra.mxu0 0.0
    %2820 = vmatprep.subr.mxu0 0.0
    %2821 = vmatpush1.msra.mxu0 0.0
    %2822 = vmatprep.subr.mxu0 0.0
    %2823 = vmatpush1.msra.mxu0 0.0
    %2824 = vmatprep.subr.mxu0 0.0
    %2825 = vmatpush1.msra.mxu0 0.0
    %2826 = vmatprep.mubr.f32.mxu0 0.0
    %2827 = vmatmul.mubr.f32.gmra.mrb[0].mxu0 %v2760
    %v2828 = vpop.f32.mrb[0].mxu0
    %v2829 = vadd.f32 0.0, %v2828
    %v2830 = vpop.f32.mrb[0].mxu0
    %v2831 = vadd.f32 0.0, %v2830
    %2832 = vdwg.mxu0
    %v2833 = vrcp.pop %v2831
    %v2834 = vmul.f32 %v2829, %v2833
    %v2835 = vpack.c.bf16 %v2834, %v2834
    %v2836 = vld [vmem:[#allocation4 + $0x40] sm:$0xf]
    %v2837 = vld [vmem:[#allocation4 + $0x44] sm:$0xf]
    %v2838 = vld [vmem:[#allocation4 + $0x48] sm:$0xf]
    %v2839 = vld [vmem:[#allocation4 + $0x4c] sm:$0xf]
    %v2840 = vld [vmem:[#allocation4 + $0x50] sm:$0xf]
    %v2841 = vld [vmem:[#allocation4 + $0x54] sm:$0xf]
    %v2842 = vld [vmem:[#allocation4 + $0x58] sm:$0xf]
    %v2843 = vld [vmem:[#allocation4 + $0x5c] sm:$0xf]
    %v2844 = vld [vmem:[#allocation4 + $0x60] sm:$0xf]
    %v2845 = vld [vmem:[#allocation4 + $0x64] sm:$0xf]
    %v2846 = vld [vmem:[#allocation4 + $0x68] sm:$0xf]
    %v2847 = vld [vmem:[#allocation4 + $0x6c] sm:$0xf]
    %v2848 = vld [vmem:[#allocation4 + $0x70] sm:$0xf]
    %v2849 = vld [vmem:[#allocation4 + $0x74] sm:$0xf]
    %v2850 = vld [vmem:[#allocation4 + $0x78] sm:$0xf]
    %v2851 = vld [vmem:[#allocation4 + $0x7c] sm:$0xf]
    %v2852 = vld [vmem:[%s3 + $0x4] ss:$0 sm:$0xff]
    %v2869 = vunpack.c.l.b16 %v2836
    %v2870 = vunpack.c.l.b16 %v2837
    %v2871 = vunpack.c.l.b16 %v2838
    %v2872 = vunpack.c.l.b16 %v2839
    %v2873 = vunpack.c.l.b16 %v2840
    %v2874 = vunpack.c.l.b16 %v2841
    %v2875 = vunpack.c.l.b16 %v2842
    %v2876 = vunpack.c.l.b16 %v2843
    %v2877 = vunpack.c.l.b16 %v2844
    %v2878 = vunpack.c.l.b16 %v2845
    %v2879 = vunpack.c.l.b16 %v2846
    %v2880 = vunpack.c.l.b16 %v2847
    %v2881 = vunpack.c.l.b16 %v2848
    %v2882 = vunpack.c.l.b16 %v2849
    %v2883 = vunpack.c.l.b16 %v2850
    %v2884 = vunpack.c.l.b16 %v2851
    %v2885 = vpack.c.b16 %v2870, %v2869
    %v2886 = vpack.c.b16 %v2872, %v2871
    %v2887 = vpack.c.b16 %v2874, %v2873
    %v2888 = vpack.c.b16 %v2876, %v2875
    %v2889 = vpack.c.b16 %v2878, %v2877
    %v2890 = vpack.c.b16 %v2880, %v2879
    %v2891 = vpack.c.b16 %v2882, %v2881
    %v2892 = vpack.c.b16 %v2884, %v2883
    %2901 = vmatprep.subr.bf16.mxu0 0
    %2902 = vmatpush1.bf16.msra.mxu0 %v2885
    %2903 = vmatprep.subr.bf16.mxu0 0
    %2904 = vmatpush1.bf16.msra.mxu0 %v2886
    %2905 = vmatprep.subr.bf16.mxu0 0
    %2906 = vmatpush1.bf16.msra.mxu0 %v2887
    %2907 = vmatprep.subr.bf16.mxu0 0
    %2908 = vmatpush1.bf16.msra.mxu0 %v2888
    %2909 = vmatprep.subr.bf16.mxu0 0
    %2910 = vmatpush1.bf16.msra.mxu0 %v2889
    %2911 = vmatprep.subr.bf16.mxu0 0
    %2912 = vmatpush1.bf16.msra.mxu0 %v2890
    %2913 = vmatprep.subr.bf16.mxu0 0
    %2914 = vmatpush1.bf16.msra.mxu0 %v2891
    %2915 = vmatprep.subr.bf16.mxu0 0
    %2916 = vmatpush1.bf16.msra.mxu0 %v2892
    %2917 = vmatprep.subr.bf16.mxu0 0
    %2918 = vmatpush1.bf16.msra.mxu0 0
    %2919 = vmatprep.subr.bf16.mxu0 0
    %2920 = vmatpush1.bf16.msra.mxu0 0
    %2921 = vmatprep.subr.bf16.mxu0 0
    %2922 = vmatpush1.bf16.msra.mxu0 0
    %2923 = vmatprep.subr.bf16.mxu0 0
    %2924 = vmatpush1.bf16.msra.mxu0 0
    %2925 = vmatprep.subr.bf16.mxu0 0
    %2926 = vmatpush1.bf16.msra.mxu0 0
    %2927 = vmatprep.subr.bf16.mxu0 0
    %2928 = vmatpush1.bf16.msra.mxu0 0
    %2929 = vmatprep.subr.bf16.mxu0 0
    %2930 = vmatpush1.bf16.msra.mxu0 0
    %2931 = vmatprep.subr.bf16.mxu0 0
    %2932 = vmatpush1.bf16.msra.mxu0 0
    %2933 = vmatprep.mubr.bf16.mxu0 0
    %2934 = vmatmul.mubr.bf16.gmra.mrb[0].mxu0 %v2835
    %v2935 = vpop.f32.mrb[0].mxu0
    %v2936 = vadd.f32 %v2852, %v2935
    %v2937 = vpop.f32.mrb[0].mxu0
    %v2938 = vpop.f32.mrb[0].mxu0
    %v2939 = vpop.f32.mrb[0].mxu0
    %2940 = vdwg.mxu0
    %v2941 = vmax.f32 %v2936, 0.0
    %v2942 = vpack.c.bf16 %v2941, %v2941
    %v2943 = vld [vmem:[#allocation4 + $0x80] sm:$0xf]
    %v2944 = vld [vmem:[#allocation4 + $0x84] sm:$0xf]
    %v2945 = vld [vmem:[#allocation4 + $0x88] sm:$0xf]
    %v2946 = vld [vmem:[#allocation4 + $0x8c] sm:$0xf]
    %v2947 = vld [vmem:[#allocation4 + $0x90] sm:$0xf]
    %v2948 = vld [vmem:[#allocation4 + $0x94] sm:$0xf]
    %v2949 = vld [vmem:[#allocation4 + $0x98] sm:$0xf]
    %v2950 = vld [vmem:[#allocation4 + $0x9c] sm:$0xf]
    %v2951 = vld [vmem:[#allocation4 + $0xa0] sm:$0xf]
    %v2952 = vld [vmem:[#allocation4 + $0xa4] sm:$0xf]
    %v2953 = vld [vmem:[#allocation4 + $0xa8] sm:$0xf]
    %v2954 = vld [vmem:[#allocation4 + $0xac] sm:$0xf]
    %v2955 = vld [vmem:[#allocation4 + $0xb0] sm:$0xf]
    %v2956 = vld [vmem:[#allocation4 + $0xb4] sm:$0xf]
    %v2957 = vld [vmem:[#allocation4 + $0xb8] sm:$0xf]
    %v2958 = vld [vmem:[#allocation4 + $0xbc] sm:$0xf]
    %v2959 = vld [vmem:[%s3 + $0x5] ss:$0 sm:$0xff]
    %v2976 = vunpack.c.l.b16 %v2943
    %v2977 = vunpack.c.l.b16 %v2944
    %v2978 = vunpack.c.l.b16 %v2945
    %v2979 = vunpack.c.l.b16 %v2946
    %v2980 = vunpack.c.l.b16 %v2947
    %v2981 = vunpack.c.l.b16 %v2948
    %v2982 = vunpack.c.l.b16 %v2949
    %v2983 = vunpack.c.l.b16 %v2950
    %v2984 = vunpack.c.l.b16 %v2951
    %v2985 = vunpack.c.l.b16 %v2952
    %v2986 = vunpack.c.l.b16 %v2953
    %v2987 = vunpack.c.l.b16 %v2954
    %v2988 = vunpack.c.l.b16 %v2955
    %v2989 = vunpack.c.l.b16 %v2956
    %v2990 = vunpack.c.l.b16 %v2957
    %v2991 = vunpack.c.l.b16 %v2958
    %v2992 = vpack.c.b16 %v2977, %v2976
    %v2993 = vpack.c.b16 %v2979, %v2978
    %v2994 = vpack.c.b16 %v2981, %v2980
    %v2995 = vpack.c.b16 %v2983, %v2982
    %v2996 = vpack.c.b16 %v2985, %v2984
    %v2997 = vpack.c.b16 %v2987, %v2986
    %v2998 = vpack.c.b16 %v2989, %v2988
    %v2999 = vpack.c.b16 %v2991, %v2990
    %3008 = vmatprep.subr.bf16.mxu0 0
    %3009 = vmatpush1.bf16.msra.mxu0 %v2992
    %3010 = vmatprep.subr.bf16.mxu0 0
    %3011 = vmatpush1.bf16.msra.mxu0 %v2993
    %3012 = vmatprep.subr.bf16.mxu0 0
    %3013 = vmatpush1.bf16.msra.mxu0 %v2994
    %3014 = vmatprep.subr.bf16.mxu0 0
    %3015 = vmatpush1.bf16.msra.mxu0 %v2995
    %3016 = vmatprep.subr.bf16.mxu0 0
    %3017 = vmatpush1.bf16.msra.mxu0 %v2996
    %3018 = vmatprep.subr.bf16.mxu0 0
    %3019 = vmatpush1.bf16.msra.mxu0 %v2997
    %3020 = vmatprep.subr.bf16.mxu0 0
    %3021 = vmatpush1.bf16.msra.mxu0 %v2998
    %3022 = vmatprep.subr.bf16.mxu0 0
    %3023 = vmatpush1.bf16.msra.mxu0 %v2999
    %3024 = vmatprep.subr.bf16.mxu0 0
    %3025 = vmatpush1.bf16.msra.mxu0 0
    %3026 = vmatprep.subr.bf16.mxu0 0
    %3027 = vmatpush1.bf16.msra.mxu0 0
    %3028 = vmatprep.subr.bf16.mxu0 0
    %3029 = vmatpush1.bf16.msra.mxu0 0
    %3030 = vmatprep.subr.bf16.mxu0 0
    %3031 = vmatpush1.bf16.msra.mxu0 0
    %3032 = vmatprep.subr.bf16.mxu0 0
    %3033 = vmatpush1.bf16.msra.mxu0 0
    %3034 = vmatprep.subr.bf16.mxu0 0
    %3035 = vmatpush1.bf16.msra.mxu0 0
    %3036 = vmatprep.subr.bf16.mxu0 0
    %3037 = vmatpush1.bf16.msra.mxu0 0
    %3038 = vmatprep.subr.bf16.mxu0 0
    %3039 = vmatpush1.bf16.msra.mxu0 0
    %3040 = vmatprep.mubr.bf16.mxu0 0
    %3041 = vmatmul.mubr.bf16.gmra.mrb[0].mxu0 %v2942
    %v3042 = vpop.f32.mrb[0].mxu0
    %v3043 = vadd.f32 %v2959, %v3042
    %v3044 = vpop.f32.mrb[0].mxu0
    %v3045 = vpop.f32.mrb[0].mxu0
    %v3046 = vpop.f32.mrb[0].mxu0
    %3047 = vdwg.mxu0
    %v3048 = vmax.f32 %v3043, 0.0
    %v3049 = vld [vmem:[%s3 + $0x6] ss:$0 sm:$0xff]
    %v3050 = vmul.f32 %v3048, %v3049
    %v3051 = vsel %vm2598, %v3050, 0.0
    %3052 = vadd.xlane.f32.xlu0 %v3051
    %v3053 = vpop.xlane.xlu0 %3052
    %v3054 = vxor.u32 %v3053, 2147483648
    %v3055 = vmul.f32 %v3054, 1.442695
    %v3056 = vpow.pop %v3055
    %v3057 = vadd.f32 %v3056, 1.0
    %v3058 = vrcp.pop %v3057
    %v3059 = vmul.f32 1.0, %v3058
    %vm3060 = vcmask 1024
    %3061 = vst.msk [vmem:[%s4] sm:$0x3] %vm3060, %v3059
    // Predicated region
    $region26: #{regularized_lstm_forward.1} parent=1 // pred_check
      _
    $region27: #{regularized_lstm_forward.1} parent=1 // pred_check_branch
      %3063 = sbr.rel (0) target = $region29
    $region28: #{regularized_lstm_forward.1} parent=1 // pred_region
      _
    $region29: #{regularized_lstm_forward.1} parent=1 // pred_fallthru
      _
    // Predicated region
    $region30: #{regularized_lstm_forward.1} parent=1 // pred_check
      _
    $region31: #{regularized_lstm_forward.1} parent=1 // pred_check_branch
      %3065 = sbr.rel (0) target = $region33
    $region32: #{regularized_lstm_forward.1} parent=1 // pred_region
      _
    $region33: #{regularized_lstm_forward.1} parent=1 // pred_fallthru
      _
    %3066 = vsyncpa [#allocation3], 1
    %3067 = vsyncpa [#allocation5], 1

</llo_original>
